<compile_context>
chip_gen: v5e
topology: v5e:2x2
jax: 0.10.0
libtpu: 0.0.40
codegen_flags: <defaults>
</compile_context>

<pallas_src>
import functools

import jax
import jax.numpy as jnp
from jax.experimental import pallas as pl
from jax.experimental.pallas import tpu as pltpu


# ----------------------------- Fused CNN kernel -----------------------------
def _fused_cnn_kernel(x_ref, wb1_ref, b1_ref, wb2_ref, b2_ref, wb3_ref, b3_ref,
                      wfc_ref, bfc_ref, o_ref, pad1, pad2, pad3, *, B, H, W):
    f32 = jnp.float32
    bf16 = jnp.bfloat16
    H2, W2 = H // 2, W // 2
    H3, W3 = H2 // 2, W2 // 2

    def zero_halo(pad, C):
        # Zero only the 1-pixel halo (top/bottom rows; left/right (w,c)-lane groups).
        # Must run EVERY grid step: with ("parallel",) each core has its own scratch
        # and never sees step 0, and the interior is rewritten per step anyway.
        Bp, Hp, Lp = pad.shape
        pad[:, 0:1, :] = jnp.zeros((Bp, 1, Lp), bf16)
        pad[:, Hp - 1:Hp, :] = jnp.zeros((Bp, 1, Lp), bf16)
        pad[:, :, 0:C] = jnp.zeros((Bp, Hp, C), bf16)
        pad[:, :, Lp - C:Lp] = jnp.zeros((Bp, Hp, C), bf16)

    def conv3x3_relu(pad, wb_ref, brow_ref, Hs, Ws, Cin, Cout):
        # pad:  (B, Hs+2, (Ws+2)*Cin) bf16, (w', cin) packed on lanes (cin minor).
        # wb:   (3, (Ws+2)*Cin, Ws*Cout) bf16 banded weights:
        #       wb[dy, w'*Cin+cin, w*Cout+cout] = w[dy, w'-w, cin, cout], w'-w in {0,1,2}.
        # Three accumulating MXU matmuls (one per dy) -> output already in packed
        # (w, cout) lane layout; no im2col / patch concatenation at all.
        Kd = (Ws + 2) * Cin
        M = B * Hs
        acc = None
        for dy in range(3):
            lhs = pad[:, dy:dy + Hs, :].reshape(M, Kd)          # bf16, lane-dense
            out = jnp.dot(lhs, wb_ref[dy], preferred_element_type=f32)
            acc = out if acc is None else acc + out
        # Fused bias + ReLU in f32 (safe on v5e; TODO(synk): bf16 slab on v6e/v7x).
        return jnp.maximum(acc + brow_ref[...], 0.0)            # (B*Hs, Ws*Cout) f32

    def maxpool2x2(a, Hs, Ws, C):
        # a: (B*Hs, Ws*C) with lane index w*C + c  ->  (B, Hs//2, (Ws//2)*C).
        r = a.reshape(B * Hs, Ws // 2, 2 * C)
        pw = jnp.maximum(r[:, :, :C], r[:, :, C:])               # pool along W
        t = pw.reshape(B, Hs // 2, 2, (Ws // 2) * C)
        return jnp.maximum(t[:, :, 0, :], t[:, :, 1, :])         # pool along H

    # ---- layer 1: conv(1 -> 32) + ReLU + maxpool ----
    zero_halo(pad1, 1)
    pad1[:, 1:H + 1, 1:W + 1] = x_ref[...].astype(bf16)
    a1 = conv3x3_relu(pad1, wb1_ref, b1_ref, H, W, 1, 32)        # (B*H, W*32)
    p1 = maxpool2x2(a1, H, W, 32)                                # (B, H2, W2*32)

    # ---- layer 2: conv(32 -> 64) + ReLU + maxpool ----
    zero_halo(pad2, 32)
    pad2[:, 1:H2 + 1, 32:(W2 + 1) * 32] = p1.astype(bf16)
    a2 = conv3x3_relu(pad2, wb2_ref, b2_ref, H2, W2, 32, 64)     # (B*H2, W2*64)
    p2 = maxpool2x2(a2, H2, W2, 64)                              # (B, H3, W3*64)

    # ---- layer 3: conv(64 -> 128) + ReLU ----
    zero_halo(pad3, 64)
    pad3[:, 1:H3 + 1, 64:(W3 + 1) * 64] = p2.astype(bf16)
    a3 = conv3x3_relu(pad3, wb3_ref, b3_ref, H3, W3, 64, 128)    # (B*H3, W3*128)

    # ---- global average pool + linear classifier (lane-dense, 128-wide) ----
    g = a3.reshape(B, H3, W3 * 128).sum(axis=1)                  # (B, W3*128)
    gap = g.reshape(B, W3, 128).sum(axis=1) * (1.0 / (H3 * W3))  # (B, 128) f32
    logits = jnp.dot(gap, wfc_ref[...], preferred_element_type=f32) + bfc_ref[...]
    o_ref[0] = logits.astype(o_ref.dtype)                        # (B, 128) lane-dense


# ------------------------------ Host-side glue -------------------------------
def _band_weights(w_hwio, Ws):
    # (3, 3, Cin, Cout) -> (3, (Ws+2)*Cin, Ws*Cout) banded "conv as row-matmul" weights.
    kh, kw, Cin, Cout = w_hwio.shape
    wb = jnp.zeros((kh, Ws + 2, Cin, Ws, Cout), jnp.float32)
    for w in range(Ws):
        wb = wb.at[:, w:w + 3, :, w, :].set(w_hwio.astype(jnp.float32))
    return wb.reshape(kh, (Ws + 2) * Cin, Ws * Cout).astype(jnp.bfloat16)


def simple_cnn_forward(x_nchw, params, *, batch_block=None):
    N, Cin, H, W = x_nchw.shape
    assert Cin == 1 and H % 4 == 0 and W % 4 == 0
    num_classes = params["wfc"].shape[-1]
    H2, W2, H3, W3 = H // 2, W // 2, H // 4, W // 4

    # Glue: drop the singleton channel dim; banded conv weights; tiled bias rows;
    # classifier padded to a lane-dense 128-wide output (sliced back below).
    x = x_nchw.reshape(N, H, W).astype(jnp.float32)
    wb1 = _band_weights(params["w1"], W)
    wb2 = _band_weights(params["w2"], W2)
    wb3 = _band_weights(params["w3"], W3)
    b1r = jnp.tile(params["b1"].reshape(1, 32), (1, W)).astype(jnp.float32)
    b2r = jnp.tile(params["b2"].reshape(1, 64), (1, W2)).astype(jnp.float32)
    b3r = jnp.tile(params["b3"].reshape(1, 128), (1, W3)).astype(jnp.float32)
    wfc = jnp.zeros((128, 128), jnp.float32).at[:, :num_classes].set(params["wfc"])
    bfc = jnp.zeros((1, 128), jnp.float32).at[:, :num_classes].set(
        params["bfc"].reshape(1, -1))

    if batch_block is None:
        # Fat batch blocks (amortize ~0.35us/step), but keep >= 2 grid steps so both
        # v7x TensorCores get work; B must divide N.
        B = max(1, min(32, N // 2)) if N >= 2 else 1
        while N % B != 0:
            B -= 1
    else:
        B = batch_block
        assert N % B == 0
    G = N // B

    kern = functools.partial(_fused_cnn_kernel, B=B, H=H, W=W)
    out = pl.pallas_call(
        kern,
        out_shape=jax.ShapeDtypeStruct((G, B, 128), jnp.float32),
        grid=(G,),
        in_specs=[
            pl.BlockSpec((B, H, W), lambda n: (n, 0, 0)),
            pl.BlockSpec(wb1.shape, lambda n: (0, 0, 0)),
            pl.BlockSpec(b1r.shape, lambda n: (0, 0)),
            pl.BlockSpec(wb2.shape, lambda n: (0, 0, 0)),
            pl.BlockSpec(b2r.shape, lambda n: (0, 0)),
            pl.BlockSpec(wb3.shape, lambda n: (0, 0, 0)),
            pl.BlockSpec(b3r.shape, lambda n: (0, 0)),
            pl.BlockSpec((128, 128), lambda n: (0, 0)),
            pl.BlockSpec((1, 128), lambda n: (0, 0)),
        ],
        out_specs=pl.BlockSpec((1, B, 128), lambda n: (n, 0, 0)),
        scratch_shapes=[
            pltpu.VMEM((B, H + 2, W + 2), jnp.bfloat16),              # padded input
            pltpu.VMEM((B, H2 + 2, (W2 + 2) * 32), jnp.bfloat16),      # padded pooled-1
            pltpu.VMEM((B, H3 + 2, (W3 + 2) * 64), jnp.bfloat16),      # padded pooled-2
        ],
        compiler_params=pltpu.CompilerParams(
            dimension_semantics=("parallel",),
            vmem_limit_bytes=48 * 1024 * 1024),
    )(x, wb1, b1r, wb2, b2r, wb3, b3r, wfc, bfc)
    return out.reshape(N, 128)[:, :num_classes]


# ------------------- Pure-JAX reference (sanity check only) ------------------
def _reference_forward(x_nchw, params):
    x = jnp.transpose(x_nchw, (0, 2, 3, 1))

    def conv(x, w, b):
        y = jax.lax.conv_general_dilated(
            x, w, window_strides=(1, 1), padding="SAME",
            dimension_numbers=("NHWC", "HWIO", "NHWC"))
        return jax.nn.relu(y + b.reshape(1, 1, 1, -1))

    def pool(x):
        return jax.lax.reduce_window(x, -jnp.inf, jax.lax.max,
                                     (1, 2, 2, 1), (1, 2, 2, 1), "VALID")

    x = pool(conv(x, params["w1"], params["b1"]))
    x = pool(conv(x, params["w2"], params["b2"]))
    x = conv(x, params["w3"], params["b3"])
    x = jnp.mean(x, axis=(1, 2))
    return x @ params["wfc"] + params["bfc"]


def init_params(key, num_classes):
    ks = jax.random.split(key, 8)
    return {
        "w1": 0.1 * jax.random.normal(ks[0], (3, 3, 1, 32), jnp.float32),
        "b1": 0.1 * jax.random.normal(ks[1], (1, 32), jnp.float32),
        "w2": 0.05 * jax.random.normal(ks[2], (3, 3, 32, 64), jnp.float32),
        "b2": 0.1 * jax.random.normal(ks[3], (1, 64), jnp.float32),
        "w3": 0.05 * jax.random.normal(ks[4], (3, 3, 64, 128), jnp.float32),
        "b3": 0.1 * jax.random.normal(ks[5], (1, 128), jnp.float32),
        "wfc": 0.05 * jax.random.normal(ks[6], (128, 10), jnp.float32),
        "bfc": 0.1 * jax.random.normal(ks[7], (1, 10), jnp.float32),
    }


if __name__ == "__main__":
    num_classes = 10
    key = jax.random.PRNGKey(0)
    k_x, k_p = jax.random.split(key)
    # PyTorch-convention input: NCHW, single channel (Conv2d(1, 32, ...)).
    x = jax.random.normal(k_x, (2, 1, 16, 16), jnp.float32)
    params = init_params(k_p, num_classes)

    out = jax.block_until_ready(simple_cnn_forward(x, params))
    assert out.shape == (2, num_classes), out.shape

    ref = jax.block_until_ready(_reference_forward(x, params))
    # All conv matmul operands and the padded-activation scratch are bf16 (f32
    # accumulation), so tolerance is loosened vs the all-f32 reference.
    assert jnp.allclose(out, ref, atol=2e-2, rtol=2e-2), (out, ref)

    print("KERNEL_OK")
</pallas_src>

<mosaic_0001>
module attributes {stable_mosaic.version = 11 : i64} {
  func.func @_fused_cnn_kernel(%arg0: i32, %arg1: memref<1x16x16xf32, #tpu.memory_space<vmem>>, %arg2: memref<3x18x512xbf16, #tpu.memory_space<vmem>>, %arg3: memref<1x512xf32, #tpu.memory_space<vmem>>, %arg4: memref<3x320x512xbf16, #tpu.memory_space<vmem>>, %arg5: memref<1x512xf32, #tpu.memory_space<vmem>>, %arg6: memref<3x384x512xbf16, #tpu.memory_space<vmem>>, %arg7: memref<1x512xf32, #tpu.memory_space<vmem>>, %arg8: memref<128x128xf32, #tpu.memory_space<vmem>>, %arg9: memref<1x128xf32, #tpu.memory_space<vmem>>, %arg10: memref<1x1x128xf32, #tpu.memory_space<vmem>>, %arg11: memref<1x18x18xbf16, #tpu.memory_space<vmem>>, %arg12: memref<1x10x320xbf16, #tpu.memory_space<vmem>>, %arg13: memref<1x6x384xbf16, #tpu.memory_space<vmem>>) attributes {dimension_semantics = [#tpu.dimension_semantics<parallel>], iteration_bounds = array<i64: 2>, scalar_prefetch = 0 : i64, scratch_operands = 3 : i64, tpu.core_type = #tpu.core_type<tc>, window_params = [{transform_indices = @transform_0, window_bounds = array<i64: 1, 16, 16>}, {pipeline_mode = #tpu.pipeline_mode<synchronous>, transform_indices = @transform_1, window_bounds = array<i64: 3, 18, 512>}, {pipeline_mode = #tpu.pipeline_mode<synchronous>, transform_indices = @transform_2, window_bounds = array<i64: 1, 512>}, {pipeline_mode = #tpu.pipeline_mode<synchronous>, transform_indices = @transform_3, window_bounds = array<i64: 3, 320, 512>}, {pipeline_mode = #tpu.pipeline_mode<synchronous>, transform_indices = @transform_4, window_bounds = array<i64: 1, 512>}, {pipeline_mode = #tpu.pipeline_mode<synchronous>, transform_indices = @transform_5, window_bounds = array<i64: 3, 384, 512>}, {pipeline_mode = #tpu.pipeline_mode<synchronous>, transform_indices = @transform_6, window_bounds = array<i64: 1, 512>}, {pipeline_mode = #tpu.pipeline_mode<synchronous>, transform_indices = @transform_7, window_bounds = array<i64: 128, 128>}, {pipeline_mode = #tpu.pipeline_mode<synchronous>, transform_indices = @transform_8, window_bounds = array<i64: 1, 128>}, {transform_indices = @transform_9, window_bounds = array<i64: 1, 1, 128>}]} {
    %cst = arith.constant 0.000000e+00 : bf16
    %0 = vector.broadcast %cst : bf16 to vector<1x1x18xbf16>
    %c0 = arith.constant 0 : index
    %c0_0 = arith.constant 0 : index
    %c0_1 = arith.constant 0 : index
    %1 = vector.load %arg11[%c0, %c0_0, %c0_1] : memref<1x18x18xbf16, #tpu.memory_space<vmem>>, vector<1x1x18xbf16>
    tpu.vector_store %arg11[%c0, %c0_0, %c0_1], %0 {strides = array<i32>} : memref<1x18x18xbf16, #tpu.memory_space<vmem>>, vector<1x1x18xbf16>,
    %cst_2 = arith.constant 0.000000e+00 : bf16
    %2 = vector.broadcast %cst_2 : bf16 to vector<1x1x18xbf16>
    %c0_3 = arith.constant 0 : index
    %c17 = arith.constant 17 : index
    %c0_4 = arith.constant 0 : index
    %3 = vector.load %arg11[%c0_3, %c17, %c0_4] : memref<1x18x18xbf16, #tpu.memory_space<vmem>>, vector<1x1x18xbf16>
    tpu.vector_store %arg11[%c0_3, %c17, %c0_4], %2 {strides = array<i32>} : memref<1x18x18xbf16, #tpu.memory_space<vmem>>, vector<1x1x18xbf16>,
    %cst_5 = arith.constant 0.000000e+00 : bf16
    %4 = vector.broadcast %cst_5 : bf16 to vector<1x18x1xbf16>
    %c0_6 = arith.constant 0 : index
    %c0_7 = arith.constant 0 : index
    %c0_8 = arith.constant 0 : index
    %5 = vector.load %arg11[%c0_6, %c0_7, %c0_8] : memref<1x18x18xbf16, #tpu.memory_space<vmem>>, vector<1x18x1xbf16>
    tpu.vector_store %arg11[%c0_6, %c0_7, %c0_8], %4 {strides = array<i32>} : memref<1x18x18xbf16, #tpu.memory_space<vmem>>, vector<1x18x1xbf16>,
    %cst_9 = arith.constant 0.000000e+00 : bf16
    %6 = vector.broadcast %cst_9 : bf16 to vector<1x18x1xbf16>
    %c0_10 = arith.constant 0 : index
    %c0_11 = arith.constant 0 : index
    %c17_12 = arith.constant 17 : index
    %7 = vector.load %arg11[%c0_10, %c0_11, %c17_12] : memref<1x18x18xbf16, #tpu.memory_space<vmem>>, vector<1x18x1xbf16>
    tpu.vector_store %arg11[%c0_10, %c0_11, %c17_12], %6 {strides = array<i32>} : memref<1x18x18xbf16, #tpu.memory_space<vmem>>, vector<1x18x1xbf16>,
    %c0_13 = arith.constant 0 : index
    %c0_14 = arith.constant 0 : index
    %c0_15 = arith.constant 0 : index
    %8 = vector.load %arg1[%c0_13, %c0_14, %c0_15] : memref<1x16x16xf32, #tpu.memory_space<vmem>>, vector<1x16x16xf32>
    %9 = arith.truncf %8 : vector<1x16x16xf32> to vector<1x16x16xbf16>
    %c0_16 = arith.constant 0 : index
    %c1 = arith.constant 1 : index
    %c1_17 = arith.constant 1 : index
    %10 = vector.load %arg11[%c0_16, %c1, %c1_17] : memref<1x18x18xbf16, #tpu.memory_space<vmem>>, vector<1x16x16xbf16>
    tpu.vector_store %arg11[%c0_16, %c1, %c1_17], %9 {strides = array<i32>} : memref<1x18x18xbf16, #tpu.memory_space<vmem>>, vector<1x16x16xbf16>,
    %c0_18 = arith.constant 0 : index
    %c0_19 = arith.constant 0 : index
    %c0_20 = arith.constant 0 : index
    %11 = vector.load %arg11[%c0_18, %c0_19, %c0_20] : memref<1x18x18xbf16, #tpu.memory_space<vmem>>, vector<1x16x18xbf16>
    %12 = vector.shape_cast %11 : vector<1x16x18xbf16> to vector<16x18xbf16>
    %c0_21 = arith.constant 0 : index
    %c0_22 = arith.constant 0 : index
    %c0_23 = arith.constant 0 : index
    %13 = vector.load %arg2[%c0_21, %c0_22, %c0_23] : memref<3x18x512xbf16, #tpu.memory_space<vmem>>, vector<1x18x512xbf16>
    %14 = vector.shape_cast %13 : vector<1x18x512xbf16> to vector<18x512xbf16>
    %cst_24 = arith.constant dense<0.000000e+00> : vector<16x512xf32>
    %15 = tpu.matmul %12, %14, %cst_24 {dimension_numbers = #tpu.dot_dimension_numbers<[1], [0], [0], [1], [0, 0, 1, 1], [], []>} : vector<16x18xbf16>, vector<18x512xbf16>, vector<16x512xf32> -> vector<16x512xf32>
    %c0_25 = arith.constant 0 : index
    %c1_26 = arith.constant 1 : index
    %c0_27 = arith.constant 0 : index
    %16 = vector.load %arg11[%c0_25, %c1_26, %c0_27] : memref<1x18x18xbf16, #tpu.memory_space<vmem>>, vector<1x16x18xbf16>
    %17 = vector.shape_cast %16 : vector<1x16x18xbf16> to vector<16x18xbf16>
    %c1_28 = arith.constant 1 : index
    %c0_29 = arith.constant 0 : index
    %c0_30 = arith.constant 0 : index
    %18 = vector.load %arg2[%c1_28, %c0_29, %c0_30] : memref<3x18x512xbf16, #tpu.memory_space<vmem>>, vector<1x18x512xbf16>
    %19 = vector.shape_cast %18 : vector<1x18x512xbf16> to vector<18x512xbf16>
    %cst_31 = arith.constant dense<0.000000e+00> : vector<16x512xf32>
    %20 = tpu.matmul %17, %19, %cst_31 {dimension_numbers = #tpu.dot_dimension_numbers<[1], [0], [0], [1], [0, 0, 1, 1], [], []>} : vector<16x18xbf16>, vector<18x512xbf16>, vector<16x512xf32> -> vector<16x512xf32>
    %21 = arith.addf %15, %20 : vector<16x512xf32>
    %c0_32 = arith.constant 0 : index
    %c2 = arith.constant 2 : index
    %c0_33 = arith.constant 0 : index
    %22 = vector.load %arg11[%c0_32, %c2, %c0_33] : memref<1x18x18xbf16, #tpu.memory_space<vmem>>, vector<1x16x18xbf16>
    %23 = vector.shape_cast %22 : vector<1x16x18xbf16> to vector<16x18xbf16>
    %c2_34 = arith.constant 2 : index
    %c0_35 = arith.constant 0 : index
    %c0_36 = arith.constant 0 : index
    %24 = vector.load %arg2[%c2_34, %c0_35, %c0_36] : memref<3x18x512xbf16, #tpu.memory_space<vmem>>, vector<1x18x512xbf16>
    %25 = vector.shape_cast %24 : vector<1x18x512xbf16> to vector<18x512xbf16>
    %cst_37 = arith.constant dense<0.000000e+00> : vector<16x512xf32>
    %26 = tpu.matmul %23, %25, %cst_37 {dimension_numbers = #tpu.dot_dimension_numbers<[1], [0], [0], [1], [0, 0, 1, 1], [], []>} : vector<16x18xbf16>, vector<18x512xbf16>, vector<16x512xf32> -> vector<16x512xf32>
    %27 = arith.addf %21, %26 : vector<16x512xf32>
    %c0_38 = arith.constant 0 : index
    %c0_39 = arith.constant 0 : index
    %28 = vector.load %arg3[%c0_38, %c0_39] : memref<1x512xf32, #tpu.memory_space<vmem>>, vector<1x512xf32>
    %29 = vector.broadcast %28 : vector<1x512xf32> to vector<16x512xf32>
    %30 = arith.addf %27, %29 : vector<16x512xf32>
    %cst_40 = arith.constant 0.000000e+00 : f32
    %31 = vector.broadcast %cst_40 : f32 to vector<16x512xf32>
    %32 = arith.maximumf %30, %31 : vector<16x512xf32>
    %33 = vector.shape_cast %32 : vector<16x512xf32> to vector<16x8x64xf32>
    %34 = vector.extract_strided_slice %33 {offsets = [0, 0, 0], sizes = [16, 8, 32], strides = [1, 1, 1]} : vector<16x8x64xf32> to vector<16x8x32xf32>
    %35 = vector.extract_strided_slice %33 {offsets = [0, 0, 32], sizes = [16, 8, 32], strides = [1, 1, 1]} : vector<16x8x64xf32> to vector<16x8x32xf32>
    %36 = arith.maximumf %34, %35 : vector<16x8x32xf32>
    %37 = vector.shape_cast %36 : vector<16x8x32xf32> to vector<1x8x2x256xf32>
    %38 = vector.extract_strided_slice %37 {offsets = [0, 0, 0, 0], sizes = [1, 8, 1, 256], strides = [1, 1, 1, 1]} : vector<1x8x2x256xf32> to vector<1x8x1x256xf32>
    %39 = vector.shape_cast %38 : vector<1x8x1x256xf32> to vector<1x8x256xf32>
    %40 = vector.extract_strided_slice %37 {offsets = [0, 0, 1, 0], sizes = [1, 8, 1, 256], strides = [1, 1, 1, 1]} : vector<1x8x2x256xf32> to vector<1x8x1x256xf32>
    %41 = vector.shape_cast %40 : vector<1x8x1x256xf32> to vector<1x8x256xf32>
    %42 = arith.maximumf %39, %41 : vector<1x8x256xf32>
    %cst_41 = arith.constant 0.000000e+00 : bf16
    %43 = vector.broadcast %cst_41 : bf16 to vector<1x1x320xbf16>
    %c0_42 = arith.constant 0 : index
    %c0_43 = arith.constant 0 : index
    %c0_44 = arith.constant 0 : index
    %44 = vector.load %arg12[%c0_42, %c0_43, %c0_44] : memref<1x10x320xbf16, #tpu.memory_space<vmem>>, vector<1x1x320xbf16>
    tpu.vector_store %arg12[%c0_42, %c0_43, %c0_44], %43 {strides = array<i32>} : memref<1x10x320xbf16, #tpu.memory_space<vmem>>, vector<1x1x320xbf16>,
    %cst_45 = arith.constant 0.000000e+00 : bf16
    %45 = vector.broadcast %cst_45 : bf16 to vector<1x1x320xbf16>
    %c0_46 = arith.constant 0 : index
    %c9 = arith.constant 9 : index
    %c0_47 = arith.constant 0 : index
    %46 = vector.load %arg12[%c0_46, %c9, %c0_47] : memref<1x10x320xbf16, #tpu.memory_space<vmem>>, vector<1x1x320xbf16>
    tpu.vector_store %arg12[%c0_46, %c9, %c0_47], %45 {strides = array<i32>} : memref<1x10x320xbf16, #tpu.memory_space<vmem>>, vector<1x1x320xbf16>,
    %cst_48 = arith.constant 0.000000e+00 : bf16
    %47 = vector.broadcast %cst_48 : bf16 to vector<1x10x32xbf16>
    %c0_49 = arith.constant 0 : index
    %c0_50 = arith.constant 0 : index
    %c0_51 = arith.constant 0 : index
    %48 = vector.load %arg12[%c0_49, %c0_50, %c0_51] : memref<1x10x320xbf16, #tpu.memory_space<vmem>>, vector<1x10x32xbf16>
    tpu.vector_store %arg12[%c0_49, %c0_50, %c0_51], %47 {strides = array<i32>} : memref<1x10x320xbf16, #tpu.memory_space<vmem>>, vector<1x10x32xbf16>,
    %cst_52 = arith.constant 0.000000e+00 : bf16
    %49 = vector.broadcast %cst_52 : bf16 to vector<1x10x32xbf16>
    %c0_53 = arith.constant 0 : index
    %c0_54 = arith.constant 0 : index
    %c288 = arith.constant 288 : index
    %50 = vector.load %arg12[%c0_53, %c0_54, %c288] : memref<1x10x320xbf16, #tpu.memory_space<vmem>>, vector<1x10x32xbf16>
    tpu.vector_store %arg12[%c0_53, %c0_54, %c288], %49 {strides = array<i32>} : memref<1x10x320xbf16, #tpu.memory_space<vmem>>, vector<1x10x32xbf16>,
    %51 = arith.truncf %42 : vector<1x8x256xf32> to vector<1x8x256xbf16>
    %c0_55 = arith.constant 0 : index
    %c1_56 = arith.constant 1 : index
    %c32 = arith.constant 32 : index
    %52 = vector.load %arg12[%c0_55, %c1_56, %c32] : memref<1x10x320xbf16, #tpu.memory_space<vmem>>, vector<1x8x256xbf16>
    tpu.vector_store %arg12[%c0_55, %c1_56, %c32], %51 {strides = array<i32>} : memref<1x10x320xbf16, #tpu.memory_space<vmem>>, vector<1x8x256xbf16>,
    %c0_57 = arith.constant 0 : index
    %c0_58 = arith.constant 0 : index
    %c0_59 = arith.constant 0 : index
    %53 = vector.load %arg12[%c0_57, %c0_58, %c0_59] : memref<1x10x320xbf16, #tpu.memory_space<vmem>>, vector<1x8x320xbf16>
    %54 = vector.shape_cast %53 : vector<1x8x320xbf16> to vector<8x320xbf16>
    %c0_60 = arith.constant 0 : index
    %c0_61 = arith.constant 0 : index
    %c0_62 = arith.constant 0 : index
    %55 = vector.load %arg4[%c0_60, %c0_61, %c0_62] : memref<3x320x512xbf16, #tpu.memory_space<vmem>>, vector<1x320x512xbf16>
    %56 = vector.shape_cast %55 : vector<1x320x512xbf16> to vector<320x512xbf16>
    %cst_63 = arith.constant dense<0.000000e+00> : vector<8x512xf32>
    %57 = tpu.matmul %54, %56, %cst_63 {dimension_numbers = #tpu.dot_dimension_numbers<[1], [0], [0], [1], [0, 0, 1, 1], [], []>} : vector<8x320xbf16>, vector<320x512xbf16>, vector<8x512xf32> -> vector<8x512xf32>
    %c0_64 = arith.constant 0 : index
    %c1_65 = arith.constant 1 : index
    %c0_66 = arith.constant 0 : index
    %58 = vector.load %arg12[%c0_64, %c1_65, %c0_66] : memref<1x10x320xbf16, #tpu.memory_space<vmem>>, vector<1x8x320xbf16>
    %59 = vector.shape_cast %58 : vector<1x8x320xbf16> to vector<8x320xbf16>
    %c1_67 = arith.constant 1 : index
    %c0_68 = arith.constant 0 : index
    %c0_69 = arith.constant 0 : index
    %60 = vector.load %arg4[%c1_67, %c0_68, %c0_69] : memref<3x320x512xbf16, #tpu.memory_space<vmem>>, vector<1x320x512xbf16>
    %61 = vector.shape_cast %60 : vector<1x320x512xbf16> to vector<320x512xbf16>
    %cst_70 = arith.constant dense<0.000000e+00> : vector<8x512xf32>
    %62 = tpu.matmul %59, %61, %cst_70 {dimension_numbers = #tpu.dot_dimension_numbers<[1], [0], [0], [1], [0, 0, 1, 1], [], []>} : vector<8x320xbf16>, vector<320x512xbf16>, vector<8x512xf32> -> vector<8x512xf32>
    %63 = arith.addf %57, %62 : vector<8x512xf32>
    %c0_71 = arith.constant 0 : index
    %c2_72 = arith.constant 2 : index
    %c0_73 = arith.constant 0 : index
    %64 = vector.load %arg12[%c0_71, %c2_72, %c0_73] : memref<1x10x320xbf16, #tpu.memory_space<vmem>>, vector<1x8x320xbf16>
    %65 = vector.shape_cast %64 : vector<1x8x320xbf16> to vector<8x320xbf16>
    %c2_74 = arith.constant 2 : index
    %c0_75 = arith.constant 0 : index
    %c0_76 = arith.constant 0 : index
    %66 = vector.load %arg4[%c2_74, %c0_75, %c0_76] : memref<3x320x512xbf16, #tpu.memory_space<vmem>>, vector<1x320x512xbf16>
    %67 = vector.shape_cast %66 : vector<1x320x512xbf16> to vector<320x512xbf16>
    %cst_77 = arith.constant dense<0.000000e+00> : vector<8x512xf32>
    %68 = tpu.matmul %65, %67, %cst_77 {dimension_numbers = #tpu.dot_dimension_numbers<[1], [0], [0], [1], [0, 0, 1, 1], [], []>} : vector<8x320xbf16>, vector<320x512xbf16>, vector<8x512xf32> -> vector<8x512xf32>
    %69 = arith.addf %63, %68 : vector<8x512xf32>
    %c0_78 = arith.constant 0 : index
    %c0_79 = arith.constant 0 : index
    %70 = vector.load %arg5[%c0_78, %c0_79] : memref<1x512xf32, #tpu.memory_space<vmem>>, vector<1x512xf32>
    %71 = vector.broadcast %70 : vector<1x512xf32> to vector<8x512xf32>
    %72 = arith.addf %69, %71 : vector<8x512xf32>
    %cst_80 = arith.constant 0.000000e+00 : f32
    %73 = vector.broadcast %cst_80 : f32 to vector<8x512xf32>
    %74 = arith.maximumf %72, %73 : vector<8x512xf32>
    %75 = vector.shape_cast %74 : vector<8x512xf32> to vector<8x4x128xf32>
    %76 = vector.extract_strided_slice %75 {offsets = [0, 0, 0], sizes = [8, 4, 64], strides = [1, 1, 1]} : vector<8x4x128xf32> to vector<8x4x64xf32>
    %77 = vector.extract_strided_slice %75 {offsets = [0, 0, 64], sizes = [8, 4, 64], strides = [1, 1, 1]} : vector<8x4x128xf32> to vector<8x4x64xf32>
    %78 = arith.maximumf %76, %77 : vector<8x4x64xf32>
    %79 = vector.shape_cast %78 : vector<8x4x64xf32> to vector<1x4x2x256xf32>
    %80 = vector.extract_strided_slice %79 {offsets = [0, 0, 0, 0], sizes = [1, 4, 1, 256], strides = [1, 1, 1, 1]} : vector<1x4x2x256xf32> to vector<1x4x1x256xf32>
    %81 = vector.shape_cast %80 : vector<1x4x1x256xf32> to vector<1x4x256xf32>
    %82 = vector.extract_strided_slice %79 {offsets = [0, 0, 1, 0], sizes = [1, 4, 1, 256], strides = [1, 1, 1, 1]} : vector<1x4x2x256xf32> to vector<1x4x1x256xf32>
    %83 = vector.shape_cast %82 : vector<1x4x1x256xf32> to vector<1x4x256xf32>
    %84 = arith.maximumf %81, %83 : vector<1x4x256xf32>
    %cst_81 = arith.constant 0.000000e+00 : bf16
    %85 = vector.broadcast %cst_81 : bf16 to vector<1x1x384xbf16>
    %c0_82 = arith.constant 0 : index
    %c0_83 = arith.constant 0 : index
    %c0_84 = arith.constant 0 : index
    %86 = vector.load %arg13[%c0_82, %c0_83, %c0_84] : memref<1x6x384xbf16, #tpu.memory_space<vmem>>, vector<1x1x384xbf16>
    tpu.vector_store %arg13[%c0_82, %c0_83, %c0_84], %85 {strides = array<i32>} : memref<1x6x384xbf16, #tpu.memory_space<vmem>>, vector<1x1x384xbf16>,
    %cst_85 = arith.constant 0.000000e+00 : bf16
    %87 = vector.broadcast %cst_85 : bf16 to vector<1x1x384xbf16>
    %c0_86 = arith.constant 0 : index
    %c5 = arith.constant 5 : index
    %c0_87 = arith.constant 0 : index
    %88 = vector.load %arg13[%c0_86, %c5, %c0_87] : memref<1x6x384xbf16, #tpu.memory_space<vmem>>, vector<1x1x384xbf16>
    tpu.vector_store %arg13[%c0_86, %c5, %c0_87], %87 {strides = array<i32>} : memref<1x6x384xbf16, #tpu.memory_space<vmem>>, vector<1x1x384xbf16>,
    %cst_88 = arith.constant 0.000000e+00 : bf16
    %89 = vector.broadcast %cst_88 : bf16 to vector<1x6x64xbf16>
    %c0_89 = arith.constant 0 : index
    %c0_90 = arith.constant 0 : index
    %c0_91 = arith.constant 0 : index
    %90 = vector.load %arg13[%c0_89, %c0_90, %c0_91] : memref<1x6x384xbf16, #tpu.memory_space<vmem>>, vector<1x6x64xbf16>
    tpu.vector_store %arg13[%c0_89, %c0_90, %c0_91], %89 {strides = array<i32>} : memref<1x6x384xbf16, #tpu.memory_space<vmem>>, vector<1x6x64xbf16>,
    %cst_92 = arith.constant 0.000000e+00 : bf16
    %91 = vector.broadcast %cst_92 : bf16 to vector<1x6x64xbf16>
    %c0_93 = arith.constant 0 : index
    %c0_94 = arith.constant 0 : index
    %c320 = arith.constant 320 : index
    %92 = vector.load %arg13[%c0_93, %c0_94, %c320] : memref<1x6x384xbf16, #tpu.memory_space<vmem>>, vector<1x6x64xbf16>
    tpu.vector_store %arg13[%c0_93, %c0_94, %c320], %91 {strides = array<i32>} : memref<1x6x384xbf16, #tpu.memory_space<vmem>>, vector<1x6x64xbf16>,
    %93 = arith.truncf %84 : vector<1x4x256xf32> to vector<1x4x256xbf16>
    %c0_95 = arith.constant 0 : index
    %c1_96 = arith.constant 1 : index
    %c64 = arith.constant 64 : index
    %94 = vector.load %arg13[%c0_95, %c1_96, %c64] : memref<1x6x384xbf16, #tpu.memory_space<vmem>>, vector<1x4x256xbf16>
    tpu.vector_store %arg13[%c0_95, %c1_96, %c64], %93 {strides = array<i32>} : memref<1x6x384xbf16, #tpu.memory_space<vmem>>, vector<1x4x256xbf16>,
    %c0_97 = arith.constant 0 : index
    %c0_98 = arith.constant 0 : index
    %c0_99 = arith.constant 0 : index
    %95 = vector.load %arg13[%c0_97, %c0_98, %c0_99] : memref<1x6x384xbf16, #tpu.memory_space<vmem>>, vector<1x4x384xbf16>
    %96 = vector.shape_cast %95 : vector<1x4x384xbf16> to vector<4x384xbf16>
    %c0_100 = arith.constant 0 : index
    %c0_101 = arith.constant 0 : index
    %c0_102 = arith.constant 0 : index
    %97 = vector.load %arg6[%c0_100, %c0_101, %c0_102] : memref<3x384x512xbf16, #tpu.memory_space<vmem>>, vector<1x384x512xbf16>
    %98 = vector.shape_cast %97 : vector<1x384x512xbf16> to vector<384x512xbf16>
    %cst_103 = arith.constant dense<0.000000e+00> : vector<4x512xf32>
    %99 = tpu.matmul %96, %98, %cst_103 {dimension_numbers = #tpu.dot_dimension_numbers<[1], [0], [0], [1], [0, 0, 1, 1], [], []>} : vector<4x384xbf16>, vector<384x512xbf16>, vector<4x512xf32> -> vector<4x512xf32>
    %c0_104 = arith.constant 0 : index
    %c1_105 = arith.constant 1 : index
    %c0_106 = arith.constant 0 : index
    %100 = vector.load %arg13[%c0_104, %c1_105, %c0_106] : memref<1x6x384xbf16, #tpu.memory_space<vmem>>, vector<1x4x384xbf16>
    %101 = vector.shape_cast %100 : vector<1x4x384xbf16> to vector<4x384xbf16>
    %c1_107 = arith.constant 1 : index
    %c0_108 = arith.constant 0 : index
    %c0_109 = arith.constant 0 : index
    %102 = vector.load %arg6[%c1_107, %c0_108, %c0_109] : memref<3x384x512xbf16, #tpu.memory_space<vmem>>, vector<1x384x512xbf16>
    %103 = vector.shape_cast %102 : vector<1x384x512xbf16> to vector<384x512xbf16>
    %cst_110 = arith.constant dense<0.000000e+00> : vector<4x512xf32>
    %104 = tpu.matmul %101, %103, %cst_110 {dimension_numbers = #tpu.dot_dimension_numbers<[1], [0], [0], [1], [0, 0, 1, 1], [], []>} : vector<4x384xbf16>, vector<384x512xbf16>, vector<4x512xf32> -> vector<4x512xf32>
    %105 = arith.addf %99, %104 : vector<4x512xf32>
    %c0_111 = arith.constant 0 : index
    %c2_112 = arith.constant 2 : index
    %c0_113 = arith.constant 0 : index
    %106 = vector.load %arg13[%c0_111, %c2_112, %c0_113] : memref<1x6x384xbf16, #tpu.memory_space<vmem>>, vector<1x4x384xbf16>
    %107 = vector.shape_cast %106 : vector<1x4x384xbf16> to vector<4x384xbf16>
    %c2_114 = arith.constant 2 : index
    %c0_115 = arith.constant 0 : index
    %c0_116 = arith.constant 0 : index
    %108 = vector.load %arg6[%c2_114, %c0_115, %c0_116] : memref<3x384x512xbf16, #tpu.memory_space<vmem>>, vector<1x384x512xbf16>
    %109 = vector.shape_cast %108 : vector<1x384x512xbf16> to vector<384x512xbf16>
    %cst_117 = arith.constant dense<0.000000e+00> : vector<4x512xf32>
    %110 = tpu.matmul %107, %109, %cst_117 {dimension_numbers = #tpu.dot_dimension_numbers<[1], [0], [0], [1], [0, 0, 1, 1], [], []>} : vector<4x384xbf16>, vector<384x512xbf16>, vector<4x512xf32> -> vector<4x512xf32>
    %111 = arith.addf %105, %110 : vector<4x512xf32>
    %c0_118 = arith.constant 0 : index
    %c0_119 = arith.constant 0 : index
    %112 = vector.load %arg7[%c0_118, %c0_119] : memref<1x512xf32, #tpu.memory_space<vmem>>, vector<1x512xf32>
    %113 = vector.broadcast %112 : vector<1x512xf32> to vector<4x512xf32>
    %114 = arith.addf %111, %113 : vector<4x512xf32>
    %cst_120 = arith.constant 0.000000e+00 : f32
    %115 = vector.broadcast %cst_120 : f32 to vector<4x512xf32>
    %116 = arith.maximumf %114, %115 : vector<4x512xf32>
    %117 = vector.shape_cast %116 : vector<4x512xf32> to vector<1x4x512xf32>
    %cst_121 = arith.constant dense<0.000000e+00> : vector<1x512xf32>
    %118 = vector.multi_reduction <add>, %117, %cst_121 [1] : vector<1x4x512xf32> to vector<1x512xf32>
    %119 = vector.shape_cast %118 : vector<1x512xf32> to vector<1x4x128xf32>
    %cst_122 = arith.constant dense<0.000000e+00> : vector<1x128xf32>
    %120 = vector.multi_reduction <add>, %119, %cst_122 [1] : vector<1x4x128xf32> to vector<1x128xf32>
    %cst_123 = arith.constant 6.250000e-02 : f32
    %121 = vector.broadcast %cst_123 : f32 to vector<1x128xf32>
    %122 = arith.mulf %120, %121 : vector<1x128xf32>
    %c0_124 = arith.constant 0 : index
    %c0_125 = arith.constant 0 : index
    %123 = vector.load %arg8[%c0_124, %c0_125] : memref<128x128xf32, #tpu.memory_space<vmem>>, vector<128x128xf32>
    %cst_126 = arith.constant dense<0.000000e+00> : vector<1x128xf32>
    %124 = tpu.matmul %122, %123, %cst_126 {dimension_numbers = #tpu.dot_dimension_numbers<[1], [0], [0], [1], [0, 0, 1, 1], [], []>} : vector<1x128xf32>, vector<128x128xf32>, vector<1x128xf32> -> vector<1x128xf32>
    %c0_127 = arith.constant 0 : index
    %c0_128 = arith.constant 0 : index
    %125 = vector.load %arg9[%c0_127, %c0_128] : memref<1x128xf32, #tpu.memory_space<vmem>>, vector<1x128xf32>
    %126 = arith.addf %124, %125 : vector<1x128xf32>
    %c0_129 = arith.constant 0 : index
    %c0_130 = arith.constant 0 : index
    %c0_131 = arith.constant 0 : index
    %127 = vector.load %arg10[%c0_129, %c0_130, %c0_131] : memref<1x1x128xf32, #tpu.memory_space<vmem>>, vector<1x1x128xf32>
    %128 = vector.shape_cast %127 : vector<1x1x128xf32> to vector<1x128xf32>
    %129 = vector.shape_cast %126 : vector<1x128xf32> to vector<1x1x128xf32>
    tpu.vector_store %arg10[%c0_129, %c0_130, %c0_131], %129 {strides = array<i32>} : memref<1x1x128xf32, #tpu.memory_space<vmem>>, vector<1x1x128xf32>,
    return
  }
  func.func @transform_0(%arg0: i32) -> (i32, i32, i32) {
    %c0_i32 = arith.constant 0 : i32
    %c0_i32_0 = arith.constant 0 : i32
    %c0_i32_1 = arith.constant 0 : i32
    return %arg0, %c0_i32, %c0_i32_0 : i32, i32, i32
  }
  func.func @transform_1(%arg0: i32) -> (i32, i32, i32) {
    %c0_i32 = arith.constant 0 : i32
    %c0_i32_0 = arith.constant 0 : i32
    %c0_i32_1 = arith.constant 0 : i32
    %c0_i32_2 = arith.constant 0 : i32
    return %c0_i32, %c0_i32_0, %c0_i32_1 : i32, i32, i32
  }
  func.func @transform_2(%arg0: i32) -> (i32, i32) {
    %c0_i32 = arith.constant 0 : i32
    %c0_i32_0 = arith.constant 0 : i32
    %c0_i32_1 = arith.constant 0 : i32
    return %c0_i32, %c0_i32_0 : i32, i32
  }
  func.func @transform_3(%arg0: i32) -> (i32, i32, i32) {
    %c0_i32 = arith.constant 0 : i32
    %c0_i32_0 = arith.constant 0 : i32
    %c0_i32_1 = arith.constant 0 : i32
    %c0_i32_2 = arith.constant 0 : i32
    return %c0_i32, %c0_i32_0, %c0_i32_1 : i32, i32, i32
  }
  func.func @transform_4(%arg0: i32) -> (i32, i32) {
    %c0_i32 = arith.constant 0 : i32
    %c0_i32_0 = arith.constant 0 : i32
    %c0_i32_1 = arith.constant 0 : i32
    return %c0_i32, %c0_i32_0 : i32, i32
  }
  func.func @transform_5(%arg0: i32) -> (i32, i32, i32) {
    %c0_i32 = arith.constant 0 : i32
    %c0_i32_0 = arith.constant 0 : i32
    %c0_i32_1 = arith.constant 0 : i32
    %c0_i32_2 = arith.constant 0 : i32
    return %c0_i32, %c0_i32_0, %c0_i32_1 : i32, i32, i32
  }
  func.func @transform_6(%arg0: i32) -> (i32, i32) {
    %c0_i32 = arith.constant 0 : i32
    %c0_i32_0 = arith.constant 0 : i32
    %c0_i32_1 = arith.constant 0 : i32
    return %c0_i32, %c0_i32_0 : i32, i32
  }
  func.func @transform_7(%arg0: i32) -> (i32, i32) {
    %c0_i32 = arith.constant 0 : i32
    %c0_i32_0 = arith.constant 0 : i32
    %c0_i32_1 = arith.constant 0 : i32
    return %c0_i32, %c0_i32_0 : i32, i32
  }
  func.func @transform_8(%arg0: i32) -> (i32, i32) {
    %c0_i32 = arith.constant 0 : i32
    %c0_i32_0 = arith.constant 0 : i32
    %c0_i32_1 = arith.constant 0 : i32
    return %c0_i32, %c0_i32_0 : i32, i32
  }
  func.func @transform_9(%arg0: i32) -> (i32, i32, i32) {
    %c0_i32 = arith.constant 0 : i32
    %c0_i32_0 = arith.constant 0 : i32
    %c0_i32_1 = arith.constant 0 : i32
    return %arg0, %c0_i32, %c0_i32_0 : i32, i32, i32
  }
}

</mosaic_0001>

<llo_original>
// kernel: tpu_custom_call.1
$region0: #{tpu_custom_call.1}
  #allocation0 [shape = 'u32[]', space=smem, size = 0x4, offset = 0x4, fixed_abs, tag = 'smem constant byte address 0x4 - core index']
  #allocation1 [shape = 'u32[72,128]{1,0:T(1,128)}', space=vmem, size = 0x9000, scoped, tag = 'internal scratch']
  #allocation2 [shape = 'bf16[1,18,18]{2,1,0:T(8,128)(2,1)}', space=vmem, size = 0x1800, scoped, tag = 'scratch operand']
  #allocation3 [shape = 'bf16[1,10,320]{2,1,0:T(8,128)(2,1)}', space=vmem, size = 0x3000, scoped, tag = 'scratch operand']
  #allocation4 [shape = 'bf16[1,6,384]{2,1,0:T(8,128)(2,1)}', space=vmem, size = 0x1800, scoped, tag = 'scratch operand']
  %s0 = inlined_call_operand.hbm [shape: f32[2,16,16], index: 0, kind: input, shape index: {}]
  %s1 = inlined_call_operand.hbm [shape: bf16[3,18,512], index: 1, kind: input, shape index: {}]
  %s2 = inlined_call_operand.hbm [shape: f32[1,512], index: 2, kind: input, shape index: {}]
  %s3 = inlined_call_operand.hbm [shape: bf16[3,320,512], index: 3, kind: input, shape index: {}]
  %s4 = inlined_call_operand.hbm [shape: f32[1,512], index: 4, kind: input, shape index: {}]
  %s5 = inlined_call_operand.hbm [shape: bf16[3,384,512], index: 5, kind: input, shape index: {}]
  %s6 = inlined_call_operand.hbm [shape: f32[1,512], index: 6, kind: input, shape index: {}]
  %s7 = inlined_call_operand.hbm [shape: f32[128,128], index: 7, kind: input, shape index: {}]
  %s8 = inlined_call_operand.hbm [shape: f32[1,128], index: 8, kind: input, shape index: {}]
  %s9 = inlined_call_operand.hbm [shape: f32[2,1,128], index: 9, kind: output, shape index: {}]
  %s10 = sld [smem:[#allocation0]]
  $region105: #{tpu_custom_call.1} parent=0
    _
  %s12 = ssub.s32 1, %s10
  %s13 = scalar_select 0, %s12, %s10
  $region1: #{tpu_custom_call.1} parent=0
    #allocation5 [shape = 'u8[16384]{0}', space=vmem, size = 0x4000, scoped, tag = 'input window, operand 0']
    #allocation6 [shape = 's32[2]{0}', space=sflag, size = 0x8, scoped, tag = 'scoped memory for tpu_custom_call.1']
    #allocation7 [shape = 's32[2]{0}', space=sflag, size = 0x8, scoped, tag = 'scoped memory for tpu_custom_call.1']
    #allocation8 [shape = 'u8[73728]{0}', space=vmem, size = 0x12000, scoped, tag = 'input window, operand 1, single buffered']
    #allocation9 [shape = 's32[1]{0}', space=sflag, size = 0x4, scoped, tag = 'scoped memory for tpu_custom_call.1']
    #allocation10 [shape = 'u8[2048]{0}', space=vmem, size = 0x800, scoped, tag = 'input window, operand 2, single buffered']
    #allocation11 [shape = 'u8[983040]{0}', space=vmem, size = 0xf0000, scoped, tag = 'input window, operand 3, single buffered']
    #allocation12 [shape = 's32[1]{0}', space=sflag, size = 0x4, scoped, tag = 'scoped memory for tpu_custom_call.1']
    #allocation13 [shape = 'u8[2048]{0}', space=vmem, size = 0x800, scoped, tag = 'input window, operand 4, single buffered']
    #allocation14 [shape = 'u8[1179648]{0}', space=vmem, size = 0x120000, scoped, tag = 'input window, operand 5, single buffered']
    #allocation15 [shape = 's32[1]{0}', space=sflag, size = 0x4, scoped, tag = 'scoped memory for tpu_custom_call.1']
    #allocation16 [shape = 'u8[2048]{0}', space=vmem, size = 0x800, scoped, tag = 'input window, operand 6, single buffered']
    #allocation17 [shape = 'u8[65536]{0}', space=vmem, size = 0x10000, scoped, tag = 'input window, operand 7, single buffered']
    #allocation18 [shape = 's32[1]{0}', space=sflag, size = 0x4, scoped, tag = 'scoped memory for tpu_custom_call.1']
    #allocation19 [shape = 'u8[512]{0}', space=vmem, size = 0x400, scoped, tag = 'input window, operand 8, single buffered']
    #allocation20 [shape = 'u8[1024]{0}', space=vmem, size = 0x400, scoped, tag = 'output window, operand 0']
    %14 = vsyncpa [#allocation6], 0
    %s15 = scalar_lea.sflag [#allocation6], 1
    %16 = vsyncpa %s15, 0
    %17 = vsyncpa [#allocation9], 0
    %18 = vsyncpa [#allocation12], 0
    %19 = vsyncpa [#allocation15], 0
    %20 = vsyncpa [#allocation18], 0
    %21 = vsyncpa [#allocation7], 0
    %s22 = scalar_lea.sflag [#allocation7], 1
    %23 = vsyncpa %s22, 0
    loop: start=0, step=1, limit=4
    $region2: #{tpu_custom_call.1} parent=1 // loop_pre_header
      _
    $region3: #{tpu_custom_call.1} parent=1 // loop_header
      %s25 = sphi 0, %s29
      %p26 = scmp.ge.s32.totalorder %s25, 4
      %s35 = sphi 0, %s37
      %s38 = sphi 0, %s35
      %s39 = sphi 0, %s38
      %s55 = sphi 0, %s39
      %s59 = sphi 0, %s59
      %s61 = sphi 0, %s59
      %s62 = sphi 0, %s61
      %s76 = sphi 0, %s62
      %s80 = sphi 0, %s80
      %s82 = sphi 0, %s80
      %s83 = sphi 0, %s82
      %s97 = sphi 0, %s83
      %s101 = sphi 0, %s101
      %s103 = sphi 0, %s101
      %s104 = sphi 0, %s103
      %s118 = sphi 0, %s104
      %s122 = sphi 0, %s122
      %s124 = sphi 0, %s122
      %s125 = sphi 0, %s124
      %s139 = sphi 0, %s125
      %s143 = sphi 0, %s143
      %s145 = sphi 0, %s143
      %s146 = sphi 0, %s145
      %s160 = sphi 0, %s146
      %s164 = sphi 0, %s164
      %s166 = sphi 0, %s164
      %s167 = sphi 0, %s166
      %s181 = sphi 0, %s167
      %s185 = sphi 0, %s185
      %s187 = sphi 0, %s185
      %s188 = sphi 0, %s187
      %s202 = sphi 0, %s188
      %s206 = sphi 0, %s206
      %s208 = sphi 0, %s206
      %s209 = sphi 0, %s208
      %s223 = sphi 0, %s209
      %s229 = sphi 0, %s231
      %s232 = sphi 0, %s229
      %s233 = sphi 0, %s232
      %s249 = sphi 0, %s233
    $region4: #{tpu_custom_call.1} parent=1 // loop_header_branch
      %28 = sbr.rel (%p26) target = $region8
    $region5: #{tpu_custom_call.1} parent=1 // loop_body
      %s30 = ssub.s32 %s25, 1
      %s31 = ssub.s32 %s25, 2
      %s32 = sadd.s32 %s25, 1
      %s33 = ssub.s32 %s25, %s32
      %p34 = scmp.eq.s32.totalorder %s33, 0
      %s36 = sadd.s32 %s35, 1
      %s37 = scalar_select %p34, %s35, %s36
      %p40 = pneg %p34
      %p41 = scmp.eq.s32.totalorder %s25, 1
      %p42 = por %p40, %p41
      %p43 = scmp.ne.s32.totalorder %s35, %s38
      %p44 = scmp.eq.s32.totalorder %s25, 0
      %p45 = por %p43, %p44
      %p46 = scmp.ne.s32.totalorder %s35, %s38
      %p47 = scmp.eq.s32.totalorder %s30, 1
      %p48 = por %p46, %p47
      %p49 = scmp.ne.s32.totalorder %s38, %s39
      %p50 = scmp.eq.s32.totalorder %s30, 0
      %p51 = por %p49, %p50
      %p52 = scmp.ne.s32.totalorder %s38, %s39
      %p53 = scmp.eq.s32.totalorder %s31, 1
      %p54 = por %p52, %p53
      %p56 = scmp.ne.s32.totalorder %s39, %s55
      %p57 = scmp.eq.s32.totalorder %s31, 0
      %p58 = por %p56, %p57
      %s60 = sadd.s32 %s59, 1
      %p63 = scmp.eq.s32.totalorder %s25, 1
      %p64 = scmp.ne.s32.totalorder %s59, %s61
      %p65 = scmp.eq.s32.totalorder %s25, 0
      %p66 = por %p64, %p65
      %p67 = scmp.ne.s32.totalorder %s59, %s61
      %p68 = scmp.eq.s32.totalorder %s30, 1
      %p69 = por %p67, %p68
      %p70 = scmp.ne.s32.totalorder %s61, %s62
      %p71 = scmp.eq.s32.totalorder %s30, 0
      %p72 = por %p70, %p71
      %p73 = scmp.ne.s32.totalorder %s61, %s62
      %p74 = scmp.eq.s32.totalorder %s31, 1
      %p75 = por %p73, %p74
      %p77 = scmp.ne.s32.totalorder %s62, %s76
      %p78 = scmp.eq.s32.totalorder %s31, 0
      %p79 = por %p77, %p78
      %s81 = sadd.s32 %s80, 1
      %p84 = scmp.eq.s32.totalorder %s25, 1
      %p85 = scmp.ne.s32.totalorder %s80, %s82
      %p86 = scmp.eq.s32.totalorder %s25, 0
      %p87 = por %p85, %p86
      %p88 = scmp.ne.s32.totalorder %s80, %s82
      %p89 = scmp.eq.s32.totalorder %s30, 1
      %p90 = por %p88, %p89
      %p91 = scmp.ne.s32.totalorder %s82, %s83
      %p92 = scmp.eq.s32.totalorder %s30, 0
      %p93 = por %p91, %p92
      %p94 = scmp.ne.s32.totalorder %s82, %s83
      %p95 = scmp.eq.s32.totalorder %s31, 1
      %p96 = por %p94, %p95
      %p98 = scmp.ne.s32.totalorder %s83, %s97
      %p99 = scmp.eq.s32.totalorder %s31, 0
      %p100 = por %p98, %p99
      %s102 = sadd.s32 %s101, 1
      %p105 = scmp.eq.s32.totalorder %s25, 1
      %p106 = scmp.ne.s32.totalorder %s101, %s103
      %p107 = scmp.eq.s32.totalorder %s25, 0
      %p108 = por %p106, %p107
      %p109 = scmp.ne.s32.totalorder %s101, %s103
      %p110 = scmp.eq.s32.totalorder %s30, 1
      %p111 = por %p109, %p110
      %p112 = scmp.ne.s32.totalorder %s103, %s104
      %p113 = scmp.eq.s32.totalorder %s30, 0
      %p114 = por %p112, %p113
      %p115 = scmp.ne.s32.totalorder %s103, %s104
      %p116 = scmp.eq.s32.totalorder %s31, 1
      %p117 = por %p115, %p116
      %p119 = scmp.ne.s32.totalorder %s104, %s118
      %p120 = scmp.eq.s32.totalorder %s31, 0
      %p121 = por %p119, %p120
      %s123 = sadd.s32 %s122, 1
      %p126 = scmp.eq.s32.totalorder %s25, 1
      %p127 = scmp.ne.s32.totalorder %s122, %s124
      %p128 = scmp.eq.s32.totalorder %s25, 0
      %p129 = por %p127, %p128
      %p130 = scmp.ne.s32.totalorder %s122, %s124
      %p131 = scmp.eq.s32.totalorder %s30, 1
      %p132 = por %p130, %p131
      %p133 = scmp.ne.s32.totalorder %s124, %s125
      %p134 = scmp.eq.s32.totalorder %s30, 0
      %p135 = por %p133, %p134
      %p136 = scmp.ne.s32.totalorder %s124, %s125
      %p137 = scmp.eq.s32.totalorder %s31, 1
      %p138 = por %p136, %p137
      %p140 = scmp.ne.s32.totalorder %s125, %s139
      %p141 = scmp.eq.s32.totalorder %s31, 0
      %p142 = por %p140, %p141
      %s144 = sadd.s32 %s143, 1
      %p147 = scmp.eq.s32.totalorder %s25, 1
      %p148 = scmp.ne.s32.totalorder %s143, %s145
      %p149 = scmp.eq.s32.totalorder %s25, 0
      %p150 = por %p148, %p149
      %p151 = scmp.ne.s32.totalorder %s143, %s145
      %p152 = scmp.eq.s32.totalorder %s30, 1
      %p153 = por %p151, %p152
      %p154 = scmp.ne.s32.totalorder %s145, %s146
      %p155 = scmp.eq.s32.totalorder %s30, 0
      %p156 = por %p154, %p155
      %p157 = scmp.ne.s32.totalorder %s145, %s146
      %p158 = scmp.eq.s32.totalorder %s31, 1
      %p159 = por %p157, %p158
      %p161 = scmp.ne.s32.totalorder %s146, %s160
      %p162 = scmp.eq.s32.totalorder %s31, 0
      %p163 = por %p161, %p162
      %s165 = sadd.s32 %s164, 1
      %p168 = scmp.eq.s32.totalorder %s25, 1
      %p169 = scmp.ne.s32.totalorder %s164, %s166
      %p170 = scmp.eq.s32.totalorder %s25, 0
      %p171 = por %p169, %p170
      %p172 = scmp.ne.s32.totalorder %s164, %s166
      %p173 = scmp.eq.s32.totalorder %s30, 1
      %p174 = por %p172, %p173
      %p175 = scmp.ne.s32.totalorder %s166, %s167
      %p176 = scmp.eq.s32.totalorder %s30, 0
      %p177 = por %p175, %p176
      %p178 = scmp.ne.s32.totalorder %s166, %s167
      %p179 = scmp.eq.s32.totalorder %s31, 1
      %p180 = por %p178, %p179
      %p182 = scmp.ne.s32.totalorder %s167, %s181
      %p183 = scmp.eq.s32.totalorder %s31, 0
      %p184 = por %p182, %p183
      %s186 = sadd.s32 %s185, 1
      %p189 = scmp.eq.s32.totalorder %s25, 1
      %p190 = scmp.ne.s32.totalorder %s185, %s187
      %p191 = scmp.eq.s32.totalorder %s25, 0
      %p192 = por %p190, %p191
      %p193 = scmp.ne.s32.totalorder %s185, %s187
      %p194 = scmp.eq.s32.totalorder %s30, 1
      %p195 = por %p193, %p194
      %p196 = scmp.ne.s32.totalorder %s187, %s188
      %p197 = scmp.eq.s32.totalorder %s30, 0
      %p198 = por %p196, %p197
      %p199 = scmp.ne.s32.totalorder %s187, %s188
      %p200 = scmp.eq.s32.totalorder %s31, 1
      %p201 = por %p199, %p200
      %p203 = scmp.ne.s32.totalorder %s188, %s202
      %p204 = scmp.eq.s32.totalorder %s31, 0
      %p205 = por %p203, %p204
      %s207 = sadd.s32 %s206, 1
      %p210 = scmp.eq.s32.totalorder %s25, 1
      %p211 = scmp.ne.s32.totalorder %s206, %s208
      %p212 = scmp.eq.s32.totalorder %s25, 0
      %p213 = por %p211, %p212
      %p214 = scmp.ne.s32.totalorder %s206, %s208
      %p215 = scmp.eq.s32.totalorder %s30, 1
      %p216 = por %p214, %p215
      %p217 = scmp.ne.s32.totalorder %s208, %s209
      %p218 = scmp.eq.s32.totalorder %s30, 0
      %p219 = por %p217, %p218
      %p220 = scmp.ne.s32.totalorder %s208, %s209
      %p221 = scmp.eq.s32.totalorder %s31, 1
      %p222 = por %p220, %p221
      %p224 = scmp.ne.s32.totalorder %s209, %s223
      %p225 = scmp.eq.s32.totalorder %s31, 0
      %p226 = por %p224, %p225
      %s227 = ssub.s32 %s25, %s32
      %p228 = scmp.eq.s32.totalorder %s227, 0
      %s230 = sadd.s32 %s229, 1
      %s231 = scalar_select %p228, %s229, %s230
      %p234 = pneg %p228
      %p235 = scmp.eq.s32.totalorder %s25, 1
      %p236 = por %p234, %p235
      %p237 = scmp.ne.s32.totalorder %s229, %s232
      %p238 = scmp.eq.s32.totalorder %s25, 0
      %p239 = por %p237, %p238
      %p240 = scmp.ne.s32.totalorder %s229, %s232
      %p241 = scmp.eq.s32.totalorder %s30, 1
      %p242 = por %p240, %p241
      %p243 = scmp.ne.s32.totalorder %s232, %s233
      %p244 = scmp.eq.s32.totalorder %s30, 0
      %p245 = por %p243, %p244
      %p246 = scmp.ne.s32.totalorder %s232, %s233
      %p247 = scmp.eq.s32.totalorder %s31, 1
      %p248 = por %p246, %p247
      %p250 = scmp.ne.s32.totalorder %s233, %s249
      %p251 = scmp.eq.s32.totalorder %s31, 0
      %p252 = por %p250, %p251
      %p253 = scmp.le.s32.totalorder 1, %s25
      %p254 = scmp.lt.s32.totalorder %s25, 3
      %p255 = pnand %p253, %p254
      %p256 = pneg %p255
      // Predicated region
      $region9: #{tpu_custom_call.1} parent=5 // pred_check
        _
      $region10: #{tpu_custom_call.1} parent=5 // pred_check_branch
        %258 = sbr.rel (%p255) target = $region12
      $region11: #{tpu_custom_call.1} parent=5 // pred_region
        %s259 = ssub.s32 %s25, 1
        // Predicated region
        $region13: #{tpu_custom_call.1} parent=11 // pred_check
          %p260 = pneg %p72
        $region14: #{tpu_custom_call.1} parent=11 // pred_check_branch
          %262 = sbr.rel (%p260) target = $region16
        $region15: #{tpu_custom_call.1} parent=11 // pred_region
          %264 = vsyncadd [#allocation9], 0
          %s265 = sshll.u32 %s1, 4
          %s266 = int_to_ptr.hbm [resolvable:$true] %s265
          %s267 = sshll.u32 [#allocation8], 4
          %s268 = int_to_ptr.vmem [resolvable:$true] %s267
          %273 = dma.hbm_to_vmem [thread:$0]  %s266, 2304, %s268, [#allocation9], 256, 256, 16
        $region16: #{tpu_custom_call.1} parent=11 // pred_fallthru
          _
        // Predicated region
        $region17: #{tpu_custom_call.1} parent=11 // pred_check
          %p274 = pneg %p93
        $region18: #{tpu_custom_call.1} parent=11 // pred_check_branch
          %276 = sbr.rel (%p274) target = $region20
        $region19: #{tpu_custom_call.1} parent=11 // pred_region
          %278 = vsyncadd [#allocation9], 0
          %s280 = sshll.u32 %s2, 4
          %s281 = int_to_ptr.hbm [resolvable:$true] %s280
          %s282 = sshll.u32 [#allocation10], 4
          %s283 = int_to_ptr.vmem [resolvable:$true] %s282
          %285 = dma.hbm_to_vmem [thread:$0]  %s281, 64, %s283, [#allocation9]
        $region20: #{tpu_custom_call.1} parent=11 // pred_fallthru
          _
        // Predicated region
        $region21: #{tpu_custom_call.1} parent=11 // pred_check
          %p286 = pneg %p114
        $region22: #{tpu_custom_call.1} parent=11 // pred_check_branch
          %288 = sbr.rel (%p286) target = $region24
        $region23: #{tpu_custom_call.1} parent=11 // pred_region
          %290 = vsyncadd [#allocation12], 0
          %s291 = sshll.u32 %s3, 4
          %s292 = int_to_ptr.hbm [resolvable:$true] %s291
          %s293 = sshll.u32 [#allocation11], 4
          %s294 = int_to_ptr.vmem [resolvable:$true] %s293
          %299 = dma.hbm_to_vmem [thread:$0]  %s292, 30720, %s294, [#allocation12], 256, 256, 16
        $region24: #{tpu_custom_call.1} parent=11 // pred_fallthru
          _
        // Predicated region
        $region25: #{tpu_custom_call.1} parent=11 // pred_check
          %p300 = pneg %p135
        $region26: #{tpu_custom_call.1} parent=11 // pred_check_branch
          %302 = sbr.rel (%p300) target = $region28
        $region27: #{tpu_custom_call.1} parent=11 // pred_region
          %304 = vsyncadd [#allocation12], 0
          %s306 = sshll.u32 %s4, 4
          %s307 = int_to_ptr.hbm [resolvable:$true] %s306
          %s308 = sshll.u32 [#allocation13], 4
          %s309 = int_to_ptr.vmem [resolvable:$true] %s308
          %311 = dma.hbm_to_vmem [thread:$0]  %s307, 64, %s309, [#allocation12]
        $region28: #{tpu_custom_call.1} parent=11 // pred_fallthru
          _
        // Predicated region
        $region29: #{tpu_custom_call.1} parent=11 // pred_check
          %p312 = pneg %p156
        $region30: #{tpu_custom_call.1} parent=11 // pred_check_branch
          %314 = sbr.rel (%p312) target = $region32
        $region31: #{tpu_custom_call.1} parent=11 // pred_region
          %316 = vsyncadd [#allocation15], 0
          %s317 = sshll.u32 %s5, 4
          %s318 = int_to_ptr.hbm [resolvable:$true] %s317
          %s319 = sshll.u32 [#allocation14], 4
          %s320 = int_to_ptr.vmem [resolvable:$true] %s319
          %325 = dma.hbm_to_vmem [thread:$0]  %s318, 36864, %s320, [#allocation15], 256, 256, 16
        $region32: #{tpu_custom_call.1} parent=11 // pred_fallthru
          _
        // Predicated region
        $region33: #{tpu_custom_call.1} parent=11 // pred_check
          %p326 = pneg %p177
        $region34: #{tpu_custom_call.1} parent=11 // pred_check_branch
          %328 = sbr.rel (%p326) target = $region36
        $region35: #{tpu_custom_call.1} parent=11 // pred_region
          %330 = vsyncadd [#allocation15], 0
          %s332 = sshll.u32 %s6, 4
          %s333 = int_to_ptr.hbm [resolvable:$true] %s332
          %s334 = sshll.u32 [#allocation16], 4
          %s335 = int_to_ptr.vmem [resolvable:$true] %s334
          %337 = dma.hbm_to_vmem [thread:$0]  %s333, 64, %s335, [#allocation15]
        $region36: #{tpu_custom_call.1} parent=11 // pred_fallthru
          _
        // Predicated region
        $region37: #{tpu_custom_call.1} parent=11 // pred_check
          %p338 = pneg %p198
        $region38: #{tpu_custom_call.1} parent=11 // pred_check_branch
          %340 = sbr.rel (%p338) target = $region40
        $region39: #{tpu_custom_call.1} parent=11 // pred_region
          %342 = vsyncadd [#allocation18], 0
          %s343 = sshll.u32 %s7, 4
          %s344 = int_to_ptr.hbm [resolvable:$true] %s343
          %s345 = sshll.u32 [#allocation17], 4
          %s346 = int_to_ptr.vmem [resolvable:$true] %s345
          %351 = dma.hbm_to_vmem [thread:$0]  %s344, 2048, %s346, [#allocation18], 128, 128, 8
        $region40: #{tpu_custom_call.1} parent=11 // pred_fallthru
          _
        // Predicated region
        $region41: #{tpu_custom_call.1} parent=11 // pred_check
          %p352 = pneg %p219
        $region42: #{tpu_custom_call.1} parent=11 // pred_check_branch
          %354 = sbr.rel (%p352) target = $region44
        $region43: #{tpu_custom_call.1} parent=11 // pred_region
          %356 = vsyncadd [#allocation18], 0
          %s358 = sshll.u32 %s8, 4
          %s359 = int_to_ptr.hbm [resolvable:$true] %s358
          %s360 = sshll.u32 [#allocation19], 4
          %s361 = int_to_ptr.vmem [resolvable:$true] %s360
          %363 = dma.hbm_to_vmem [thread:$0]  %s359, 16, %s361, [#allocation18]
        $region44: #{tpu_custom_call.1} parent=11 // pred_fallthru
          _
      $region12: #{tpu_custom_call.1} parent=5 // pred_fallthru
        _
      %p364 = scmp.lt.s32.totalorder %s25, 2
      // Predicated region
      $region45: #{tpu_custom_call.1} parent=5 // pred_check
        %p365 = pneg %p364
      $region46: #{tpu_custom_call.1} parent=5 // pred_check_branch
        %367 = sbr.rel (%p365) target = $region48
      $region47: #{tpu_custom_call.1} parent=5 // pred_region
        // Predicated region
        $region49: #{tpu_custom_call.1} parent=47 // pred_check
          %p368 = pneg %p45
        $region50: #{tpu_custom_call.1} parent=47 // pred_check_branch
          %370 = sbr.rel (%p368) target = $region52
        $region51: #{tpu_custom_call.1} parent=47 // pred_region
          %s371 = sand.u32 %s35, 1
          %s372 = scalar_lea.sflag [#allocation6], %s371
          %s373 = sand.u32 %s35, 1
          %s374 = smul.addr %s373, 16
          %s375 = scalar_lea.vmem [#allocation5], %s374
          %377 = vsyncadd %s372, 0
          %s378 = smul.addr %s25, 2
          %s379 = smul.addr %s378, 8
          %s380 = scalar_lea.hbm %s0, %s379
          %s381 = sshll.u32 %s380, 4
          %s382 = int_to_ptr.hbm [resolvable:$true] %s381
          %s383 = sshll.u32 %s375, 4
          %s384 = int_to_ptr.vmem [resolvable:$true] %s383
          %389 = dma.hbm_to_vmem [thread:$0]  %s382, 256, %s384, %s372, 128, 128, 8
        $region52: #{tpu_custom_call.1} parent=47 // pred_fallthru
          _
      $region48: #{tpu_custom_call.1} parent=5 // pred_fallthru
        _
      %p390 = scmp.le.s32.totalorder 1, %s25
      %p391 = scmp.lt.s32.totalorder %s25, 3
      %p392 = pnand %p390, %p391
      %p393 = pneg %p392
      // Predicated region
      $region53: #{tpu_custom_call.1} parent=5 // pred_check
        _
      $region54: #{tpu_custom_call.1} parent=5 // pred_check_branch
        %395 = sbr.rel (%p392) target = $region56
      $region55: #{tpu_custom_call.1} parent=5 // pred_region
        %s396 = ssub.s32 %s25, 1
        %s397 = sand.u32 %s38, 1
        %s398 = scalar_lea.sflag [#allocation6], %s397
        %s399 = sand.u32 %s38, 1
        %s400 = smul.addr %s399, 16
        %s401 = scalar_lea.vmem [#allocation5], %s400
        // Predicated region
        $region57: #{tpu_custom_call.1} parent=55 // pred_check
          %p402 = pneg %p51
        $region58: #{tpu_custom_call.1} parent=55 // pred_check_branch
          %404 = sbr.rel (%p402) target = $region60
        $region59: #{tpu_custom_call.1} parent=55 // pred_region
          %406 = dma.done %s398, 256
        $region60: #{tpu_custom_call.1} parent=55 // pred_fallthru
          _
        // Predicated region
        $region61: #{tpu_custom_call.1} parent=55 // pred_check
          %p407 = pneg %p72
        $region62: #{tpu_custom_call.1} parent=55 // pred_check_branch
          %409 = sbr.rel (%p407) target = $region64
        $region63: #{tpu_custom_call.1} parent=55 // pred_region
          %411 = dma.done [#allocation9], 2304
        $region64: #{tpu_custom_call.1} parent=55 // pred_fallthru
          _
        // Predicated region
        $region65: #{tpu_custom_call.1} parent=55 // pred_check
          %p412 = pneg %p93
        $region66: #{tpu_custom_call.1} parent=55 // pred_check_branch
          %414 = sbr.rel (%p412) target = $region68
        $region67: #{tpu_custom_call.1} parent=55 // pred_region
          %416 = dma.done [#allocation9], 64
        $region68: #{tpu_custom_call.1} parent=55 // pred_fallthru
          _
        // Predicated region
        $region69: #{tpu_custom_call.1} parent=55 // pred_check
          %p417 = pneg %p114
        $region70: #{tpu_custom_call.1} parent=55 // pred_check_branch
          %419 = sbr.rel (%p417) target = $region72
        $region71: #{tpu_custom_call.1} parent=55 // pred_region
          %421 = dma.done [#allocation12], 30720
        $region72: #{tpu_custom_call.1} parent=55 // pred_fallthru
          _
        // Predicated region
        $region73: #{tpu_custom_call.1} parent=55 // pred_check
          %p422 = pneg %p135
        $region74: #{tpu_custom_call.1} parent=55 // pred_check_branch
          %424 = sbr.rel (%p422) target = $region76
        $region75: #{tpu_custom_call.1} parent=55 // pred_region
          %426 = dma.done [#allocation12], 64
        $region76: #{tpu_custom_call.1} parent=55 // pred_fallthru
          _
        // Predicated region
        $region77: #{tpu_custom_call.1} parent=55 // pred_check
          %p427 = pneg %p156
        $region78: #{tpu_custom_call.1} parent=55 // pred_check_branch
          %429 = sbr.rel (%p427) target = $region80
        $region79: #{tpu_custom_call.1} parent=55 // pred_region
          %431 = dma.done [#allocation15], 36864
        $region80: #{tpu_custom_call.1} parent=55 // pred_fallthru
          _
        // Predicated region
        $region81: #{tpu_custom_call.1} parent=55 // pred_check
          %p432 = pneg %p177
        $region82: #{tpu_custom_call.1} parent=55 // pred_check_branch
          %434 = sbr.rel (%p432) target = $region84
        $region83: #{tpu_custom_call.1} parent=55 // pred_region
          %436 = dma.done [#allocation15], 64
        $region84: #{tpu_custom_call.1} parent=55 // pred_fallthru
          _
        // Predicated region
        $region85: #{tpu_custom_call.1} parent=55 // pred_check
          %p437 = pneg %p198
        $region86: #{tpu_custom_call.1} parent=55 // pred_check_branch
          %439 = sbr.rel (%p437) target = $region88
        $region87: #{tpu_custom_call.1} parent=55 // pred_region
          %441 = dma.done [#allocation18], 2048
        $region88: #{tpu_custom_call.1} parent=55 // pred_fallthru
          _
        // Predicated region
        $region89: #{tpu_custom_call.1} parent=55 // pred_check
          %p442 = pneg %p219
        $region90: #{tpu_custom_call.1} parent=55 // pred_check_branch
          %444 = sbr.rel (%p442) target = $region92
        $region91: #{tpu_custom_call.1} parent=55 // pred_region
          %446 = dma.done [#allocation18], 16
        $region92: #{tpu_custom_call.1} parent=55 // pred_fallthru
          _
        %s447 = sand.u32 %s38, 1
        %s448 = scalar_lea.sflag [#allocation6], %s447
        %s449 = sand.u32 %s38, 1
        %s450 = smul.addr %s449, 16
        %s451 = scalar_lea.vmem [#allocation5], %s450
        %p452 = pneg %p51
        %p453 = pneg %p48
        %p454 = pneg %p72
        %p455 = pneg %p69
        %p456 = pneg %p93
        %p457 = pneg %p90
        %p458 = pneg %p114
        %p459 = pneg %p111
        %p460 = pneg %p135
        %p461 = pneg %p132
        %p462 = pneg %p156
        %p463 = pneg %p153
        %p464 = pneg %p177
        %p465 = pneg %p174
        %p466 = pneg %p198
        %p467 = pneg %p195
        %p468 = pneg %p219
        %p469 = pneg %p216
        %p470 = pneg %p245
        %p471 = pneg %p242
        %s472 = sand.u32 %s232, 1
        %s473 = scalar_lea.sflag [#allocation7], %s472
        %s474 = sand.u32 %s232, 1
        %s475 = scalar_lea.vmem [#allocation20], %s474
        %vm477 = vcmask 139264
        %vm478 = vsmask.f32 256
        %vm479 = vmand %vm477, %vm478
        %v480 = vld [vmem:[#allocation2] sm:$0x1]
        %v481 = vsel %vm479, 0, %v480
        %482 = vst [vmem:[#allocation2] sm:$0x1] %v481
        %vm483 = vsmask.f32 7938
        %vm484 = vmand %vm477, %vm483
        %v485 = vld [vmem:[#allocation2 + $0x8] sm:$0x1]
        %v486 = vsel %vm484, 0, %v485
        %487 = vst [vmem:[#allocation2 + $0x8] sm:$0x1] %v486
        %vm488 = vcmask 3072
        %489 = vst.msk [vmem:[#allocation2] sm:$0xf] %vm488, 0
        %490 = vst.msk [vmem:[#allocation2 + $0x4] sm:$0xf] %vm488, 0
        %vm491 = vcmask 0
        %492 = vst.msk [vmem:[#allocation2 + $0x8] sm:$0x1] %vm491, 0
        %vm493 = vcmask 142472
        %494 = vst.msk [vmem:[#allocation2] sm:$0xf] %vm493, 0
        %495 = vst.msk [vmem:[#allocation2 + $0x4] sm:$0xf] %vm493, 0
        %vm496 = vcmask 139400
        %497 = vst.msk [vmem:[#allocation2 + $0x8] sm:$0x1] %vm496, 0
        %v498 = vld [vmem:[%s401] sm:$0xff]
        %v499 = vld [vmem:[%s401 + $0x8] sm:$0xff]
        %v500 = vpack.c.bf16 %v498, %v498
        %v501 = vpack.c.bf16 %v499, %v499
        %vm502 = vsmask.f32 4368
        %vm503 = vmor %vm478, %vm502
        %v505 = vshrl.u32 %v500, 16
        %v507 = vrot.slane %v505, 7
        %v508 = vshll.u32 %v500, 16
        %v510 = vor.u32 %v507, %v508
        %v511 = vrot.slane %v507, 4
        %v513 = vshrl.u32 %v501, 16
        %v515 = vrot.slane %v513, 7
        %v516 = vshll.u32 %v501, 16
        %v518 = vor.u32 %v515, %v516
        %v519 = vsel %vm503, %v511, %v518
        %v520 = vrot.slane %v515, 4
        %521 = vrot.lane.b32.xlu0 %v510, 1
        %v522 = vpop.permute.xlu0 %521
        %523 = vrot.lane.b32.xlu0 %v519, 1
        %v524 = vpop.permute.xlu0 %523
        %525 = vrot.lane.b32.xlu0 %v520, 1
        %v526 = vpop.permute.xlu0 %525
        %vm530 = vcmask 134152
        %vm531 = vmand %vm530, %vm483
        %v532 = vld [vmem:[#allocation2] sm:$0xf]
        %v533 = vsel %vm531, %v522, %v532
        %534 = vst [vmem:[#allocation2] sm:$0xf] %v533
        %vm535 = vcmask 134152
        %536 = vst.msk [vmem:[#allocation2 + $0x4] sm:$0xf] %vm535, %v524
        %vm537 = vcmask 131080
        %vm538 = vmand %vm537, %vm478
        %v539 = vld [vmem:[#allocation2 + $0x8] sm:$0x1]
        %v540 = vsel %vm538, %v526, %v539
        %541 = vst [vmem:[#allocation2 + $0x8] sm:$0x1] %v540
        %v542 = vld [vmem:[#allocation2] sm:$0xf]
        %v543 = vld [vmem:[#allocation2 + $0x4] sm:$0xf]
        %v544 = vld [vmem:[#allocation8] sm:$0xff]
        %v545 = vld [vmem:[#allocation8 + $0x8] sm:$0xff]
        %v546 = vld [vmem:[#allocation8 + $0x10] sm:$0xff]
        %v547 = vld [vmem:[#allocation8 + $0x18] sm:$0xff]
        %v548 = vld [vmem:[#allocation8 + $0x20] sm:$0x11]
        %v549 = vld [vmem:[#allocation8 + $0x28] sm:$0x11]
        %v550 = vld [vmem:[#allocation2 + $0x8] sm:$0x1]
        %s551 = scalar_lea.vmem [#allocation8], 48
        %v552 = vld [vmem:[%s551] sm:$0xff]
        %v553 = vld [vmem:[%s551 + $0x8] sm:$0xff]
        %v554 = vld [vmem:[%s551 + $0x10] sm:$0xff]
        %v555 = vld [vmem:[%s551 + $0x18] sm:$0xff]
        %v556 = vld [vmem:[%s551 + $0x20] sm:$0x11]
        %v557 = vld [vmem:[%s551 + $0x28] sm:$0x11]
        %v561 = vunpack.c.l.b16 %v542
        %v562 = vunpack.c.l.b16 %v543
        %v563 = vunpack.c.l.b16 %v550
        %v564 = vpack.c.b16 %v562, %v561
        %v565 = vpack.c.b16 %v563, %v563
        %vm566 = vsmask.f32 7424
        %v568 = vshrl.u32 %v564, 16
        %v570 = vshll.u32 %v564, 16
        %v572 = vrot.slane %v570, 1
        %v573 = vor.u32 %v568, %v572
        %v575 = vshll.u32 %v565, 16
        %v577 = vrot.slane %v575, 1
        %v578 = vsel %vm566, %v573, %v577
        %v585 = vunpack.c.l.b16 %v552
        %v586 = vunpack.c.h.b16 %v552
        %v587 = vunpack.c.l.b16 %v553
        %v588 = vunpack.c.h.b16 %v553
        %v589 = vunpack.c.l.b16 %v554
        %v590 = vunpack.c.h.b16 %v554
        %v591 = vunpack.c.l.b16 %v555
        %v592 = vunpack.c.h.b16 %v555
        %v593 = vunpack.c.l.b16 %v556
        %v594 = vunpack.c.h.b16 %v556
        %v595 = vunpack.c.l.b16 %v557
        %v596 = vunpack.c.h.b16 %v557
        %v597 = vpack.c.b16 %v589, %v585
        %v598 = vpack.c.b16 %v590, %v586
        %v599 = vpack.c.b16 %v591, %v587
        %v600 = vpack.c.b16 %v592, %v588
        %v601 = vpack.c.b16 %v593, %v593
        %v602 = vpack.c.b16 %v594, %v594
        %v603 = vpack.c.b16 %v595, %v595
        %v604 = vpack.c.b16 %v596, %v596
        %vm609 = vcmask 146432
        %v611 = vsel %vm609, %v578, 0
        %vm613 = vcmask 1040384
        %v615 = vsel %vm613, %v601, 0
        %v618 = vsel %vm613, %v602, 0
        %v621 = vsel %vm613, %v603, 0
        %v624 = vsel %vm613, %v604, 0
        %626 = vmatpush.bf16.msra.mxu0 0
        %627 = vmatpush.bf16.msra.mxu0 0
        %628 = vmatpush.bf16.msra.mxu0 0
        %629 = vmatpush.bf16.msra.mxu0 0
        %630 = vmatpush.bf16.msra.mxu0 0
        %631 = vmatpush.bf16.msra.mxu0 0
        %632 = vmatpush.bf16.msra.mxu0 %v615
        %633 = vmatpush.bf16.msra.mxu0 %v597
        %634 = vmatmul.bf16.gmra.mxu0 %v611
        %v635 = vpop.f32.mrf.mxu0
        %v636 = vadd.f32 0.0, %v635
        %v637 = vpop.f32.mrf.mxu0
        %v638 = vadd.f32 0.0, %v637
        %639 = vdwg.mxu0
        %640 = vmatpush.bf16.msra.mxu0 0
        %641 = vmatpush.bf16.msra.mxu0 0
        %642 = vmatpush.bf16.msra.mxu0 0
        %643 = vmatpush.bf16.msra.mxu0 0
        %644 = vmatpush.bf16.msra.mxu0 0
        %645 = vmatpush.bf16.msra.mxu0 0
        %646 = vmatpush.bf16.msra.mxu0 %v618
        %647 = vmatpush.bf16.msra.mxu0 %v598
        %648 = vmatmul.bf16.gmra.mxu0 %v611
        %v649 = vpop.f32.mrf.mxu0
        %v650 = vadd.f32 0.0, %v649
        %v651 = vpop.f32.mrf.mxu0
        %v652 = vadd.f32 0.0, %v651
        %653 = vdwg.mxu0
        %654 = vmatpush.bf16.msra.mxu0 0
        %655 = vmatpush.bf16.msra.mxu0 0
        %656 = vmatpush.bf16.msra.mxu0 0
        %657 = vmatpush.bf16.msra.mxu0 0
        %658 = vmatpush.bf16.msra.mxu0 0
        %659 = vmatpush.bf16.msra.mxu0 0
        %660 = vmatpush.bf16.msra.mxu0 %v621
        %661 = vmatpush.bf16.msra.mxu0 %v599
        %662 = vmatmul.bf16.gmra.mxu0 %v611
        %v663 = vpop.f32.mrf.mxu0
        %v664 = vadd.f32 0.0, %v663
        %v665 = vpop.f32.mrf.mxu0
        %v666 = vadd.f32 0.0, %v665
        %667 = vdwg.mxu0
        %668 = vmatpush.bf16.msra.mxu0 0
        %669 = vmatpush.bf16.msra.mxu0 0
        %670 = vmatpush.bf16.msra.mxu0 0
        %671 = vmatpush.bf16.msra.mxu0 0
        %672 = vmatpush.bf16.msra.mxu0 0
        %673 = vmatpush.bf16.msra.mxu0 0
        %674 = vmatpush.bf16.msra.mxu0 %v624
        %675 = vmatpush.bf16.msra.mxu0 %v600
        %676 = vmatmul.bf16.gmra.mxu0 %v611
        %v677 = vpop.f32.mrf.mxu0
        %v678 = vadd.f32 0.0, %v677
        %v679 = vpop.f32.mrf.mxu0
        %v680 = vadd.f32 0.0, %v679
        %681 = vdwg.mxu0
        %v688 = vunpack.c.l.b16 %v544
        %v689 = vunpack.c.h.b16 %v544
        %v690 = vunpack.c.l.b16 %v545
        %v691 = vunpack.c.h.b16 %v545
        %v692 = vunpack.c.l.b16 %v546
        %v693 = vunpack.c.h.b16 %v546
        %v694 = vunpack.c.l.b16 %v547
        %v695 = vunpack.c.h.b16 %v547
        %v696 = vunpack.c.l.b16 %v548
        %v697 = vunpack.c.h.b16 %v548
        %v698 = vunpack.c.l.b16 %v549
        %v699 = vunpack.c.h.b16 %v549
        %v700 = vpack.c.b16 %v692, %v688
        %v701 = vpack.c.b16 %v693, %v689
        %v702 = vpack.c.b16 %v694, %v690
        %v703 = vpack.c.b16 %v695, %v691
        %v704 = vpack.c.b16 %v696, %v696
        %v705 = vpack.c.b16 %v697, %v697
        %v706 = vpack.c.b16 %v698, %v698
        %v707 = vpack.c.b16 %v699, %v699
        %v712 = vsel %vm609, %v564, 0
        %v715 = vsel %vm613, %v704, 0
        %v718 = vsel %vm613, %v705, 0
        %v721 = vsel %vm613, %v706, 0
        %v724 = vsel %vm613, %v707, 0
        %726 = vmatpush.bf16.msra.mxu0 0
        %727 = vmatpush.bf16.msra.mxu0 0
        %728 = vmatpush.bf16.msra.mxu0 0
        %729 = vmatpush.bf16.msra.mxu0 0
        %730 = vmatpush.bf16.msra.mxu0 0
        %731 = vmatpush.bf16.msra.mxu0 0
        %732 = vmatpush.bf16.msra.mxu0 %v715
        %733 = vmatpush.bf16.msra.mxu0 %v700
        %734 = vmatmul.bf16.gmra.mxu0 %v712
        %v735 = vpop.f32.mrf.mxu0
        %v736 = vadd.f32 %v636, %v735
        %v737 = vpop.f32.mrf.mxu0
        %v738 = vadd.f32 %v638, %v737
        %739 = vdwg.mxu0
        %740 = vmatpush.bf16.msra.mxu0 0
        %741 = vmatpush.bf16.msra.mxu0 0
        %742 = vmatpush.bf16.msra.mxu0 0
        %743 = vmatpush.bf16.msra.mxu0 0
        %744 = vmatpush.bf16.msra.mxu0 0
        %745 = vmatpush.bf16.msra.mxu0 0
        %746 = vmatpush.bf16.msra.mxu0 %v718
        %747 = vmatpush.bf16.msra.mxu0 %v701
        %748 = vmatmul.bf16.gmra.mxu0 %v712
        %v749 = vpop.f32.mrf.mxu0
        %v750 = vadd.f32 %v650, %v749
        %v751 = vpop.f32.mrf.mxu0
        %v752 = vadd.f32 %v652, %v751
        %753 = vdwg.mxu0
        %754 = vmatpush.bf16.msra.mxu0 0
        %755 = vmatpush.bf16.msra.mxu0 0
        %756 = vmatpush.bf16.msra.mxu0 0
        %757 = vmatpush.bf16.msra.mxu0 0
        %758 = vmatpush.bf16.msra.mxu0 0
        %759 = vmatpush.bf16.msra.mxu0 0
        %760 = vmatpush.bf16.msra.mxu0 %v721
        %761 = vmatpush.bf16.msra.mxu0 %v702
        %762 = vmatmul.bf16.gmra.mxu0 %v712
        %v763 = vpop.f32.mrf.mxu0
        %v764 = vadd.f32 %v664, %v763
        %v765 = vpop.f32.mrf.mxu0
        %v766 = vadd.f32 %v666, %v765
        %767 = vdwg.mxu0
        %768 = vmatpush.bf16.msra.mxu0 0
        %769 = vmatpush.bf16.msra.mxu0 0
        %770 = vmatpush.bf16.msra.mxu0 0
        %771 = vmatpush.bf16.msra.mxu0 0
        %772 = vmatpush.bf16.msra.mxu0 0
        %773 = vmatpush.bf16.msra.mxu0 0
        %774 = vmatpush.bf16.msra.mxu0 %v724
        %775 = vmatpush.bf16.msra.mxu0 %v703
        %776 = vmatmul.bf16.gmra.mxu0 %v712
        %v777 = vpop.f32.mrf.mxu0
        %v778 = vadd.f32 %v678, %v777
        %v779 = vpop.f32.mrf.mxu0
        %v780 = vadd.f32 %v680, %v779
        %781 = vdwg.mxu0
        %v782 = vld [vmem:[#allocation2] sm:$0xe]
        %s783 = scalar_lea.vmem [#allocation8], 96
        %v784 = vld [vmem:[%s783] sm:$0xff]
        %v785 = vld [vmem:[%s783 + $0x8] sm:$0xff]
        %v786 = vld [vmem:[%s783 + $0x10] sm:$0xff]
        %v787 = vld [vmem:[%s783 + $0x18] sm:$0xff]
        %v788 = vld [vmem:[%s783 + $0x20] sm:$0x11]
        %v789 = vld [vmem:[%s783 + $0x28] sm:$0x11]
        %v791 = vunpack.c.l.b16 %v782
        %v792 = vpack.c.b16 %v562, %v791
        %vm793 = vcmask 1046528
        %v794 = vrot.slane %v792, 1
        %v795 = vrot.slane %v565, 1
        %v796 = vsel %vm793, %v794, %v795
        %v803 = vunpack.c.l.b16 %v784
        %v804 = vunpack.c.h.b16 %v784
        %v805 = vunpack.c.l.b16 %v785
        %v806 = vunpack.c.h.b16 %v785
        %v807 = vunpack.c.l.b16 %v786
        %v808 = vunpack.c.h.b16 %v786
        %v809 = vunpack.c.l.b16 %v787
        %v810 = vunpack.c.h.b16 %v787
        %v811 = vunpack.c.l.b16 %v788
        %v812 = vunpack.c.h.b16 %v788
        %v813 = vunpack.c.l.b16 %v789
        %v814 = vunpack.c.h.b16 %v789
        %v815 = vpack.c.b16 %v807, %v803
        %v816 = vpack.c.b16 %v808, %v804
        %v817 = vpack.c.b16 %v809, %v805
        %v818 = vpack.c.b16 %v810, %v806
        %v819 = vpack.c.b16 %v811, %v811
        %v820 = vpack.c.b16 %v812, %v812
        %v821 = vpack.c.b16 %v813, %v813
        %v822 = vpack.c.b16 %v814, %v814
        %v828 = vsel %vm609, %v796, 0
        %v831 = vsel %vm613, %v819, 0
        %v834 = vsel %vm613, %v820, 0
        %v837 = vsel %vm613, %v821, 0
        %v840 = vsel %vm613, %v822, 0
        %842 = vmatpush.bf16.msra.mxu0 0
        %843 = vmatpush.bf16.msra.mxu0 0
        %844 = vmatpush.bf16.msra.mxu0 0
        %845 = vmatpush.bf16.msra.mxu0 0
        %846 = vmatpush.bf16.msra.mxu0 0
        %847 = vmatpush.bf16.msra.mxu0 0
        %848 = vmatpush.bf16.msra.mxu0 %v831
        %849 = vmatpush.bf16.msra.mxu0 %v815
        %850 = vmatmul.bf16.gmra.mxu0 %v828
        %v851 = vpop.f32.mrf.mxu0
        %v852 = vadd.f32 0.0, %v851
        %v853 = vpop.f32.mrf.mxu0
        %v854 = vadd.f32 0.0, %v853
        %855 = vdwg.mxu0
        %856 = vmatpush.bf16.msra.mxu0 0
        %857 = vmatpush.bf16.msra.mxu0 0
        %858 = vmatpush.bf16.msra.mxu0 0
        %859 = vmatpush.bf16.msra.mxu0 0
        %860 = vmatpush.bf16.msra.mxu0 0
        %861 = vmatpush.bf16.msra.mxu0 0
        %862 = vmatpush.bf16.msra.mxu0 %v834
        %863 = vmatpush.bf16.msra.mxu0 %v816
        %864 = vmatmul.bf16.gmra.mxu0 %v828
        %v865 = vpop.f32.mrf.mxu0
        %v866 = vadd.f32 0.0, %v865
        %v867 = vpop.f32.mrf.mxu0
        %v868 = vadd.f32 0.0, %v867
        %869 = vdwg.mxu0
        %870 = vmatpush.bf16.msra.mxu0 0
        %871 = vmatpush.bf16.msra.mxu0 0
        %872 = vmatpush.bf16.msra.mxu0 0
        %873 = vmatpush.bf16.msra.mxu0 0
        %874 = vmatpush.bf16.msra.mxu0 0
        %875 = vmatpush.bf16.msra.mxu0 0
        %876 = vmatpush.bf16.msra.mxu0 %v837
        %877 = vmatpush.bf16.msra.mxu0 %v817
        %878 = vmatmul.bf16.gmra.mxu0 %v828
        %v879 = vpop.f32.mrf.mxu0
        %v880 = vadd.f32 0.0, %v879
        %v881 = vpop.f32.mrf.mxu0
        %v882 = vadd.f32 0.0, %v881
        %883 = vdwg.mxu0
        %884 = vmatpush.bf16.msra.mxu0 0
        %885 = vmatpush.bf16.msra.mxu0 0
        %886 = vmatpush.bf16.msra.mxu0 0
        %887 = vmatpush.bf16.msra.mxu0 0
        %888 = vmatpush.bf16.msra.mxu0 0
        %889 = vmatpush.bf16.msra.mxu0 0
        %890 = vmatpush.bf16.msra.mxu0 %v840
        %891 = vmatpush.bf16.msra.mxu0 %v818
        %892 = vmatmul.bf16.gmra.mxu0 %v828
        %v893 = vpop.f32.mrf.mxu0
        %v894 = vadd.f32 0.0, %v893
        %v895 = vpop.f32.mrf.mxu0
        %v896 = vadd.f32 0.0, %v895
        %897 = vdwg.mxu0
        %v898 = vadd.f32 %v736, %v852
        %v899 = vadd.f32 %v750, %v866
        %v900 = vadd.f32 %v764, %v880
        %v901 = vadd.f32 %v778, %v894
        %v902 = vadd.f32 %v738, %v854
        %v903 = vadd.f32 %v752, %v868
        %v904 = vadd.f32 %v766, %v882
        %v905 = vadd.f32 %v780, %v896
        %v906 = vld [vmem:[#allocation10] sm:$0xf]
        %v908 = vperm.slane %v906, 0
        %v909 = vperm.slane %v906, 1
        %v910 = vperm.slane %v906, 2
        %v911 = vperm.slane %v906, 3
        %v916 = vadd.f32 %v898, %v908
        %v917 = vadd.f32 %v899, %v909
        %v918 = vadd.f32 %v900, %v910
        %v919 = vadd.f32 %v901, %v911
        %v920 = vadd.f32 %v902, %v908
        %v921 = vadd.f32 %v903, %v909
        %v922 = vadd.f32 %v904, %v910
        %v923 = vadd.f32 %v905, %v911
        %v924 = vmax.f32 %v916, 0.0
        %v925 = vmax.f32 %v917, 0.0
        %v926 = vmax.f32 %v918, 0.0
        %v927 = vmax.f32 %v919, 0.0
        %v928 = vmax.f32 %v920, 0.0
        %v929 = vmax.f32 %v921, 0.0
        %v930 = vmax.f32 %v922, 0.0
        %v931 = vmax.f32 %v923, 0.0
        %934 = vrot.lane.b32.xlu0 %v924, 64
        %v935 = vpop.permute.xlu0 %934
        %936 = vrot.lane.b32.xlu0 %v928, 64
        %v937 = vpop.permute.xlu0 %936
        %942 = vrot.lane.b32.xlu0 %v925, 64
        %v943 = vpop.permute.xlu0 %942
        %944 = vrot.lane.b32.xlu0 %v929, 64
        %v945 = vpop.permute.xlu0 %944
        %950 = vrot.lane.b32.xlu0 %v926, 64
        %v951 = vpop.permute.xlu0 %950
        %952 = vrot.lane.b32.xlu0 %v930, 64
        %v953 = vpop.permute.xlu0 %952
        %958 = vrot.lane.b32.xlu0 %v927, 64
        %v959 = vpop.permute.xlu0 %958
        %960 = vrot.lane.b32.xlu0 %v931, 64
        %v961 = vpop.permute.xlu0 %960
        %v964 = vrot.slane %v925, 4
        %vm965 = vcmask 1047556
        %v966 = vsel %vm965, %v964, %v924
        %v967 = vrot.slane %v924, 4
        %v968 = vsel %vm965, %v925, %v967
        %v970 = vunpack.c.l.s4 1983009808
        %v971 = vunpack.c.0.s8 %v970
        %v972 = vperm.slane %v966, %v971
        %v974 = vunpack.c.l.s4 1983009808
        %v975 = vunpack.c.0.s8 %v974
        %v976 = vperm.slane %v968, %v975
        %v977 = vrot.slane %v943, 4
        %v978 = vsel %vm965, %v977, %v935
        %v979 = vrot.slane %v935, 4
        %v980 = vsel %vm965, %v943, %v979
        %v982 = vunpack.c.l.s4 1983009808
        %v983 = vunpack.c.0.s8 %v982
        %v984 = vperm.slane %v978, %v983
        %v986 = vunpack.c.l.s4 1983009808
        %v987 = vunpack.c.0.s8 %v986
        %v988 = vperm.slane %v980, %v987
        %v989 = vrot.slane %v927, 4
        %v990 = vsel %vm965, %v989, %v926
        %v991 = vrot.slane %v926, 4
        %v992 = vsel %vm965, %v927, %v991
        %v994 = vunpack.c.l.s4 1983009808
        %v995 = vunpack.c.0.s8 %v994
        %v996 = vperm.slane %v990, %v995
        %v998 = vunpack.c.l.s4 1983009808
        %v999 = vunpack.c.0.s8 %v998
        %v1000 = vperm.slane %v992, %v999
        %v1001 = vrot.slane %v959, 4
        %v1002 = vsel %vm965, %v1001, %v951
        %v1003 = vrot.slane %v951, 4
        %v1004 = vsel %vm965, %v959, %v1003
        %v1006 = vunpack.c.l.s4 1983009808
        %v1007 = vunpack.c.0.s8 %v1006
        %v1008 = vperm.slane %v1002, %v1007
        %v1010 = vunpack.c.l.s4 1983009808
        %v1011 = vunpack.c.0.s8 %v1010
        %v1012 = vperm.slane %v1004, %v1011
        %v1013 = vrot.slane %v984, 4
        %v1014 = vsel %vm965, %v1013, %v972
        %v1015 = vrot.slane %v972, 4
        %v1016 = vsel %vm965, %v984, %v1015
        %v1018 = vunpack.c.l.s4 1934713408
        %v1019 = vunpack.c.0.s8 %v1018
        %v1020 = vperm.slane %v1014, %v1019
        %v1022 = vunpack.c.l.s4 1934713408
        %v1023 = vunpack.c.0.s8 %v1022
        %v1024 = vperm.slane %v1016, %v1023
        %v1025 = vrot.slane %v988, 4
        %v1026 = vsel %vm965, %v1025, %v976
        %v1027 = vrot.slane %v976, 4
        %v1028 = vsel %vm965, %v988, %v1027
        %v1030 = vunpack.c.l.s4 1934713408
        %v1031 = vunpack.c.0.s8 %v1030
        %v1032 = vperm.slane %v1026, %v1031
        %v1034 = vunpack.c.l.s4 1934713408
        %v1035 = vunpack.c.0.s8 %v1034
        %v1036 = vperm.slane %v1028, %v1035
        %v1037 = vrot.slane %v1008, 4
        %v1038 = vsel %vm965, %v1037, %v996
        %v1039 = vrot.slane %v996, 4
        %v1040 = vsel %vm965, %v1008, %v1039
        %v1042 = vunpack.c.l.s4 1934713408
        %v1043 = vunpack.c.0.s8 %v1042
        %v1044 = vperm.slane %v1038, %v1043
        %v1046 = vunpack.c.l.s4 1934713408
        %v1047 = vunpack.c.0.s8 %v1046
        %v1048 = vperm.slane %v1040, %v1047
        %v1049 = vrot.slane %v1012, 4
        %v1050 = vsel %vm965, %v1049, %v1000
        %v1051 = vrot.slane %v1000, 4
        %v1052 = vsel %vm965, %v1012, %v1051
        %v1054 = vunpack.c.l.s4 1934713408
        %v1055 = vunpack.c.0.s8 %v1054
        %v1056 = vperm.slane %v1050, %v1055
        %v1058 = vunpack.c.l.s4 1934713408
        %v1059 = vunpack.c.0.s8 %v1058
        %v1060 = vperm.slane %v1052, %v1059
        %v1061 = vrot.slane %v1044, 4
        %v1062 = vsel %vm965, %v1061, %v1020
        %v1063 = vrot.slane %v1020, 4
        %v1064 = vsel %vm965, %v1044, %v1063
        %v1065 = vrot.slane %v1048, 4
        %v1066 = vsel %vm965, %v1065, %v1024
        %v1067 = vrot.slane %v1024, 4
        %v1068 = vsel %vm965, %v1048, %v1067
        %v1069 = vrot.slane %v1056, 4
        %v1070 = vsel %vm965, %v1069, %v1032
        %v1071 = vrot.slane %v1032, 4
        %v1072 = vsel %vm965, %v1056, %v1071
        %v1073 = vrot.slane %v1060, 4
        %v1074 = vsel %vm965, %v1073, %v1036
        %v1075 = vrot.slane %v1036, 4
        %v1076 = vsel %vm965, %v1060, %v1075
        %v1077 = vrot.slane %v929, 4
        %v1078 = vsel %vm965, %v1077, %v928
        %v1079 = vrot.slane %v928, 4
        %v1080 = vsel %vm965, %v929, %v1079
        %v1082 = vunpack.c.l.s4 1983009808
        %v1083 = vunpack.c.0.s8 %v1082
        %v1084 = vperm.slane %v1078, %v1083
        %v1086 = vunpack.c.l.s4 1983009808
        %v1087 = vunpack.c.0.s8 %v1086
        %v1088 = vperm.slane %v1080, %v1087
        %v1089 = vrot.slane %v945, 4
        %v1090 = vsel %vm965, %v1089, %v937
        %v1091 = vrot.slane %v937, 4
        %v1092 = vsel %vm965, %v945, %v1091
        %v1094 = vunpack.c.l.s4 1983009808
        %v1095 = vunpack.c.0.s8 %v1094
        %v1096 = vperm.slane %v1090, %v1095
        %v1098 = vunpack.c.l.s4 1983009808
        %v1099 = vunpack.c.0.s8 %v1098
        %v1100 = vperm.slane %v1092, %v1099
        %v1101 = vrot.slane %v931, 4
        %v1102 = vsel %vm965, %v1101, %v930
        %v1103 = vrot.slane %v930, 4
        %v1104 = vsel %vm965, %v931, %v1103
        %v1106 = vunpack.c.l.s4 1983009808
        %v1107 = vunpack.c.0.s8 %v1106
        %v1108 = vperm.slane %v1102, %v1107
        %v1110 = vunpack.c.l.s4 1983009808
        %v1111 = vunpack.c.0.s8 %v1110
        %v1112 = vperm.slane %v1104, %v1111
        %v1113 = vrot.slane %v961, 4
        %v1114 = vsel %vm965, %v1113, %v953
        %v1115 = vrot.slane %v953, 4
        %v1116 = vsel %vm965, %v961, %v1115
        %v1118 = vunpack.c.l.s4 1983009808
        %v1119 = vunpack.c.0.s8 %v1118
        %v1120 = vperm.slane %v1114, %v1119
        %v1122 = vunpack.c.l.s4 1983009808
        %v1123 = vunpack.c.0.s8 %v1122
        %v1124 = vperm.slane %v1116, %v1123
        %v1125 = vrot.slane %v1096, 4
        %v1126 = vsel %vm965, %v1125, %v1084
        %v1127 = vrot.slane %v1084, 4
        %v1128 = vsel %vm965, %v1096, %v1127
        %v1130 = vunpack.c.l.s4 1934713408
        %v1131 = vunpack.c.0.s8 %v1130
        %v1132 = vperm.slane %v1126, %v1131
        %v1134 = vunpack.c.l.s4 1934713408
        %v1135 = vunpack.c.0.s8 %v1134
        %v1136 = vperm.slane %v1128, %v1135
        %v1137 = vrot.slane %v1100, 4
        %v1138 = vsel %vm965, %v1137, %v1088
        %v1139 = vrot.slane %v1088, 4
        %v1140 = vsel %vm965, %v1100, %v1139
        %v1142 = vunpack.c.l.s4 1934713408
        %v1143 = vunpack.c.0.s8 %v1142
        %v1144 = vperm.slane %v1138, %v1143
        %v1146 = vunpack.c.l.s4 1934713408
        %v1147 = vunpack.c.0.s8 %v1146
        %v1148 = vperm.slane %v1140, %v1147
        %v1149 = vrot.slane %v1120, 4
        %v1150 = vsel %vm965, %v1149, %v1108
        %v1151 = vrot.slane %v1108, 4
        %v1152 = vsel %vm965, %v1120, %v1151
        %v1154 = vunpack.c.l.s4 1934713408
        %v1155 = vunpack.c.0.s8 %v1154
        %v1156 = vperm.slane %v1150, %v1155
        %v1158 = vunpack.c.l.s4 1934713408
        %v1159 = vunpack.c.0.s8 %v1158
        %v1160 = vperm.slane %v1152, %v1159
        %v1161 = vrot.slane %v1124, 4
        %v1162 = vsel %vm965, %v1161, %v1112
        %v1163 = vrot.slane %v1112, 4
        %v1164 = vsel %vm965, %v1124, %v1163
        %v1166 = vunpack.c.l.s4 1934713408
        %v1167 = vunpack.c.0.s8 %v1166
        %v1168 = vperm.slane %v1162, %v1167
        %v1170 = vunpack.c.l.s4 1934713408
        %v1171 = vunpack.c.0.s8 %v1170
        %v1172 = vperm.slane %v1164, %v1171
        %v1173 = vrot.slane %v1156, 4
        %v1174 = vsel %vm965, %v1173, %v1132
        %v1175 = vrot.slane %v1132, 4
        %v1176 = vsel %vm965, %v1156, %v1175
        %v1177 = vrot.slane %v1160, 4
        %v1178 = vsel %vm965, %v1177, %v1136
        %v1179 = vrot.slane %v1136, 4
        %v1180 = vsel %vm965, %v1160, %v1179
        %v1181 = vrot.slane %v1168, 4
        %v1182 = vsel %vm965, %v1181, %v1144
        %v1183 = vrot.slane %v1144, 4
        %v1184 = vsel %vm965, %v1168, %v1183
        %v1185 = vrot.slane %v1172, 4
        %v1186 = vsel %vm965, %v1185, %v1148
        %v1187 = vrot.slane %v1148, 4
        %v1188 = vsel %vm965, %v1172, %v1187
        %1205 = vrot.lane.b32.xlu0 %v1062, 96
        %v1206 = vpop.permute.xlu0 %1205
        %1207 = vrot.lane.b32.xlu0 %v1064, 96
        %v1208 = vpop.permute.xlu0 %1207
        %1209 = vrot.lane.b32.xlu0 %v1066, 96
        %v1210 = vpop.permute.xlu0 %1209
        %1211 = vrot.lane.b32.xlu0 %v1068, 96
        %v1212 = vpop.permute.xlu0 %1211
        %1213 = vrot.lane.b32.xlu0 %v1070, 96
        %v1214 = vpop.permute.xlu0 %1213
        %1215 = vrot.lane.b32.xlu0 %v1072, 96
        %v1216 = vpop.permute.xlu0 %1215
        %1217 = vrot.lane.b32.xlu0 %v1074, 96
        %v1218 = vpop.permute.xlu0 %1217
        %1219 = vrot.lane.b32.xlu0 %v1076, 96
        %v1220 = vpop.permute.xlu0 %1219
        %1221 = vrot.lane.b32.xlu0 %v1174, 96
        %v1222 = vpop.permute.xlu0 %1221
        %1223 = vrot.lane.b32.xlu0 %v1176, 96
        %v1224 = vpop.permute.xlu0 %1223
        %1225 = vrot.lane.b32.xlu0 %v1178, 96
        %v1226 = vpop.permute.xlu0 %1225
        %1227 = vrot.lane.b32.xlu0 %v1180, 96
        %v1228 = vpop.permute.xlu0 %1227
        %1229 = vrot.lane.b32.xlu0 %v1182, 96
        %v1230 = vpop.permute.xlu0 %1229
        %1231 = vrot.lane.b32.xlu0 %v1184, 96
        %v1232 = vpop.permute.xlu0 %1231
        %1233 = vrot.lane.b32.xlu0 %v1186, 96
        %v1234 = vpop.permute.xlu0 %1233
        %1235 = vrot.lane.b32.xlu0 %v1188, 96
        %v1236 = vpop.permute.xlu0 %1235
        %v1253 = vmax.f32 %v1062, %v1206
        %v1254 = vmax.f32 %v1064, %v1208
        %v1255 = vmax.f32 %v1066, %v1210
        %v1256 = vmax.f32 %v1068, %v1212
        %v1257 = vmax.f32 %v1070, %v1214
        %v1258 = vmax.f32 %v1072, %v1216
        %v1259 = vmax.f32 %v1074, %v1218
        %v1260 = vmax.f32 %v1076, %v1220
        %v1261 = vmax.f32 %v1174, %v1222
        %v1262 = vmax.f32 %v1176, %v1224
        %v1263 = vmax.f32 %v1178, %v1226
        %v1264 = vmax.f32 %v1180, %v1228
        %v1265 = vmax.f32 %v1182, %v1230
        %v1266 = vmax.f32 %v1184, %v1232
        %v1267 = vmax.f32 %v1186, %v1234
        %v1268 = vmax.f32 %v1188, %v1236
        %v1269 = vrot.slane %v1253, 4
        %v1270 = vsel %vm965, 0.0, %v1269
        %v1272 = vunpack.c.l.s4 1983009808
        %v1273 = vunpack.c.0.s8 %v1272
        %v1274 = vperm.slane %v1253, %v1273
        %v1276 = vunpack.c.l.s4 1983009808
        %v1277 = vunpack.c.0.s8 %v1276
        %v1278 = vperm.slane %v1270, %v1277
        %v1279 = vrot.slane %v1254, 4
        %v1280 = vsel %vm965, 0.0, %v1279
        %v1282 = vunpack.c.l.s4 1983009808
        %v1283 = vunpack.c.0.s8 %v1282
        %v1284 = vperm.slane %v1254, %v1283
        %v1286 = vunpack.c.l.s4 1983009808
        %v1287 = vunpack.c.0.s8 %v1286
        %v1288 = vperm.slane %v1280, %v1287
        %v1289 = vrot.slane %v1284, 4
        %v1290 = vsel %vm965, %v1289, %v1274
        %v1291 = vrot.slane %v1274, 4
        %v1292 = vsel %vm965, %v1284, %v1291
        %v1294 = vunpack.c.l.s4 1934713408
        %v1295 = vunpack.c.0.s8 %v1294
        %v1296 = vperm.slane %v1290, %v1295
        %v1298 = vunpack.c.l.s4 1934713408
        %v1299 = vunpack.c.0.s8 %v1298
        %v1300 = vperm.slane %v1292, %v1299
        %v1301 = vrot.slane %v1288, 4
        %v1302 = vsel %vm965, %v1301, %v1278
        %v1303 = vrot.slane %v1278, 4
        %v1304 = vsel %vm965, %v1288, %v1303
        %v1306 = vunpack.c.l.s4 1934713408
        %v1307 = vunpack.c.0.s8 %v1306
        %v1308 = vperm.slane %v1302, %v1307
        %v1310 = vunpack.c.l.s4 1934713408
        %v1311 = vunpack.c.0.s8 %v1310
        %v1312 = vperm.slane %v1304, %v1311
        %v1313 = vrot.slane %v1296, 4
        %v1314 = vsel %vm965, 0.0, %v1313
        %v1315 = vrot.slane %v1300, 4
        %v1316 = vsel %vm965, 0.0, %v1315
        %v1317 = vrot.slane %v1308, 4
        %v1318 = vsel %vm965, 0.0, %v1317
        %v1319 = vrot.slane %v1312, 4
        %v1320 = vsel %vm965, 0.0, %v1319
        %v1321 = vrot.slane %v1255, 4
        %v1322 = vsel %vm965, 0.0, %v1321
        %v1324 = vunpack.c.l.s4 1983009808
        %v1325 = vunpack.c.0.s8 %v1324
        %v1326 = vperm.slane %v1255, %v1325
        %v1328 = vunpack.c.l.s4 1983009808
        %v1329 = vunpack.c.0.s8 %v1328
        %v1330 = vperm.slane %v1322, %v1329
        %v1331 = vrot.slane %v1256, 4
        %v1332 = vsel %vm965, 0.0, %v1331
        %v1334 = vunpack.c.l.s4 1983009808
        %v1335 = vunpack.c.0.s8 %v1334
        %v1336 = vperm.slane %v1256, %v1335
        %v1338 = vunpack.c.l.s4 1983009808
        %v1339 = vunpack.c.0.s8 %v1338
        %v1340 = vperm.slane %v1332, %v1339
        %v1341 = vrot.slane %v1336, 4
        %v1342 = vsel %vm965, %v1341, %v1326
        %v1343 = vrot.slane %v1326, 4
        %v1344 = vsel %vm965, %v1336, %v1343
        %v1346 = vunpack.c.l.s4 1934713408
        %v1347 = vunpack.c.0.s8 %v1346
        %v1348 = vperm.slane %v1342, %v1347
        %v1350 = vunpack.c.l.s4 1934713408
        %v1351 = vunpack.c.0.s8 %v1350
        %v1352 = vperm.slane %v1344, %v1351
        %v1353 = vrot.slane %v1340, 4
        %v1354 = vsel %vm965, %v1353, %v1330
        %v1355 = vrot.slane %v1330, 4
        %v1356 = vsel %vm965, %v1340, %v1355
        %v1358 = vunpack.c.l.s4 1934713408
        %v1359 = vunpack.c.0.s8 %v1358
        %v1360 = vperm.slane %v1354, %v1359
        %v1362 = vunpack.c.l.s4 1934713408
        %v1363 = vunpack.c.0.s8 %v1362
        %v1364 = vperm.slane %v1356, %v1363
        %v1365 = vrot.slane %v1348, 4
        %v1366 = vsel %vm965, 0.0, %v1365
        %v1367 = vrot.slane %v1352, 4
        %v1368 = vsel %vm965, 0.0, %v1367
        %v1369 = vrot.slane %v1360, 4
        %v1370 = vsel %vm965, 0.0, %v1369
        %v1371 = vrot.slane %v1364, 4
        %v1372 = vsel %vm965, 0.0, %v1371
        %v1373 = vrot.slane %v1257, 4
        %v1374 = vsel %vm965, 0.0, %v1373
        %v1376 = vunpack.c.l.s4 1983009808
        %v1377 = vunpack.c.0.s8 %v1376
        %v1378 = vperm.slane %v1257, %v1377
        %v1380 = vunpack.c.l.s4 1983009808
        %v1381 = vunpack.c.0.s8 %v1380
        %v1382 = vperm.slane %v1374, %v1381
        %v1383 = vrot.slane %v1258, 4
        %v1384 = vsel %vm965, 0.0, %v1383
        %v1386 = vunpack.c.l.s4 1983009808
        %v1387 = vunpack.c.0.s8 %v1386
        %v1388 = vperm.slane %v1258, %v1387
        %v1390 = vunpack.c.l.s4 1983009808
        %v1391 = vunpack.c.0.s8 %v1390
        %v1392 = vperm.slane %v1384, %v1391
        %v1393 = vrot.slane %v1388, 4
        %v1394 = vsel %vm965, %v1393, %v1378
        %v1395 = vrot.slane %v1378, 4
        %v1396 = vsel %vm965, %v1388, %v1395
        %v1398 = vunpack.c.l.s4 1934713408
        %v1399 = vunpack.c.0.s8 %v1398
        %v1400 = vperm.slane %v1394, %v1399
        %v1402 = vunpack.c.l.s4 1934713408
        %v1403 = vunpack.c.0.s8 %v1402
        %v1404 = vperm.slane %v1396, %v1403
        %v1405 = vrot.slane %v1392, 4
        %v1406 = vsel %vm965, %v1405, %v1382
        %v1407 = vrot.slane %v1382, 4
        %v1408 = vsel %vm965, %v1392, %v1407
        %v1410 = vunpack.c.l.s4 1934713408
        %v1411 = vunpack.c.0.s8 %v1410
        %v1412 = vperm.slane %v1406, %v1411
        %v1414 = vunpack.c.l.s4 1934713408
        %v1415 = vunpack.c.0.s8 %v1414
        %v1416 = vperm.slane %v1408, %v1415
        %v1417 = vrot.slane %v1400, 4
        %v1418 = vsel %vm965, 0.0, %v1417
        %v1419 = vrot.slane %v1404, 4
        %v1420 = vsel %vm965, 0.0, %v1419
        %v1421 = vrot.slane %v1412, 4
        %v1422 = vsel %vm965, 0.0, %v1421
        %v1423 = vrot.slane %v1416, 4
        %v1424 = vsel %vm965, 0.0, %v1423
        %v1425 = vrot.slane %v1259, 4
        %v1426 = vsel %vm965, 0.0, %v1425
        %v1428 = vunpack.c.l.s4 1983009808
        %v1429 = vunpack.c.0.s8 %v1428
        %v1430 = vperm.slane %v1259, %v1429
        %v1432 = vunpack.c.l.s4 1983009808
        %v1433 = vunpack.c.0.s8 %v1432
        %v1434 = vperm.slane %v1426, %v1433
        %v1435 = vrot.slane %v1260, 4
        %v1436 = vsel %vm965, 0.0, %v1435
        %v1438 = vunpack.c.l.s4 1983009808
        %v1439 = vunpack.c.0.s8 %v1438
        %v1440 = vperm.slane %v1260, %v1439
        %v1442 = vunpack.c.l.s4 1983009808
        %v1443 = vunpack.c.0.s8 %v1442
        %v1444 = vperm.slane %v1436, %v1443
        %v1445 = vrot.slane %v1440, 4
        %v1446 = vsel %vm965, %v1445, %v1430
        %v1447 = vrot.slane %v1430, 4
        %v1448 = vsel %vm965, %v1440, %v1447
        %v1450 = vunpack.c.l.s4 1934713408
        %v1451 = vunpack.c.0.s8 %v1450
        %v1452 = vperm.slane %v1446, %v1451
        %v1454 = vunpack.c.l.s4 1934713408
        %v1455 = vunpack.c.0.s8 %v1454
        %v1456 = vperm.slane %v1448, %v1455
        %v1457 = vrot.slane %v1444, 4
        %v1458 = vsel %vm965, %v1457, %v1434
        %v1459 = vrot.slane %v1434, 4
        %v1460 = vsel %vm965, %v1444, %v1459
        %v1462 = vunpack.c.l.s4 1934713408
        %v1463 = vunpack.c.0.s8 %v1462
        %v1464 = vperm.slane %v1458, %v1463
        %v1466 = vunpack.c.l.s4 1934713408
        %v1467 = vunpack.c.0.s8 %v1466
        %v1468 = vperm.slane %v1460, %v1467
        %v1469 = vrot.slane %v1452, 4
        %v1470 = vsel %vm965, 0.0, %v1469
        %v1471 = vrot.slane %v1456, 4
        %v1472 = vsel %vm965, 0.0, %v1471
        %v1473 = vrot.slane %v1464, 4
        %v1474 = vsel %vm965, 0.0, %v1473
        %v1475 = vrot.slane %v1468, 4
        %v1476 = vsel %vm965, 0.0, %v1475
        %v1477 = vrot.slane %v1261, 4
        %v1478 = vsel %vm965, 0.0, %v1477
        %v1480 = vunpack.c.l.s4 1983009808
        %v1481 = vunpack.c.0.s8 %v1480
        %v1482 = vperm.slane %v1261, %v1481
        %v1484 = vunpack.c.l.s4 1983009808
        %v1485 = vunpack.c.0.s8 %v1484
        %v1486 = vperm.slane %v1478, %v1485
        %v1487 = vrot.slane %v1262, 4
        %v1488 = vsel %vm965, 0.0, %v1487
        %v1490 = vunpack.c.l.s4 1983009808
        %v1491 = vunpack.c.0.s8 %v1490
        %v1492 = vperm.slane %v1262, %v1491
        %v1494 = vunpack.c.l.s4 1983009808
        %v1495 = vunpack.c.0.s8 %v1494
        %v1496 = vperm.slane %v1488, %v1495
        %v1497 = vrot.slane %v1492, 4
        %v1498 = vsel %vm965, %v1497, %v1482
        %v1499 = vrot.slane %v1482, 4
        %v1500 = vsel %vm965, %v1492, %v1499
        %v1502 = vunpack.c.l.s4 1934713408
        %v1503 = vunpack.c.0.s8 %v1502
        %v1504 = vperm.slane %v1498, %v1503
        %v1506 = vunpack.c.l.s4 1934713408
        %v1507 = vunpack.c.0.s8 %v1506
        %v1508 = vperm.slane %v1500, %v1507
        %v1509 = vrot.slane %v1496, 4
        %v1510 = vsel %vm965, %v1509, %v1486
        %v1511 = vrot.slane %v1486, 4
        %v1512 = vsel %vm965, %v1496, %v1511
        %v1514 = vunpack.c.l.s4 1934713408
        %v1515 = vunpack.c.0.s8 %v1514
        %v1516 = vperm.slane %v1510, %v1515
        %v1518 = vunpack.c.l.s4 1934713408
        %v1519 = vunpack.c.0.s8 %v1518
        %v1520 = vperm.slane %v1512, %v1519
        %v1521 = vrot.slane %v1504, 4
        %v1522 = vsel %vm965, 0.0, %v1521
        %v1523 = vrot.slane %v1508, 4
        %v1524 = vsel %vm965, 0.0, %v1523
        %v1525 = vrot.slane %v1516, 4
        %v1526 = vsel %vm965, 0.0, %v1525
        %v1527 = vrot.slane %v1520, 4
        %v1528 = vsel %vm965, 0.0, %v1527
        %v1529 = vrot.slane %v1263, 4
        %v1530 = vsel %vm965, 0.0, %v1529
        %v1532 = vunpack.c.l.s4 1983009808
        %v1533 = vunpack.c.0.s8 %v1532
        %v1534 = vperm.slane %v1263, %v1533
        %v1536 = vunpack.c.l.s4 1983009808
        %v1537 = vunpack.c.0.s8 %v1536
        %v1538 = vperm.slane %v1530, %v1537
        %v1539 = vrot.slane %v1264, 4
        %v1540 = vsel %vm965, 0.0, %v1539
        %v1542 = vunpack.c.l.s4 1983009808
        %v1543 = vunpack.c.0.s8 %v1542
        %v1544 = vperm.slane %v1264, %v1543
        %v1546 = vunpack.c.l.s4 1983009808
        %v1547 = vunpack.c.0.s8 %v1546
        %v1548 = vperm.slane %v1540, %v1547
        %v1549 = vrot.slane %v1544, 4
        %v1550 = vsel %vm965, %v1549, %v1534
        %v1551 = vrot.slane %v1534, 4
        %v1552 = vsel %vm965, %v1544, %v1551
        %v1554 = vunpack.c.l.s4 1934713408
        %v1555 = vunpack.c.0.s8 %v1554
        %v1556 = vperm.slane %v1550, %v1555
        %v1558 = vunpack.c.l.s4 1934713408
        %v1559 = vunpack.c.0.s8 %v1558
        %v1560 = vperm.slane %v1552, %v1559
        %v1561 = vrot.slane %v1548, 4
        %v1562 = vsel %vm965, %v1561, %v1538
        %v1563 = vrot.slane %v1538, 4
        %v1564 = vsel %vm965, %v1548, %v1563
        %v1566 = vunpack.c.l.s4 1934713408
        %v1567 = vunpack.c.0.s8 %v1566
        %v1568 = vperm.slane %v1562, %v1567
        %v1570 = vunpack.c.l.s4 1934713408
        %v1571 = vunpack.c.0.s8 %v1570
        %v1572 = vperm.slane %v1564, %v1571
        %v1573 = vrot.slane %v1556, 4
        %v1574 = vsel %vm965, 0.0, %v1573
        %v1575 = vrot.slane %v1560, 4
        %v1576 = vsel %vm965, 0.0, %v1575
        %v1577 = vrot.slane %v1568, 4
        %v1578 = vsel %vm965, 0.0, %v1577
        %v1579 = vrot.slane %v1572, 4
        %v1580 = vsel %vm965, 0.0, %v1579
        %v1581 = vrot.slane %v1265, 4
        %v1582 = vsel %vm965, 0.0, %v1581
        %v1584 = vunpack.c.l.s4 1983009808
        %v1585 = vunpack.c.0.s8 %v1584
        %v1586 = vperm.slane %v1265, %v1585
        %v1588 = vunpack.c.l.s4 1983009808
        %v1589 = vunpack.c.0.s8 %v1588
        %v1590 = vperm.slane %v1582, %v1589
        %v1591 = vrot.slane %v1266, 4
        %v1592 = vsel %vm965, 0.0, %v1591
        %v1594 = vunpack.c.l.s4 1983009808
        %v1595 = vunpack.c.0.s8 %v1594
        %v1596 = vperm.slane %v1266, %v1595
        %v1598 = vunpack.c.l.s4 1983009808
        %v1599 = vunpack.c.0.s8 %v1598
        %v1600 = vperm.slane %v1592, %v1599
        %v1601 = vrot.slane %v1596, 4
        %v1602 = vsel %vm965, %v1601, %v1586
        %v1603 = vrot.slane %v1586, 4
        %v1604 = vsel %vm965, %v1596, %v1603
        %v1606 = vunpack.c.l.s4 1934713408
        %v1607 = vunpack.c.0.s8 %v1606
        %v1608 = vperm.slane %v1602, %v1607
        %v1610 = vunpack.c.l.s4 1934713408
        %v1611 = vunpack.c.0.s8 %v1610
        %v1612 = vperm.slane %v1604, %v1611
        %v1613 = vrot.slane %v1600, 4
        %v1614 = vsel %vm965, %v1613, %v1590
        %v1615 = vrot.slane %v1590, 4
        %v1616 = vsel %vm965, %v1600, %v1615
        %v1618 = vunpack.c.l.s4 1934713408
        %v1619 = vunpack.c.0.s8 %v1618
        %v1620 = vperm.slane %v1614, %v1619
        %v1622 = vunpack.c.l.s4 1934713408
        %v1623 = vunpack.c.0.s8 %v1622
        %v1624 = vperm.slane %v1616, %v1623
        %v1625 = vrot.slane %v1608, 4
        %v1626 = vsel %vm965, 0.0, %v1625
        %v1627 = vrot.slane %v1612, 4
        %v1628 = vsel %vm965, 0.0, %v1627
        %v1629 = vrot.slane %v1620, 4
        %v1630 = vsel %vm965, 0.0, %v1629
        %v1631 = vrot.slane %v1624, 4
        %v1632 = vsel %vm965, 0.0, %v1631
        %v1633 = vrot.slane %v1267, 4
        %v1634 = vsel %vm965, 0.0, %v1633
        %v1636 = vunpack.c.l.s4 1983009808
        %v1637 = vunpack.c.0.s8 %v1636
        %v1638 = vperm.slane %v1267, %v1637
        %v1640 = vunpack.c.l.s4 1983009808
        %v1641 = vunpack.c.0.s8 %v1640
        %v1642 = vperm.slane %v1634, %v1641
        %v1643 = vrot.slane %v1268, 4
        %v1644 = vsel %vm965, 0.0, %v1643
        %v1646 = vunpack.c.l.s4 1983009808
        %v1647 = vunpack.c.0.s8 %v1646
        %v1648 = vperm.slane %v1268, %v1647
        %v1650 = vunpack.c.l.s4 1983009808
        %v1651 = vunpack.c.0.s8 %v1650
        %v1652 = vperm.slane %v1644, %v1651
        %v1653 = vrot.slane %v1648, 4
        %v1654 = vsel %vm965, %v1653, %v1638
        %v1655 = vrot.slane %v1638, 4
        %v1656 = vsel %vm965, %v1648, %v1655
        %v1658 = vunpack.c.l.s4 1934713408
        %v1659 = vunpack.c.0.s8 %v1658
        %v1660 = vperm.slane %v1654, %v1659
        %v1662 = vunpack.c.l.s4 1934713408
        %v1663 = vunpack.c.0.s8 %v1662
        %v1664 = vperm.slane %v1656, %v1663
        %v1665 = vrot.slane %v1652, 4
        %v1666 = vsel %vm965, %v1665, %v1642
        %v1667 = vrot.slane %v1642, 4
        %v1668 = vsel %vm965, %v1652, %v1667
        %v1670 = vunpack.c.l.s4 1934713408
        %v1671 = vunpack.c.0.s8 %v1670
        %v1672 = vperm.slane %v1666, %v1671
        %v1674 = vunpack.c.l.s4 1934713408
        %v1675 = vunpack.c.0.s8 %v1674
        %v1676 = vperm.slane %v1668, %v1675
        %v1677 = vrot.slane %v1660, 4
        %v1678 = vsel %vm965, 0.0, %v1677
        %v1679 = vrot.slane %v1664, 4
        %v1680 = vsel %vm965, 0.0, %v1679
        %v1681 = vrot.slane %v1672, 4
        %v1682 = vsel %vm965, 0.0, %v1681
        %v1683 = vrot.slane %v1676, 4
        %v1684 = vsel %vm965, 0.0, %v1683
        %1693 = vrot.lane.b32.xlu0 %v1314, 32
        %v1694 = vpop.permute.xlu0 %1693
        %1695 = vrot.lane.b32.xlu0 %v1366, 32
        %v1696 = vpop.permute.xlu0 %1695
        %1697 = vrot.lane.b32.xlu0 %v1418, 32
        %v1698 = vpop.permute.xlu0 %1697
        %1699 = vrot.lane.b32.xlu0 %v1470, 32
        %v1700 = vpop.permute.xlu0 %1699
        %1701 = vrot.lane.b32.xlu0 %v1522, 32
        %v1702 = vpop.permute.xlu0 %1701
        %1703 = vrot.lane.b32.xlu0 %v1574, 32
        %v1704 = vpop.permute.xlu0 %1703
        %1705 = vrot.lane.b32.xlu0 %v1626, 32
        %v1706 = vpop.permute.xlu0 %1705
        %1707 = vrot.lane.b32.xlu0 %v1678, 32
        %v1708 = vpop.permute.xlu0 %1707
        %1725 = vrot.lane.b32.xlu0 %v1300, 64
        %v1726 = vpop.permute.xlu0 %1725
        %1727 = vrot.lane.b32.xlu0 %v1352, 64
        %v1728 = vpop.permute.xlu0 %1727
        %1729 = vrot.lane.b32.xlu0 %v1404, 64
        %v1730 = vpop.permute.xlu0 %1729
        %1731 = vrot.lane.b32.xlu0 %v1456, 64
        %v1732 = vpop.permute.xlu0 %1731
        %1733 = vrot.lane.b32.xlu0 %v1508, 64
        %v1734 = vpop.permute.xlu0 %1733
        %1735 = vrot.lane.b32.xlu0 %v1560, 64
        %v1736 = vpop.permute.xlu0 %1735
        %1737 = vrot.lane.b32.xlu0 %v1612, 64
        %v1738 = vpop.permute.xlu0 %1737
        %1739 = vrot.lane.b32.xlu0 %v1664, 64
        %v1740 = vpop.permute.xlu0 %1739
        %1757 = vrot.lane.b32.xlu0 %v1316, 96
        %v1758 = vpop.permute.xlu0 %1757
        %1759 = vrot.lane.b32.xlu0 %v1368, 96
        %v1760 = vpop.permute.xlu0 %1759
        %1761 = vrot.lane.b32.xlu0 %v1420, 96
        %v1762 = vpop.permute.xlu0 %1761
        %1763 = vrot.lane.b32.xlu0 %v1472, 96
        %v1764 = vpop.permute.xlu0 %1763
        %1765 = vrot.lane.b32.xlu0 %v1524, 96
        %v1766 = vpop.permute.xlu0 %1765
        %1767 = vrot.lane.b32.xlu0 %v1576, 96
        %v1768 = vpop.permute.xlu0 %1767
        %1769 = vrot.lane.b32.xlu0 %v1628, 96
        %v1770 = vpop.permute.xlu0 %1769
        %1771 = vrot.lane.b32.xlu0 %v1680, 96
        %v1772 = vpop.permute.xlu0 %1771
        %1789 = vrot.lane.b32.xlu0 %v1318, 32
        %v1790 = vpop.permute.xlu0 %1789
        %1791 = vrot.lane.b32.xlu0 %v1370, 32
        %v1792 = vpop.permute.xlu0 %1791
        %1793 = vrot.lane.b32.xlu0 %v1422, 32
        %v1794 = vpop.permute.xlu0 %1793
        %1795 = vrot.lane.b32.xlu0 %v1474, 32
        %v1796 = vpop.permute.xlu0 %1795
        %1797 = vrot.lane.b32.xlu0 %v1526, 32
        %v1798 = vpop.permute.xlu0 %1797
        %1799 = vrot.lane.b32.xlu0 %v1578, 32
        %v1800 = vpop.permute.xlu0 %1799
        %1801 = vrot.lane.b32.xlu0 %v1630, 32
        %v1802 = vpop.permute.xlu0 %1801
        %1803 = vrot.lane.b32.xlu0 %v1682, 32
        %v1804 = vpop.permute.xlu0 %1803
        %1821 = vrot.lane.b32.xlu0 %v1312, 64
        %v1822 = vpop.permute.xlu0 %1821
        %1823 = vrot.lane.b32.xlu0 %v1364, 64
        %v1824 = vpop.permute.xlu0 %1823
        %1825 = vrot.lane.b32.xlu0 %v1416, 64
        %v1826 = vpop.permute.xlu0 %1825
        %1827 = vrot.lane.b32.xlu0 %v1468, 64
        %v1828 = vpop.permute.xlu0 %1827
        %1829 = vrot.lane.b32.xlu0 %v1520, 64
        %v1830 = vpop.permute.xlu0 %1829
        %1831 = vrot.lane.b32.xlu0 %v1572, 64
        %v1832 = vpop.permute.xlu0 %1831
        %1833 = vrot.lane.b32.xlu0 %v1624, 64
        %v1834 = vpop.permute.xlu0 %1833
        %1835 = vrot.lane.b32.xlu0 %v1676, 64
        %v1836 = vpop.permute.xlu0 %1835
        %1853 = vrot.lane.b32.xlu0 %v1320, 96
        %v1854 = vpop.permute.xlu0 %1853
        %1855 = vrot.lane.b32.xlu0 %v1372, 96
        %v1856 = vpop.permute.xlu0 %1855
        %1857 = vrot.lane.b32.xlu0 %v1424, 96
        %v1858 = vpop.permute.xlu0 %1857
        %1859 = vrot.lane.b32.xlu0 %v1476, 96
        %v1860 = vpop.permute.xlu0 %1859
        %1861 = vrot.lane.b32.xlu0 %v1528, 96
        %v1862 = vpop.permute.xlu0 %1861
        %1863 = vrot.lane.b32.xlu0 %v1580, 96
        %v1864 = vpop.permute.xlu0 %1863
        %1865 = vrot.lane.b32.xlu0 %v1632, 96
        %v1866 = vpop.permute.xlu0 %1865
        %1867 = vrot.lane.b32.xlu0 %v1684, 96
        %v1868 = vpop.permute.xlu0 %1867
        %vm1877 = vcmask 261120
        %v1878 = vsel %vm1877, %v1296, %v1694
        %v1879 = vsel %vm1877, %v1348, %v1696
        %v1880 = vsel %vm1877, %v1400, %v1698
        %v1881 = vsel %vm1877, %v1452, %v1700
        %v1882 = vsel %vm1877, %v1504, %v1702
        %v1883 = vsel %vm1877, %v1556, %v1704
        %v1884 = vsel %vm1877, %v1608, %v1706
        %v1885 = vsel %vm1877, %v1660, %v1708
        %vm1886 = vcmask 523264
        %v1887 = vsel %vm1886, %v1878, %v1726
        %v1888 = vsel %vm1886, %v1879, %v1728
        %v1889 = vsel %vm1886, %v1880, %v1730
        %v1890 = vsel %vm1886, %v1881, %v1732
        %v1891 = vsel %vm1886, %v1882, %v1734
        %v1892 = vsel %vm1886, %v1883, %v1736
        %v1893 = vsel %vm1886, %v1884, %v1738
        %v1894 = vsel %vm1886, %v1885, %v1740
        %vm1895 = vcmask 785408
        %v1896 = vsel %vm1895, %v1887, %v1758
        %v1897 = vsel %vm1895, %v1888, %v1760
        %v1898 = vsel %vm1895, %v1889, %v1762
        %v1899 = vsel %vm1895, %v1890, %v1764
        %v1900 = vsel %vm1895, %v1891, %v1766
        %v1901 = vsel %vm1895, %v1892, %v1768
        %v1902 = vsel %vm1895, %v1893, %v1770
        %v1903 = vsel %vm1895, %v1894, %v1772
        %v1904 = vsel %vm1877, %v1308, %v1790
        %v1905 = vsel %vm1877, %v1360, %v1792
        %v1906 = vsel %vm1877, %v1412, %v1794
        %v1907 = vsel %vm1877, %v1464, %v1796
        %v1908 = vsel %vm1877, %v1516, %v1798
        %v1909 = vsel %vm1877, %v1568, %v1800
        %v1910 = vsel %vm1877, %v1620, %v1802
        %v1911 = vsel %vm1877, %v1672, %v1804
        %v1912 = vsel %vm1886, %v1904, %v1822
        %v1913 = vsel %vm1886, %v1905, %v1824
        %v1914 = vsel %vm1886, %v1906, %v1826
        %v1915 = vsel %vm1886, %v1907, %v1828
        %v1916 = vsel %vm1886, %v1908, %v1830
        %v1917 = vsel %vm1886, %v1909, %v1832
        %v1918 = vsel %vm1886, %v1910, %v1834
        %v1919 = vsel %vm1886, %v1911, %v1836
        %v1920 = vsel %vm1895, %v1912, %v1854
        %v1921 = vsel %vm1895, %v1913, %v1856
        %v1922 = vsel %vm1895, %v1914, %v1858
        %v1923 = vsel %vm1895, %v1915, %v1860
        %v1924 = vsel %vm1895, %v1916, %v1862
        %v1925 = vsel %vm1895, %v1917, %v1864
        %v1926 = vsel %vm1895, %v1918, %v1866
        %v1927 = vsel %vm1895, %v1919, %v1868
        %v1944 = vrot.slane %v1896, 1
        %v1945 = vrot.slane %v1920, 1
        %v1946 = vrot.slane %v1897, 1
        %v1947 = vrot.slane %v1921, 1
        %v1948 = vrot.slane %v1898, 1
        %v1949 = vrot.slane %v1922, 1
        %v1950 = vrot.slane %v1899, 1
        %v1951 = vrot.slane %v1923, 1
        %v1952 = vrot.slane %v1900, 1
        %v1953 = vrot.slane %v1924, 1
        %v1954 = vrot.slane %v1901, 1
        %v1955 = vrot.slane %v1925, 1
        %v1956 = vrot.slane %v1902, 1
        %v1957 = vrot.slane %v1926, 1
        %v1958 = vrot.slane %v1903, 1
        %v1959 = vrot.slane %v1927, 1
        %v1976 = vmax.f32 %v1896, %v1944
        %v1977 = vmax.f32 %v1920, %v1945
        %v1978 = vmax.f32 %v1897, %v1946
        %v1979 = vmax.f32 %v1921, %v1947
        %v1980 = vmax.f32 %v1898, %v1948
        %v1981 = vmax.f32 %v1922, %v1949
        %v1982 = vmax.f32 %v1899, %v1950
        %v1983 = vmax.f32 %v1923, %v1951
        %v1984 = vmax.f32 %v1900, %v1952
        %v1985 = vmax.f32 %v1924, %v1953
        %v1986 = vmax.f32 %v1901, %v1954
        %v1987 = vmax.f32 %v1925, %v1955
        %v1988 = vmax.f32 %v1902, %v1956
        %v1989 = vmax.f32 %v1926, %v1957
        %v1990 = vmax.f32 %v1903, %v1958
        %v1991 = vmax.f32 %v1927, %v1959
        %vm1992 = vcmask 1040384
        %vm1993 = vmand %vm1992, %vm478
        %vm1994 = vcmask 1044484
        %vm1995 = vsmask.f32 4352
        %vm1996 = vmand %vm1994, %vm1995
        %vm1997 = vmor %vm1996, %vm1993
        %v1998 = vld [vmem:[#allocation3] sm:$0x11]
        %v1999 = vsel %vm1997, 0, %v1998
        %2000 = vst [vmem:[#allocation3] sm:$0x11] %v1999
        %vm2001 = vcmask 516096
        %vm2002 = vmand %vm2001, %vm478
        %v2003 = vld [vmem:[#allocation3 + $0x8] sm:$0x1]
        %v2004 = vsel %vm2002, 0, %v2003
        %2005 = vst [vmem:[#allocation3 + $0x8] sm:$0x1] %v2004
        %vm2006 = vmand %vm1992, %vm483
        %vm2007 = vsmask.f32 7954
        %vm2008 = vmand %vm1994, %vm2007
        %vm2009 = vmor %vm2008, %vm2006
        %v2010 = vld [vmem:[#allocation3 + $0xc] sm:$0x11]
        %v2011 = vsel %vm2009, 0, %v2010
        %2012 = vst [vmem:[#allocation3 + $0xc] sm:$0x11] %v2011
        %vm2013 = vmand %vm2001, %vm483
        %v2014 = vld [vmem:[#allocation3 + $0x14] sm:$0x1]
        %v2015 = vsel %vm2013, 0, %v2014
        %2016 = vst [vmem:[#allocation3 + $0x14] sm:$0x1] %v2015
        %vm2017 = vcmask 257024
        %2018 = vst.msk [vmem:[#allocation3] sm:$0xf] %vm2017, 0
        %vm2019 = vcmask 253952
        %2020 = vst.msk [vmem:[#allocation3 + $0xc] sm:$0x1] %vm2019, 0
        %vm2021 = vcmask 519424
        %2022 = vst.msk [vmem:[#allocation3 + $0x8] sm:$0xf] %vm2021, 0
        %vm2023 = vcmask 516352
        %2024 = vst.msk [vmem:[#allocation3 + $0x14] sm:$0x1] %vm2023, 0
        %v2025 = vpack.c.bf16 %v1977, %v1976
        %v2026 = vpack.c.bf16 %v1979, %v1978
        %v2027 = vpack.c.bf16 %v1981, %v1980
        %v2028 = vpack.c.bf16 %v1983, %v1982
        %v2029 = vpack.c.bf16 %v1985, %v1984
        %v2030 = vpack.c.bf16 %v1987, %v1986
        %v2031 = vpack.c.bf16 %v1989, %v1988
        %v2032 = vpack.c.bf16 %v1991, %v1990
        %v2041 = vunpack.c.l.b16 %v2025
        %v2042 = vunpack.c.h.b16 %v2025
        %v2043 = vunpack.c.l.b16 %v2026
        %v2044 = vunpack.c.h.b16 %v2026
        %v2045 = vunpack.c.l.b16 %v2027
        %v2046 = vunpack.c.h.b16 %v2027
        %v2047 = vunpack.c.l.b16 %v2028
        %v2048 = vunpack.c.h.b16 %v2028
        %v2049 = vunpack.c.l.b16 %v2029
        %v2050 = vunpack.c.h.b16 %v2029
        %v2051 = vunpack.c.l.b16 %v2030
        %v2052 = vunpack.c.h.b16 %v2030
        %v2053 = vunpack.c.l.b16 %v2031
        %v2054 = vunpack.c.h.b16 %v2031
        %v2055 = vunpack.c.l.b16 %v2032
        %v2056 = vunpack.c.h.b16 %v2032
        %v2057 = vrot.slane %v2041, 7
        %v2058 = vrot.slane %v2043, 6
        %vm2059 = vcmask 1042434
        %v2060 = vsel %vm2059, %v2058, %v2057
        %v2061 = vrot.slane %v2045, 5
        %vm2062 = vcmask 1043459
        %v2063 = vsel %vm2062, %v2061, %v2060
        %v2064 = vrot.slane %v2047, 4
        %vm2065 = vcmask 1044484
        %v2066 = vsel %vm2065, %v2064, %v2063
        %v2067 = vrot.slane %v2049, 3
        %vm2068 = vcmask 1045509
        %v2069 = vsel %vm2068, %v2067, %v2066
        %v2070 = vrot.slane %v2051, 2
        %vm2071 = vcmask 1046534
        %v2072 = vsel %vm2071, %v2070, %v2069
        %v2073 = vrot.slane %v2053, 1
        %vm2074 = vcmask 1047559
        %v2075 = vsel %vm2074, %v2073, %v2072
        %v2076 = vrot.slane %v2042, 7
        %v2077 = vrot.slane %v2044, 6
        %v2078 = vsel %vm2059, %v2077, %v2076
        %v2079 = vrot.slane %v2046, 5
        %v2080 = vsel %vm2062, %v2079, %v2078
        %v2081 = vrot.slane %v2048, 4
        %v2082 = vsel %vm2065, %v2081, %v2080
        %v2083 = vrot.slane %v2050, 3
        %v2084 = vsel %vm2068, %v2083, %v2082
        %v2085 = vrot.slane %v2052, 2
        %v2086 = vsel %vm2071, %v2085, %v2084
        %v2087 = vrot.slane %v2054, 1
        %v2088 = vsel %vm2074, %v2087, %v2086
        %v2089 = vpack.c.b16 %v2088, %v2075
        %v2090 = vpack.c.b16 %v2056, %v2055
        %2091 = vrot.lane.b32.xlu0 %v2089, 32
        %v2092 = vpop.permute.xlu0 %2091
        %2093 = vrot.lane.b32.xlu0 %v2090, 32
        %v2094 = vpop.permute.xlu0 %2093
        %v2095 = vrot.slane %v2092, 4
        %v2096 = vrot.slane %v2094, 4
        %vm2097 = vcmask 261120
        %v2098 = vsel %vm2097, %v2095, %v2092
        %v2099 = vsel %vm2097, %v2096, %v2094
        %vm2104 = vcmask 1043712
        %vm2105 = vmand %vm2104, %vm483
        %vm2106 = vcmask 1047556
        %vm2107 = vmand %vm2106, %vm2007
        %vm2108 = vmor %vm2107, %vm2105
        %v2109 = vld [vmem:[#allocation3] sm:$0xff]
        %v2110 = vsel %vm2108, %v2098, %v2109
        %2111 = vst [vmem:[#allocation3] sm:$0xff] %v2110
        %vm2112 = vcmask 257024
        %vm2113 = vmand %vm2112, %vm483
        %v2114 = vld [vmem:[#allocation3 + $0x8] sm:$0xf]
        %v2115 = vsel %vm2113, %v2095, %v2114
        %2116 = vst [vmem:[#allocation3 + $0x8] sm:$0xf] %v2115
        %vm2117 = vcmask 1040640
        %vm2118 = vmand %vm2117, %vm478
        %vm2119 = vmor %vm1996, %vm2118
        %v2120 = vld [vmem:[#allocation3 + $0xc] sm:$0x11]
        %v2121 = vsel %vm2119, %v2099, %v2120
        %2122 = vst [vmem:[#allocation3 + $0xc] sm:$0x11] %v2121
        %vm2123 = vcmask 253952
        %vm2124 = vmand %vm2123, %vm478
        %v2125 = vld [vmem:[#allocation3 + $0x14] sm:$0x1]
        %v2126 = vsel %vm2124, %v2096, %v2125
        %2127 = vst [vmem:[#allocation3 + $0x14] sm:$0x1] %v2126
        %v2128 = vld [vmem:[#allocation3] sm:$0xff]
        %v2129 = vld [vmem:[#allocation3 + $0x8] sm:$0xf]
        %v2130 = vld [vmem:[#allocation11] sm:$0xff]
        %v2131 = vld [vmem:[#allocation11 + $0x8] sm:$0xff]
        %v2132 = vld [vmem:[#allocation11 + $0x10] sm:$0xff]
        %v2133 = vld [vmem:[#allocation11 + $0x18] sm:$0xff]
        %v2134 = vld [vmem:[#allocation11 + $0x20] sm:$0xff]
        %v2135 = vld [vmem:[#allocation11 + $0x28] sm:$0xff]
        %v2136 = vld [vmem:[#allocation11 + $0x30] sm:$0xff]
        %v2137 = vld [vmem:[#allocation11 + $0x38] sm:$0xff]
        %v2138 = vld [vmem:[#allocation11 + $0x40] sm:$0xff]
        %v2139 = vld [vmem:[#allocation11 + $0x48] sm:$0xff]
        %v2140 = vld [vmem:[#allocation11 + $0x50] sm:$0xff]
        %v2141 = vld [vmem:[#allocation11 + $0x58] sm:$0xff]
        %v2142 = vld [vmem:[#allocation11 + $0x60] sm:$0xff]
        %v2143 = vld [vmem:[#allocation11 + $0x68] sm:$0xff]
        %v2144 = vld [vmem:[#allocation11 + $0x70] sm:$0xff]
        %v2145 = vld [vmem:[#allocation11 + $0x78] sm:$0xff]
        %v2146 = vld [vmem:[#allocation11 + $0x80] sm:$0xff]
        %v2147 = vld [vmem:[#allocation11 + $0x88] sm:$0xff]
        %v2148 = vld [vmem:[#allocation11 + $0x90] sm:$0xff]
        %v2149 = vld [vmem:[#allocation11 + $0x98] sm:$0xff]
        %v2150 = vld [vmem:[#allocation11 + $0xa0] sm:$0xff]
        %v2151 = vld [vmem:[#allocation11 + $0xa8] sm:$0xff]
        %v2152 = vld [vmem:[#allocation11 + $0xb0] sm:$0xff]
        %v2153 = vld [vmem:[#allocation11 + $0xb8] sm:$0xff]
        %v2154 = vld [vmem:[#allocation11 + $0xc0] sm:$0xff]
        %v2155 = vld [vmem:[#allocation11 + $0xc8] sm:$0xff]
        %v2156 = vld [vmem:[#allocation11 + $0xd0] sm:$0xff]
        %v2157 = vld [vmem:[#allocation11 + $0xd8] sm:$0xff]
        %v2158 = vld [vmem:[#allocation11 + $0xe0] sm:$0xff]
        %v2159 = vld [vmem:[#allocation11 + $0xe8] sm:$0xff]
        %v2160 = vld [vmem:[#allocation11 + $0xf0] sm:$0xff]
        %v2161 = vld [vmem:[#allocation11 + $0xf8] sm:$0xff]
        %v2162 = vld [vmem:[#allocation11 + $0x100] sm:$0xff]
        %v2163 = vld [vmem:[#allocation11 + $0x108] sm:$0xff]
        %v2164 = vld [vmem:[#allocation11 + $0x110] sm:$0xff]
        %v2165 = vld [vmem:[#allocation11 + $0x118] sm:$0xff]
        %v2166 = vld [vmem:[#allocation11 + $0x120] sm:$0xff]
        %v2167 = vld [vmem:[#allocation11 + $0x128] sm:$0xff]
        %v2168 = vld [vmem:[#allocation11 + $0x130] sm:$0xff]
        %v2169 = vld [vmem:[#allocation11 + $0x138] sm:$0xff]
        %v2170 = vld [vmem:[#allocation11 + $0x140] sm:$0xff]
        %v2171 = vld [vmem:[#allocation11 + $0x148] sm:$0xff]
        %v2172 = vld [vmem:[#allocation11 + $0x150] sm:$0xff]
        %v2173 = vld [vmem:[#allocation11 + $0x158] sm:$0xff]
        %v2174 = vld [vmem:[#allocation11 + $0x160] sm:$0xff]
        %v2175 = vld [vmem:[#allocation11 + $0x168] sm:$0xff]
        %v2176 = vld [vmem:[#allocation11 + $0x170] sm:$0xff]
        %v2177 = vld [vmem:[#allocation11 + $0x178] sm:$0xff]
        %v2178 = vld [vmem:[#allocation11 + $0x180] sm:$0xff]
        %v2179 = vld [vmem:[#allocation11 + $0x188] sm:$0xff]
        %v2180 = vld [vmem:[#allocation11 + $0x190] sm:$0xff]
        %v2181 = vld [vmem:[#allocation11 + $0x198] sm:$0xff]
        %v2182 = vld [vmem:[#allocation11 + $0x1a0] sm:$0xff]
        %v2183 = vld [vmem:[#allocation11 + $0x1a8] sm:$0xff]
        %v2184 = vld [vmem:[#allocation11 + $0x1b0] sm:$0xff]
        %v2185 = vld [vmem:[#allocation11 + $0x1b8] sm:$0xff]
        %v2186 = vld [vmem:[#allocation11 + $0x1c0] sm:$0xff]
        %v2187 = vld [vmem:[#allocation11 + $0x1c8] sm:$0xff]
        %v2188 = vld [vmem:[#allocation11 + $0x1d0] sm:$0xff]
        %v2189 = vld [vmem:[#allocation11 + $0x1d8] sm:$0xff]
        %v2190 = vld [vmem:[#allocation11 + $0x1e0] sm:$0xff]
        %v2191 = vld [vmem:[#allocation11 + $0x1e8] sm:$0xff]
        %v2192 = vld [vmem:[#allocation11 + $0x1f0] sm:$0xff]
        %v2193 = vld [vmem:[#allocation11 + $0x1f8] sm:$0xff]
        %v2194 = vld [vmem:[#allocation11 + $0x200] sm:$0xff]
        %v2195 = vld [vmem:[#allocation11 + $0x208] sm:$0xff]
        %v2196 = vld [vmem:[#allocation11 + $0x210] sm:$0xff]
        %v2197 = vld [vmem:[#allocation11 + $0x218] sm:$0xff]
        %v2198 = vld [vmem:[#allocation11 + $0x220] sm:$0xff]
        %v2199 = vld [vmem:[#allocation11 + $0x228] sm:$0xff]
        %v2200 = vld [vmem:[#allocation11 + $0x230] sm:$0xff]
        %v2201 = vld [vmem:[#allocation11 + $0x238] sm:$0xff]
        %v2202 = vld [vmem:[#allocation11 + $0x240] sm:$0xff]
        %v2203 = vld [vmem:[#allocation11 + $0x248] sm:$0xff]
        %v2204 = vld [vmem:[#allocation11 + $0x250] sm:$0xff]
        %v2205 = vld [vmem:[#allocation11 + $0x258] sm:$0xff]
        %v2206 = vld [vmem:[#allocation11 + $0x260] sm:$0xff]
        %v2207 = vld [vmem:[#allocation11 + $0x268] sm:$0xff]
        %v2208 = vld [vmem:[#allocation11 + $0x270] sm:$0xff]
        %v2209 = vld [vmem:[#allocation11 + $0x278] sm:$0xff]
        %v2210 = vld [vmem:[#allocation3 + $0xc] sm:$0x11]
        %v2211 = vld [vmem:[#allocation3 + $0x14] sm:$0x1]
        %s2212 = scalar_lea.vmem [#allocation11], 640
        %v2213 = vld [vmem:[%s2212] sm:$0xff]
        %v2214 = vld [vmem:[%s2212 + $0x8] sm:$0xff]
        %v2215 = vld [vmem:[%s2212 + $0x10] sm:$0xff]
        %v2216 = vld [vmem:[%s2212 + $0x18] sm:$0xff]
        %v2217 = vld [vmem:[%s2212 + $0x20] sm:$0xff]
        %v2218 = vld [vmem:[%s2212 + $0x28] sm:$0xff]
        %v2219 = vld [vmem:[%s2212 + $0x30] sm:$0xff]
        %v2220 = vld [vmem:[%s2212 + $0x38] sm:$0xff]
        %v2221 = vld [vmem:[%s2212 + $0x40] sm:$0xff]
        %v2222 = vld [vmem:[%s2212 + $0x48] sm:$0xff]
        %v2223 = vld [vmem:[%s2212 + $0x50] sm:$0xff]
        %v2224 = vld [vmem:[%s2212 + $0x58] sm:$0xff]
        %v2225 = vld [vmem:[%s2212 + $0x60] sm:$0xff]
        %v2226 = vld [vmem:[%s2212 + $0x68] sm:$0xff]
        %v2227 = vld [vmem:[%s2212 + $0x70] sm:$0xff]
        %v2228 = vld [vmem:[%s2212 + $0x78] sm:$0xff]
        %v2229 = vld [vmem:[%s2212 + $0x80] sm:$0xff]
        %v2230 = vld [vmem:[%s2212 + $0x88] sm:$0xff]
        %v2231 = vld [vmem:[%s2212 + $0x90] sm:$0xff]
        %v2232 = vld [vmem:[%s2212 + $0x98] sm:$0xff]
        %v2233 = vld [vmem:[%s2212 + $0xa0] sm:$0xff]
        %v2234 = vld [vmem:[%s2212 + $0xa8] sm:$0xff]
        %v2235 = vld [vmem:[%s2212 + $0xb0] sm:$0xff]
        %v2236 = vld [vmem:[%s2212 + $0xb8] sm:$0xff]
        %v2237 = vld [vmem:[%s2212 + $0xc0] sm:$0xff]
        %v2238 = vld [vmem:[%s2212 + $0xc8] sm:$0xff]
        %v2239 = vld [vmem:[%s2212 + $0xd0] sm:$0xff]
        %v2240 = vld [vmem:[%s2212 + $0xd8] sm:$0xff]
        %v2241 = vld [vmem:[%s2212 + $0xe0] sm:$0xff]
        %v2242 = vld [vmem:[%s2212 + $0xe8] sm:$0xff]
        %v2243 = vld [vmem:[%s2212 + $0xf0] sm:$0xff]
        %v2244 = vld [vmem:[%s2212 + $0xf8] sm:$0xff]
        %v2245 = vld [vmem:[%s2212 + $0x100] sm:$0xff]
        %v2246 = vld [vmem:[%s2212 + $0x108] sm:$0xff]
        %v2247 = vld [vmem:[%s2212 + $0x110] sm:$0xff]
        %v2248 = vld [vmem:[%s2212 + $0x118] sm:$0xff]
        %v2249 = vld [vmem:[%s2212 + $0x120] sm:$0xff]
        %v2250 = vld [vmem:[%s2212 + $0x128] sm:$0xff]
        %v2251 = vld [vmem:[%s2212 + $0x130] sm:$0xff]
        %v2252 = vld [vmem:[%s2212 + $0x138] sm:$0xff]
        %v2253 = vld [vmem:[%s2212 + $0x140] sm:$0xff]
        %v2254 = vld [vmem:[%s2212 + $0x148] sm:$0xff]
        %v2255 = vld [vmem:[%s2212 + $0x150] sm:$0xff]
        %v2256 = vld [vmem:[%s2212 + $0x158] sm:$0xff]
        %v2257 = vld [vmem:[%s2212 + $0x160] sm:$0xff]
        %v2258 = vld [vmem:[%s2212 + $0x168] sm:$0xff]
        %v2259 = vld [vmem:[%s2212 + $0x170] sm:$0xff]
        %v2260 = vld [vmem:[%s2212 + $0x178] sm:$0xff]
        %v2261 = vld [vmem:[%s2212 + $0x180] sm:$0xff]
        %v2262 = vld [vmem:[%s2212 + $0x188] sm:$0xff]
        %v2263 = vld [vmem:[%s2212 + $0x190] sm:$0xff]
        %v2264 = vld [vmem:[%s2212 + $0x198] sm:$0xff]
        %v2265 = vld [vmem:[%s2212 + $0x1a0] sm:$0xff]
        %v2266 = vld [vmem:[%s2212 + $0x1a8] sm:$0xff]
        %v2267 = vld [vmem:[%s2212 + $0x1b0] sm:$0xff]
        %v2268 = vld [vmem:[%s2212 + $0x1b8] sm:$0xff]
        %v2269 = vld [vmem:[%s2212 + $0x1c0] sm:$0xff]
        %v2270 = vld [vmem:[%s2212 + $0x1c8] sm:$0xff]
        %v2271 = vld [vmem:[%s2212 + $0x1d0] sm:$0xff]
        %v2272 = vld [vmem:[%s2212 + $0x1d8] sm:$0xff]
        %v2273 = vld [vmem:[%s2212 + $0x1e0] sm:$0xff]
        %v2274 = vld [vmem:[%s2212 + $0x1e8] sm:$0xff]
        %v2275 = vld [vmem:[%s2212 + $0x1f0] sm:$0xff]
        %v2276 = vld [vmem:[%s2212 + $0x1f8] sm:$0xff]
        %v2277 = vld [vmem:[%s2212 + $0x200] sm:$0xff]
        %v2278 = vld [vmem:[%s2212 + $0x208] sm:$0xff]
        %v2279 = vld [vmem:[%s2212 + $0x210] sm:$0xff]
        %v2280 = vld [vmem:[%s2212 + $0x218] sm:$0xff]
        %v2281 = vld [vmem:[%s2212 + $0x220] sm:$0xff]
        %v2282 = vld [vmem:[%s2212 + $0x228] sm:$0xff]
        %v2283 = vld [vmem:[%s2212 + $0x230] sm:$0xff]
        %v2284 = vld [vmem:[%s2212 + $0x238] sm:$0xff]
        %v2285 = vld [vmem:[%s2212 + $0x240] sm:$0xff]
        %v2286 = vld [vmem:[%s2212 + $0x248] sm:$0xff]
        %v2287 = vld [vmem:[%s2212 + $0x250] sm:$0xff]
        %v2288 = vld [vmem:[%s2212 + $0x258] sm:$0xff]
        %v2289 = vld [vmem:[%s2212 + $0x260] sm:$0xff]
        %v2290 = vld [vmem:[%s2212 + $0x268] sm:$0xff]
        %v2291 = vld [vmem:[%s2212 + $0x270] sm:$0xff]
        %v2292 = vld [vmem:[%s2212 + $0x278] sm:$0xff]
        %v2297 = vunpack.c.l.b16 %v2128
        %v2298 = vunpack.c.h.b16 %v2128
        %v2299 = vunpack.c.l.b16 %v2129
        %v2300 = vunpack.c.l.b16 %v2210
        %v2301 = vunpack.c.h.b16 %v2210
        %v2302 = vunpack.c.l.b16 %v2211
        %v2303 = vpack.c.b16 %v2300, %v2297
        %v2304 = vpack.c.b16 %v2301, %v2298
        %v2305 = vpack.c.b16 %v2302, %v2299
        %v2307 = vshrl.u32 %v2303, 16
        %v2309 = vshll.u32 %v2303, 16
        %v2311 = vrot.slane %v2309, 1
        %v2312 = vor.u32 %v2307, %v2311
        %v2314 = vshrl.u32 %v2304, 16
        %v2316 = vshll.u32 %v2304, 16
        %v2318 = vrot.slane %v2316, 1
        %v2319 = vor.u32 %v2314, %v2318
        %v2321 = vshrl.u32 %v2305, 16
        %v2323 = vshll.u32 %v2305, 16
        %v2325 = vrot.slane %v2323, 1
        %v2326 = vor.u32 %v2321, %v2325
        %v2409 = vunpack.c.l.b16 %v2213
        %v2410 = vunpack.c.h.b16 %v2213
        %v2411 = vunpack.c.l.b16 %v2214
        %v2412 = vunpack.c.h.b16 %v2214
        %v2413 = vunpack.c.l.b16 %v2215
        %v2414 = vunpack.c.h.b16 %v2215
        %v2415 = vunpack.c.l.b16 %v2216
        %v2416 = vunpack.c.h.b16 %v2216
        %v2417 = vunpack.c.l.b16 %v2217
        %v2418 = vunpack.c.h.b16 %v2217
        %v2419 = vunpack.c.l.b16 %v2218
        %v2420 = vunpack.c.h.b16 %v2218
        %v2421 = vunpack.c.l.b16 %v2219
        %v2422 = vunpack.c.h.b16 %v2219
        %v2423 = vunpack.c.l.b16 %v2220
        %v2424 = vunpack.c.h.b16 %v2220
        %v2425 = vunpack.c.l.b16 %v2221
        %v2426 = vunpack.c.h.b16 %v2221
        %v2427 = vunpack.c.l.b16 %v2222
        %v2428 = vunpack.c.h.b16 %v2222
        %v2429 = vunpack.c.l.b16 %v2223
        %v2430 = vunpack.c.h.b16 %v2223
        %v2431 = vunpack.c.l.b16 %v2224
        %v2432 = vunpack.c.h.b16 %v2224
        %v2433 = vunpack.c.l.b16 %v2225
        %v2434 = vunpack.c.h.b16 %v2225
        %v2435 = vunpack.c.l.b16 %v2226
        %v2436 = vunpack.c.h.b16 %v2226
        %v2437 = vunpack.c.l.b16 %v2227
        %v2438 = vunpack.c.h.b16 %v2227
        %v2439 = vunpack.c.l.b16 %v2228
        %v2440 = vunpack.c.h.b16 %v2228
        %v2441 = vunpack.c.l.b16 %v2229
        %v2442 = vunpack.c.h.b16 %v2229
        %v2443 = vunpack.c.l.b16 %v2230
        %v2444 = vunpack.c.h.b16 %v2230
        %v2445 = vunpack.c.l.b16 %v2231
        %v2446 = vunpack.c.h.b16 %v2231
        %v2447 = vunpack.c.l.b16 %v2232
        %v2448 = vunpack.c.h.b16 %v2232
        %v2449 = vunpack.c.l.b16 %v2233
        %v2450 = vunpack.c.h.b16 %v2233
        %v2451 = vunpack.c.l.b16 %v2234
        %v2452 = vunpack.c.h.b16 %v2234
        %v2453 = vunpack.c.l.b16 %v2235
        %v2454 = vunpack.c.h.b16 %v2235
        %v2455 = vunpack.c.l.b16 %v2236
        %v2456 = vunpack.c.h.b16 %v2236
        %v2457 = vunpack.c.l.b16 %v2237
        %v2458 = vunpack.c.h.b16 %v2237
        %v2459 = vunpack.c.l.b16 %v2238
        %v2460 = vunpack.c.h.b16 %v2238
        %v2461 = vunpack.c.l.b16 %v2239
        %v2462 = vunpack.c.h.b16 %v2239
        %v2463 = vunpack.c.l.b16 %v2240
        %v2464 = vunpack.c.h.b16 %v2240
        %v2465 = vunpack.c.l.b16 %v2241
        %v2466 = vunpack.c.h.b16 %v2241
        %v2467 = vunpack.c.l.b16 %v2242
        %v2468 = vunpack.c.h.b16 %v2242
        %v2469 = vunpack.c.l.b16 %v2243
        %v2470 = vunpack.c.h.b16 %v2243
        %v2471 = vunpack.c.l.b16 %v2244
        %v2472 = vunpack.c.h.b16 %v2244
        %v2473 = vunpack.c.l.b16 %v2245
        %v2474 = vunpack.c.h.b16 %v2245
        %v2475 = vunpack.c.l.b16 %v2246
        %v2476 = vunpack.c.h.b16 %v2246
        %v2477 = vunpack.c.l.b16 %v2247
        %v2478 = vunpack.c.h.b16 %v2247
        %v2479 = vunpack.c.l.b16 %v2248
        %v2480 = vunpack.c.h.b16 %v2248
        %v2481 = vunpack.c.l.b16 %v2249
        %v2482 = vunpack.c.h.b16 %v2249
        %v2483 = vunpack.c.l.b16 %v2250
        %v2484 = vunpack.c.h.b16 %v2250
        %v2485 = vunpack.c.l.b16 %v2251
        %v2486 = vunpack.c.h.b16 %v2251
        %v2487 = vunpack.c.l.b16 %v2252
        %v2488 = vunpack.c.h.b16 %v2252
        %v2489 = vunpack.c.l.b16 %v2253
        %v2490 = vunpack.c.h.b16 %v2253
        %v2491 = vunpack.c.l.b16 %v2254
        %v2492 = vunpack.c.h.b16 %v2254
        %v2493 = vunpack.c.l.b16 %v2255
        %v2494 = vunpack.c.h.b16 %v2255
        %v2495 = vunpack.c.l.b16 %v2256
        %v2496 = vunpack.c.h.b16 %v2256
        %v2497 = vunpack.c.l.b16 %v2257
        %v2498 = vunpack.c.h.b16 %v2257
        %v2499 = vunpack.c.l.b16 %v2258
        %v2500 = vunpack.c.h.b16 %v2258
        %v2501 = vunpack.c.l.b16 %v2259
        %v2502 = vunpack.c.h.b16 %v2259
        %v2503 = vunpack.c.l.b16 %v2260
        %v2504 = vunpack.c.h.b16 %v2260
        %v2505 = vunpack.c.l.b16 %v2261
        %v2506 = vunpack.c.h.b16 %v2261
        %v2507 = vunpack.c.l.b16 %v2262
        %v2508 = vunpack.c.h.b16 %v2262
        %v2509 = vunpack.c.l.b16 %v2263
        %v2510 = vunpack.c.h.b16 %v2263
        %v2511 = vunpack.c.l.b16 %v2264
        %v2512 = vunpack.c.h.b16 %v2264
        %v2513 = vunpack.c.l.b16 %v2265
        %v2514 = vunpack.c.h.b16 %v2265
        %v2515 = vunpack.c.l.b16 %v2266
        %v2516 = vunpack.c.h.b16 %v2266
        %v2517 = vunpack.c.l.b16 %v2267
        %v2518 = vunpack.c.h.b16 %v2267
        %v2519 = vunpack.c.l.b16 %v2268
        %v2520 = vunpack.c.h.b16 %v2268
        %v2521 = vunpack.c.l.b16 %v2269
        %v2522 = vunpack.c.h.b16 %v2269
        %v2523 = vunpack.c.l.b16 %v2270
        %v2524 = vunpack.c.h.b16 %v2270
        %v2525 = vunpack.c.l.b16 %v2271
        %v2526 = vunpack.c.h.b16 %v2271
        %v2527 = vunpack.c.l.b16 %v2272
        %v2528 = vunpack.c.h.b16 %v2272
        %v2529 = vunpack.c.l.b16 %v2273
        %v2530 = vunpack.c.h.b16 %v2273
        %v2531 = vunpack.c.l.b16 %v2274
        %v2532 = vunpack.c.h.b16 %v2274
        %v2533 = vunpack.c.l.b16 %v2275
        %v2534 = vunpack.c.h.b16 %v2275
        %v2535 = vunpack.c.l.b16 %v2276
        %v2536 = vunpack.c.h.b16 %v2276
        %v2537 = vunpack.c.l.b16 %v2277
        %v2538 = vunpack.c.h.b16 %v2277
        %v2539 = vunpack.c.l.b16 %v2278
        %v2540 = vunpack.c.h.b16 %v2278
        %v2541 = vunpack.c.l.b16 %v2279
        %v2542 = vunpack.c.h.b16 %v2279
        %v2543 = vunpack.c.l.b16 %v2280
        %v2544 = vunpack.c.h.b16 %v2280
        %v2545 = vunpack.c.l.b16 %v2281
        %v2546 = vunpack.c.h.b16 %v2281
        %v2547 = vunpack.c.l.b16 %v2282
        %v2548 = vunpack.c.h.b16 %v2282
        %v2549 = vunpack.c.l.b16 %v2283
        %v2550 = vunpack.c.h.b16 %v2283
        %v2551 = vunpack.c.l.b16 %v2284
        %v2552 = vunpack.c.h.b16 %v2284
        %v2553 = vunpack.c.l.b16 %v2285
        %v2554 = vunpack.c.h.b16 %v2285
        %v2555 = vunpack.c.l.b16 %v2286
        %v2556 = vunpack.c.h.b16 %v2286
        %v2557 = vunpack.c.l.b16 %v2287
        %v2558 = vunpack.c.h.b16 %v2287
        %v2559 = vunpack.c.l.b16 %v2288
        %v2560 = vunpack.c.h.b16 %v2288
        %v2561 = vunpack.c.l.b16 %v2289
        %v2562 = vunpack.c.h.b16 %v2289
        %v2563 = vunpack.c.l.b16 %v2290
        %v2564 = vunpack.c.h.b16 %v2290
        %v2565 = vunpack.c.l.b16 %v2291
        %v2566 = vunpack.c.h.b16 %v2291
        %v2567 = vunpack.c.l.b16 %v2292
        %v2568 = vunpack.c.h.b16 %v2292
        %v2569 = vpack.c.b16 %v2413, %v2409
        %v2570 = vpack.c.b16 %v2414, %v2410
        %v2571 = vpack.c.b16 %v2415, %v2411
        %v2572 = vpack.c.b16 %v2416, %v2412
        %v2573 = vpack.c.b16 %v2421, %v2417
        %v2574 = vpack.c.b16 %v2422, %v2418
        %v2575 = vpack.c.b16 %v2423, %v2419
        %v2576 = vpack.c.b16 %v2424, %v2420
        %v2577 = vpack.c.b16 %v2429, %v2425
        %v2578 = vpack.c.b16 %v2430, %v2426
        %v2579 = vpack.c.b16 %v2431, %v2427
        %v2580 = vpack.c.b16 %v2432, %v2428
        %v2581 = vpack.c.b16 %v2437, %v2433
        %v2582 = vpack.c.b16 %v2438, %v2434
        %v2583 = vpack.c.b16 %v2439, %v2435
        %v2584 = vpack.c.b16 %v2440, %v2436
        %v2585 = vpack.c.b16 %v2445, %v2441
        %v2586 = vpack.c.b16 %v2446, %v2442
        %v2587 = vpack.c.b16 %v2447, %v2443
        %v2588 = vpack.c.b16 %v2448, %v2444
        %v2589 = vpack.c.b16 %v2453, %v2449
        %v2590 = vpack.c.b16 %v2454, %v2450
        %v2591 = vpack.c.b16 %v2455, %v2451
        %v2592 = vpack.c.b16 %v2456, %v2452
        %v2593 = vpack.c.b16 %v2461, %v2457
        %v2594 = vpack.c.b16 %v2462, %v2458
        %v2595 = vpack.c.b16 %v2463, %v2459
        %v2596 = vpack.c.b16 %v2464, %v2460
        %v2597 = vpack.c.b16 %v2469, %v2465
        %v2598 = vpack.c.b16 %v2470, %v2466
        %v2599 = vpack.c.b16 %v2471, %v2467
        %v2600 = vpack.c.b16 %v2472, %v2468
        %v2601 = vpack.c.b16 %v2477, %v2473
        %v2602 = vpack.c.b16 %v2478, %v2474
        %v2603 = vpack.c.b16 %v2479, %v2475
        %v2604 = vpack.c.b16 %v2480, %v2476
        %v2605 = vpack.c.b16 %v2485, %v2481
        %v2606 = vpack.c.b16 %v2486, %v2482
        %v2607 = vpack.c.b16 %v2487, %v2483
        %v2608 = vpack.c.b16 %v2488, %v2484
        %v2609 = vpack.c.b16 %v2493, %v2489
        %v2610 = vpack.c.b16 %v2494, %v2490
        %v2611 = vpack.c.b16 %v2495, %v2491
        %v2612 = vpack.c.b16 %v2496, %v2492
        %v2613 = vpack.c.b16 %v2501, %v2497
        %v2614 = vpack.c.b16 %v2502, %v2498
        %v2615 = vpack.c.b16 %v2503, %v2499
        %v2616 = vpack.c.b16 %v2504, %v2500
        %v2617 = vpack.c.b16 %v2509, %v2505
        %v2618 = vpack.c.b16 %v2510, %v2506
        %v2619 = vpack.c.b16 %v2511, %v2507
        %v2620 = vpack.c.b16 %v2512, %v2508
        %v2621 = vpack.c.b16 %v2517, %v2513
        %v2622 = vpack.c.b16 %v2518, %v2514
        %v2623 = vpack.c.b16 %v2519, %v2515
        %v2624 = vpack.c.b16 %v2520, %v2516
        %v2625 = vpack.c.b16 %v2525, %v2521
        %v2626 = vpack.c.b16 %v2526, %v2522
        %v2627 = vpack.c.b16 %v2527, %v2523
        %v2628 = vpack.c.b16 %v2528, %v2524
        %v2629 = vpack.c.b16 %v2533, %v2529
        %v2630 = vpack.c.b16 %v2534, %v2530
        %v2631 = vpack.c.b16 %v2535, %v2531
        %v2632 = vpack.c.b16 %v2536, %v2532
        %v2633 = vpack.c.b16 %v2541, %v2537
        %v2634 = vpack.c.b16 %v2542, %v2538
        %v2635 = vpack.c.b16 %v2543, %v2539
        %v2636 = vpack.c.b16 %v2544, %v2540
        %v2637 = vpack.c.b16 %v2549, %v2545
        %v2638 = vpack.c.b16 %v2550, %v2546
        %v2639 = vpack.c.b16 %v2551, %v2547
        %v2640 = vpack.c.b16 %v2552, %v2548
        %v2641 = vpack.c.b16 %v2557, %v2553
        %v2642 = vpack.c.b16 %v2558, %v2554
        %v2643 = vpack.c.b16 %v2559, %v2555
        %v2644 = vpack.c.b16 %v2560, %v2556
        %v2645 = vpack.c.b16 %v2565, %v2561
        %v2646 = vpack.c.b16 %v2566, %v2562
        %v2647 = vpack.c.b16 %v2567, %v2563
        %v2648 = vpack.c.b16 %v2568, %v2564
        %v2730 = vsel %vm1886, %v2326, 0
        %2732 = vmatpush.bf16.msra.mxu0 %v2597
        %2733 = vmatpush.bf16.msra.mxu0 %v2593
        %2734 = vmatpush.bf16.msra.mxu0 %v2589
        %2735 = vmatpush.bf16.msra.mxu0 %v2585
        %2736 = vmatpush.bf16.msra.mxu0 %v2581
        %2737 = vmatpush.bf16.msra.mxu0 %v2577
        %2738 = vmatpush.bf16.msra.mxu0 %v2573
        %2739 = vmatpush.bf16.msra.mxu0 %v2569
        %2740 = vmatmul.bf16.gmra.mxu0 %v2312
        %v2741 = vpop.f32.mrf.mxu0
        %v2742 = vadd.f32 0.0, %v2741
        %v2743 = vpop.f32.mrf.mxu0
        %2744 = vdwg.mxu0
        %2745 = vmatpush.bf16.msra.mxu0 %v2629
        %2746 = vmatpush.bf16.msra.mxu0 %v2625
        %2747 = vmatpush.bf16.msra.mxu0 %v2621
        %2748 = vmatpush.bf16.msra.mxu0 %v2617
        %2749 = vmatpush.bf16.msra.mxu0 %v2613
        %2750 = vmatpush.bf16.msra.mxu0 %v2609
        %2751 = vmatpush.bf16.msra.mxu0 %v2605
        %2752 = vmatpush.bf16.msra.mxu0 %v2601
        %2753 = vmatmul.bf16.gmra.mxu0 %v2319
        %v2754 = vpop.f32.mrf.mxu0
        %v2755 = vadd.f32 %v2742, %v2754
        %v2756 = vpop.f32.mrf.mxu0
        %2757 = vdwg.mxu0
        %2758 = vmatpush.bf16.msra.mxu0 0
        %2759 = vmatpush.bf16.msra.mxu0 0
        %2760 = vmatpush.bf16.msra.mxu0 0
        %2761 = vmatpush.bf16.msra.mxu0 0
        %2762 = vmatpush.bf16.msra.mxu0 %v2645
        %2763 = vmatpush.bf16.msra.mxu0 %v2641
        %2764 = vmatpush.bf16.msra.mxu0 %v2637
        %2765 = vmatpush.bf16.msra.mxu0 %v2633
        %2766 = vmatmul.bf16.gmra.mxu0 %v2730
        %v2767 = vpop.f32.mrf.mxu0
        %v2768 = vadd.f32 %v2755, %v2767
        %v2769 = vpop.f32.mrf.mxu0
        %2770 = vdwg.mxu0
        %2771 = vmatpush.bf16.msra.mxu0 %v2598
        %2772 = vmatpush.bf16.msra.mxu0 %v2594
        %2773 = vmatpush.bf16.msra.mxu0 %v2590
        %2774 = vmatpush.bf16.msra.mxu0 %v2586
        %2775 = vmatpush.bf16.msra.mxu0 %v2582
        %2776 = vmatpush.bf16.msra.mxu0 %v2578
        %2777 = vmatpush.bf16.msra.mxu0 %v2574
        %2778 = vmatpush.bf16.msra.mxu0 %v2570
        %2779 = vmatmul.bf16.gmra.mxu0 %v2312
        %v2780 = vpop.f32.mrf.mxu0
        %v2781 = vadd.f32 0.0, %v2780
        %v2782 = vpop.f32.mrf.mxu0
        %2783 = vdwg.mxu0
        %2784 = vmatpush.bf16.msra.mxu0 %v2630
        %2785 = vmatpush.bf16.msra.mxu0 %v2626
        %2786 = vmatpush.bf16.msra.mxu0 %v2622
        %2787 = vmatpush.bf16.msra.mxu0 %v2618
        %2788 = vmatpush.bf16.msra.mxu0 %v2614
        %2789 = vmatpush.bf16.msra.mxu0 %v2610
        %2790 = vmatpush.bf16.msra.mxu0 %v2606
        %2791 = vmatpush.bf16.msra.mxu0 %v2602
        %2792 = vmatmul.bf16.gmra.mxu0 %v2319
        %v2793 = vpop.f32.mrf.mxu0
        %v2794 = vadd.f32 %v2781, %v2793
        %v2795 = vpop.f32.mrf.mxu0
        %2796 = vdwg.mxu0
        %2797 = vmatpush.bf16.msra.mxu0 0
        %2798 = vmatpush.bf16.msra.mxu0 0
        %2799 = vmatpush.bf16.msra.mxu0 0
        %2800 = vmatpush.bf16.msra.mxu0 0
        %2801 = vmatpush.bf16.msra.mxu0 %v2646
        %2802 = vmatpush.bf16.msra.mxu0 %v2642
        %2803 = vmatpush.bf16.msra.mxu0 %v2638
        %2804 = vmatpush.bf16.msra.mxu0 %v2634
        %2805 = vmatmul.bf16.gmra.mxu0 %v2730
        %v2806 = vpop.f32.mrf.mxu0
        %v2807 = vadd.f32 %v2794, %v2806
        %v2808 = vpop.f32.mrf.mxu0
        %2809 = vdwg.mxu0
        %2810 = vmatpush.bf16.msra.mxu0 %v2599
        %2811 = vmatpush.bf16.msra.mxu0 %v2595
        %2812 = vmatpush.bf16.msra.mxu0 %v2591
        %2813 = vmatpush.bf16.msra.mxu0 %v2587
        %2814 = vmatpush.bf16.msra.mxu0 %v2583
        %2815 = vmatpush.bf16.msra.mxu0 %v2579
        %2816 = vmatpush.bf16.msra.mxu0 %v2575
        %2817 = vmatpush.bf16.msra.mxu0 %v2571
        %2818 = vmatmul.bf16.gmra.mxu0 %v2312
        %v2819 = vpop.f32.mrf.mxu0
        %v2820 = vadd.f32 0.0, %v2819
        %v2821 = vpop.f32.mrf.mxu0
        %2822 = vdwg.mxu0
        %2823 = vmatpush.bf16.msra.mxu0 %v2631
        %2824 = vmatpush.bf16.msra.mxu0 %v2627
        %2825 = vmatpush.bf16.msra.mxu0 %v2623
        %2826 = vmatpush.bf16.msra.mxu0 %v2619
        %2827 = vmatpush.bf16.msra.mxu0 %v2615
        %2828 = vmatpush.bf16.msra.mxu0 %v2611
        %2829 = vmatpush.bf16.msra.mxu0 %v2607
        %2830 = vmatpush.bf16.msra.mxu0 %v2603
        %2831 = vmatmul.bf16.gmra.mxu0 %v2319
        %v2832 = vpop.f32.mrf.mxu0
        %v2833 = vadd.f32 %v2820, %v2832
        %v2834 = vpop.f32.mrf.mxu0
        %2835 = vdwg.mxu0
        %2836 = vmatpush.bf16.msra.mxu0 0
        %2837 = vmatpush.bf16.msra.mxu0 0
        %2838 = vmatpush.bf16.msra.mxu0 0
        %2839 = vmatpush.bf16.msra.mxu0 0
        %2840 = vmatpush.bf16.msra.mxu0 %v2647
        %2841 = vmatpush.bf16.msra.mxu0 %v2643
        %2842 = vmatpush.bf16.msra.mxu0 %v2639
        %2843 = vmatpush.bf16.msra.mxu0 %v2635
        %2844 = vmatmul.bf16.gmra.mxu0 %v2730
        %v2845 = vpop.f32.mrf.mxu0
        %v2846 = vadd.f32 %v2833, %v2845
        %v2847 = vpop.f32.mrf.mxu0
        %2848 = vdwg.mxu0
        %2849 = vmatpush.bf16.msra.mxu0 %v2600
        %2850 = vmatpush.bf16.msra.mxu0 %v2596
        %2851 = vmatpush.bf16.msra.mxu0 %v2592
        %2852 = vmatpush.bf16.msra.mxu0 %v2588
        %2853 = vmatpush.bf16.msra.mxu0 %v2584
        %2854 = vmatpush.bf16.msra.mxu0 %v2580
        %2855 = vmatpush.bf16.msra.mxu0 %v2576
        %2856 = vmatpush.bf16.msra.mxu0 %v2572
        %2857 = vmatmul.bf16.gmra.mxu0 %v2312
        %v2858 = vpop.f32.mrf.mxu0
        %v2859 = vadd.f32 0.0, %v2858
        %v2860 = vpop.f32.mrf.mxu0
        %2861 = vdwg.mxu0
        %2862 = vmatpush.bf16.msra.mxu0 %v2632
        %2863 = vmatpush.bf16.msra.mxu0 %v2628
        %2864 = vmatpush.bf16.msra.mxu0 %v2624
        %2865 = vmatpush.bf16.msra.mxu0 %v2620
        %2866 = vmatpush.bf16.msra.mxu0 %v2616
        %2867 = vmatpush.bf16.msra.mxu0 %v2612
        %2868 = vmatpush.bf16.msra.mxu0 %v2608
        %2869 = vmatpush.bf16.msra.mxu0 %v2604
        %2870 = vmatmul.bf16.gmra.mxu0 %v2319
        %v2871 = vpop.f32.mrf.mxu0
        %v2872 = vadd.f32 %v2859, %v2871
        %v2873 = vpop.f32.mrf.mxu0
        %2874 = vdwg.mxu0
        %2875 = vmatpush.bf16.msra.mxu0 0
        %2876 = vmatpush.bf16.msra.mxu0 0
        %2877 = vmatpush.bf16.msra.mxu0 0
        %2878 = vmatpush.bf16.msra.mxu0 0
        %2879 = vmatpush.bf16.msra.mxu0 %v2648
        %2880 = vmatpush.bf16.msra.mxu0 %v2644
        %2881 = vmatpush.bf16.msra.mxu0 %v2640
        %2882 = vmatpush.bf16.msra.mxu0 %v2636
        %2883 = vmatmul.bf16.gmra.mxu0 %v2730
        %v2884 = vpop.f32.mrf.mxu0
        %v2885 = vadd.f32 %v2872, %v2884
        %v2886 = vpop.f32.mrf.mxu0
        %2887 = vdwg.mxu0
        %v2888 = vpack.c.b16 %v2297, %v2297
        %v2889 = vpack.c.b16 %v2298, %v2298
        %v2890 = vpack.c.b16 %v2299, %v2299
        %v2973 = vunpack.c.l.b16 %v2130
        %v2974 = vunpack.c.h.b16 %v2130
        %v2975 = vunpack.c.l.b16 %v2131
        %v2976 = vunpack.c.h.b16 %v2131
        %v2977 = vunpack.c.l.b16 %v2132
        %v2978 = vunpack.c.h.b16 %v2132
        %v2979 = vunpack.c.l.b16 %v2133
        %v2980 = vunpack.c.h.b16 %v2133
        %v2981 = vunpack.c.l.b16 %v2134
        %v2982 = vunpack.c.h.b16 %v2134
        %v2983 = vunpack.c.l.b16 %v2135
        %v2984 = vunpack.c.h.b16 %v2135
        %v2985 = vunpack.c.l.b16 %v2136
        %v2986 = vunpack.c.h.b16 %v2136
        %v2987 = vunpack.c.l.b16 %v2137
        %v2988 = vunpack.c.h.b16 %v2137
        %v2989 = vunpack.c.l.b16 %v2138
        %v2990 = vunpack.c.h.b16 %v2138
        %v2991 = vunpack.c.l.b16 %v2139
        %v2992 = vunpack.c.h.b16 %v2139
        %v2993 = vunpack.c.l.b16 %v2140
        %v2994 = vunpack.c.h.b16 %v2140
        %v2995 = vunpack.c.l.b16 %v2141
        %v2996 = vunpack.c.h.b16 %v2141
        %v2997 = vunpack.c.l.b16 %v2142
        %v2998 = vunpack.c.h.b16 %v2142
        %v2999 = vunpack.c.l.b16 %v2143
        %v3000 = vunpack.c.h.b16 %v2143
        %v3001 = vunpack.c.l.b16 %v2144
        %v3002 = vunpack.c.h.b16 %v2144
        %v3003 = vunpack.c.l.b16 %v2145
        %v3004 = vunpack.c.h.b16 %v2145
        %v3005 = vunpack.c.l.b16 %v2146
        %v3006 = vunpack.c.h.b16 %v2146
        %v3007 = vunpack.c.l.b16 %v2147
        %v3008 = vunpack.c.h.b16 %v2147
        %v3009 = vunpack.c.l.b16 %v2148
        %v3010 = vunpack.c.h.b16 %v2148
        %v3011 = vunpack.c.l.b16 %v2149
        %v3012 = vunpack.c.h.b16 %v2149
        %v3013 = vunpack.c.l.b16 %v2150
        %v3014 = vunpack.c.h.b16 %v2150
        %v3015 = vunpack.c.l.b16 %v2151
        %v3016 = vunpack.c.h.b16 %v2151
        %v3017 = vunpack.c.l.b16 %v2152
        %v3018 = vunpack.c.h.b16 %v2152
        %v3019 = vunpack.c.l.b16 %v2153
        %v3020 = vunpack.c.h.b16 %v2153
        %v3021 = vunpack.c.l.b16 %v2154
        %v3022 = vunpack.c.h.b16 %v2154
        %v3023 = vunpack.c.l.b16 %v2155
        %v3024 = vunpack.c.h.b16 %v2155
        %v3025 = vunpack.c.l.b16 %v2156
        %v3026 = vunpack.c.h.b16 %v2156
        %v3027 = vunpack.c.l.b16 %v2157
        %v3028 = vunpack.c.h.b16 %v2157
        %v3029 = vunpack.c.l.b16 %v2158
        %v3030 = vunpack.c.h.b16 %v2158
        %v3031 = vunpack.c.l.b16 %v2159
        %v3032 = vunpack.c.h.b16 %v2159
        %v3033 = vunpack.c.l.b16 %v2160
        %v3034 = vunpack.c.h.b16 %v2160
        %v3035 = vunpack.c.l.b16 %v2161
        %v3036 = vunpack.c.h.b16 %v2161
        %v3037 = vunpack.c.l.b16 %v2162
        %v3038 = vunpack.c.h.b16 %v2162
        %v3039 = vunpack.c.l.b16 %v2163
        %v3040 = vunpack.c.h.b16 %v2163
        %v3041 = vunpack.c.l.b16 %v2164
        %v3042 = vunpack.c.h.b16 %v2164
        %v3043 = vunpack.c.l.b16 %v2165
        %v3044 = vunpack.c.h.b16 %v2165
        %v3045 = vunpack.c.l.b16 %v2166
        %v3046 = vunpack.c.h.b16 %v2166
        %v3047 = vunpack.c.l.b16 %v2167
        %v3048 = vunpack.c.h.b16 %v2167
        %v3049 = vunpack.c.l.b16 %v2168
        %v3050 = vunpack.c.h.b16 %v2168
        %v3051 = vunpack.c.l.b16 %v2169
        %v3052 = vunpack.c.h.b16 %v2169
        %v3053 = vunpack.c.l.b16 %v2170
        %v3054 = vunpack.c.h.b16 %v2170
        %v3055 = vunpack.c.l.b16 %v2171
        %v3056 = vunpack.c.h.b16 %v2171
        %v3057 = vunpack.c.l.b16 %v2172
        %v3058 = vunpack.c.h.b16 %v2172
        %v3059 = vunpack.c.l.b16 %v2173
        %v3060 = vunpack.c.h.b16 %v2173
        %v3061 = vunpack.c.l.b16 %v2174
        %v3062 = vunpack.c.h.b16 %v2174
        %v3063 = vunpack.c.l.b16 %v2175
        %v3064 = vunpack.c.h.b16 %v2175
        %v3065 = vunpack.c.l.b16 %v2176
        %v3066 = vunpack.c.h.b16 %v2176
        %v3067 = vunpack.c.l.b16 %v2177
        %v3068 = vunpack.c.h.b16 %v2177
        %v3069 = vunpack.c.l.b16 %v2178
        %v3070 = vunpack.c.h.b16 %v2178
        %v3071 = vunpack.c.l.b16 %v2179
        %v3072 = vunpack.c.h.b16 %v2179
        %v3073 = vunpack.c.l.b16 %v2180
        %v3074 = vunpack.c.h.b16 %v2180
        %v3075 = vunpack.c.l.b16 %v2181
        %v3076 = vunpack.c.h.b16 %v2181
        %v3077 = vunpack.c.l.b16 %v2182
        %v3078 = vunpack.c.h.b16 %v2182
        %v3079 = vunpack.c.l.b16 %v2183
        %v3080 = vunpack.c.h.b16 %v2183
        %v3081 = vunpack.c.l.b16 %v2184
        %v3082 = vunpack.c.h.b16 %v2184
        %v3083 = vunpack.c.l.b16 %v2185
        %v3084 = vunpack.c.h.b16 %v2185
        %v3085 = vunpack.c.l.b16 %v2186
        %v3086 = vunpack.c.h.b16 %v2186
        %v3087 = vunpack.c.l.b16 %v2187
        %v3088 = vunpack.c.h.b16 %v2187
        %v3089 = vunpack.c.l.b16 %v2188
        %v3090 = vunpack.c.h.b16 %v2188
        %v3091 = vunpack.c.l.b16 %v2189
        %v3092 = vunpack.c.h.b16 %v2189
        %v3093 = vunpack.c.l.b16 %v2190
        %v3094 = vunpack.c.h.b16 %v2190
        %v3095 = vunpack.c.l.b16 %v2191
        %v3096 = vunpack.c.h.b16 %v2191
        %v3097 = vunpack.c.l.b16 %v2192
        %v3098 = vunpack.c.h.b16 %v2192
        %v3099 = vunpack.c.l.b16 %v2193
        %v3100 = vunpack.c.h.b16 %v2193
        %v3101 = vunpack.c.l.b16 %v2194
        %v3102 = vunpack.c.h.b16 %v2194
        %v3103 = vunpack.c.l.b16 %v2195
        %v3104 = vunpack.c.h.b16 %v2195
        %v3105 = vunpack.c.l.b16 %v2196
        %v3106 = vunpack.c.h.b16 %v2196
        %v3107 = vunpack.c.l.b16 %v2197
        %v3108 = vunpack.c.h.b16 %v2197
        %v3109 = vunpack.c.l.b16 %v2198
        %v3110 = vunpack.c.h.b16 %v2198
        %v3111 = vunpack.c.l.b16 %v2199
        %v3112 = vunpack.c.h.b16 %v2199
        %v3113 = vunpack.c.l.b16 %v2200
        %v3114 = vunpack.c.h.b16 %v2200
        %v3115 = vunpack.c.l.b16 %v2201
        %v3116 = vunpack.c.h.b16 %v2201
        %v3117 = vunpack.c.l.b16 %v2202
        %v3118 = vunpack.c.h.b16 %v2202
        %v3119 = vunpack.c.l.b16 %v2203
        %v3120 = vunpack.c.h.b16 %v2203
        %v3121 = vunpack.c.l.b16 %v2204
        %v3122 = vunpack.c.h.b16 %v2204
        %v3123 = vunpack.c.l.b16 %v2205
        %v3124 = vunpack.c.h.b16 %v2205
        %v3125 = vunpack.c.l.b16 %v2206
        %v3126 = vunpack.c.h.b16 %v2206
        %v3127 = vunpack.c.l.b16 %v2207
        %v3128 = vunpack.c.h.b16 %v2207
        %v3129 = vunpack.c.l.b16 %v2208
        %v3130 = vunpack.c.h.b16 %v2208
        %v3131 = vunpack.c.l.b16 %v2209
        %v3132 = vunpack.c.h.b16 %v2209
        %v3133 = vpack.c.b16 %v2977, %v2973
        %v3134 = vpack.c.b16 %v2978, %v2974
        %v3135 = vpack.c.b16 %v2979, %v2975
        %v3136 = vpack.c.b16 %v2980, %v2976
        %v3137 = vpack.c.b16 %v2985, %v2981
        %v3138 = vpack.c.b16 %v2986, %v2982
        %v3139 = vpack.c.b16 %v2987, %v2983
        %v3140 = vpack.c.b16 %v2988, %v2984
        %v3141 = vpack.c.b16 %v2993, %v2989
        %v3142 = vpack.c.b16 %v2994, %v2990
        %v3143 = vpack.c.b16 %v2995, %v2991
        %v3144 = vpack.c.b16 %v2996, %v2992
        %v3145 = vpack.c.b16 %v3001, %v2997
        %v3146 = vpack.c.b16 %v3002, %v2998
        %v3147 = vpack.c.b16 %v3003, %v2999
        %v3148 = vpack.c.b16 %v3004, %v3000
        %v3149 = vpack.c.b16 %v3009, %v3005
        %v3150 = vpack.c.b16 %v3010, %v3006
        %v3151 = vpack.c.b16 %v3011, %v3007
        %v3152 = vpack.c.b16 %v3012, %v3008
        %v3153 = vpack.c.b16 %v3017, %v3013
        %v3154 = vpack.c.b16 %v3018, %v3014
        %v3155 = vpack.c.b16 %v3019, %v3015
        %v3156 = vpack.c.b16 %v3020, %v3016
        %v3157 = vpack.c.b16 %v3025, %v3021
        %v3158 = vpack.c.b16 %v3026, %v3022
        %v3159 = vpack.c.b16 %v3027, %v3023
        %v3160 = vpack.c.b16 %v3028, %v3024
        %v3161 = vpack.c.b16 %v3033, %v3029
        %v3162 = vpack.c.b16 %v3034, %v3030
        %v3163 = vpack.c.b16 %v3035, %v3031
        %v3164 = vpack.c.b16 %v3036, %v3032
        %v3165 = vpack.c.b16 %v3041, %v3037
        %v3166 = vpack.c.b16 %v3042, %v3038
        %v3167 = vpack.c.b16 %v3043, %v3039
        %v3168 = vpack.c.b16 %v3044, %v3040
        %v3169 = vpack.c.b16 %v3049, %v3045
        %v3170 = vpack.c.b16 %v3050, %v3046
        %v3171 = vpack.c.b16 %v3051, %v3047
        %v3172 = vpack.c.b16 %v3052, %v3048
        %v3173 = vpack.c.b16 %v3057, %v3053
        %v3174 = vpack.c.b16 %v3058, %v3054
        %v3175 = vpack.c.b16 %v3059, %v3055
        %v3176 = vpack.c.b16 %v3060, %v3056
        %v3177 = vpack.c.b16 %v3065, %v3061
        %v3178 = vpack.c.b16 %v3066, %v3062
        %v3179 = vpack.c.b16 %v3067, %v3063
        %v3180 = vpack.c.b16 %v3068, %v3064
        %v3181 = vpack.c.b16 %v3073, %v3069
        %v3182 = vpack.c.b16 %v3074, %v3070
        %v3183 = vpack.c.b16 %v3075, %v3071
        %v3184 = vpack.c.b16 %v3076, %v3072
        %v3185 = vpack.c.b16 %v3081, %v3077
        %v3186 = vpack.c.b16 %v3082, %v3078
        %v3187 = vpack.c.b16 %v3083, %v3079
        %v3188 = vpack.c.b16 %v3084, %v3080
        %v3189 = vpack.c.b16 %v3089, %v3085
        %v3190 = vpack.c.b16 %v3090, %v3086
        %v3191 = vpack.c.b16 %v3091, %v3087
        %v3192 = vpack.c.b16 %v3092, %v3088
        %v3193 = vpack.c.b16 %v3097, %v3093
        %v3194 = vpack.c.b16 %v3098, %v3094
        %v3195 = vpack.c.b16 %v3099, %v3095
        %v3196 = vpack.c.b16 %v3100, %v3096
        %v3197 = vpack.c.b16 %v3105, %v3101
        %v3198 = vpack.c.b16 %v3106, %v3102
        %v3199 = vpack.c.b16 %v3107, %v3103
        %v3200 = vpack.c.b16 %v3108, %v3104
        %v3201 = vpack.c.b16 %v3113, %v3109
        %v3202 = vpack.c.b16 %v3114, %v3110
        %v3203 = vpack.c.b16 %v3115, %v3111
        %v3204 = vpack.c.b16 %v3116, %v3112
        %v3205 = vpack.c.b16 %v3121, %v3117
        %v3206 = vpack.c.b16 %v3122, %v3118
        %v3207 = vpack.c.b16 %v3123, %v3119
        %v3208 = vpack.c.b16 %v3124, %v3120
        %v3209 = vpack.c.b16 %v3129, %v3125
        %v3210 = vpack.c.b16 %v3130, %v3126
        %v3211 = vpack.c.b16 %v3131, %v3127
        %v3212 = vpack.c.b16 %v3132, %v3128
        %v3294 = vsel %vm1886, %v2890, 0
        %3296 = vmatpush.bf16.msra.mxu0 %v3161
        %3297 = vmatpush.bf16.msra.mxu0 %v3157
        %3298 = vmatpush.bf16.msra.mxu0 %v3153
        %3299 = vmatpush.bf16.msra.mxu0 %v3149
        %3300 = vmatpush.bf16.msra.mxu0 %v3145
        %3301 = vmatpush.bf16.msra.mxu0 %v3141
        %3302 = vmatpush.bf16.msra.mxu0 %v3137
        %3303 = vmatpush.bf16.msra.mxu0 %v3133
        %3304 = vmatmul.bf16.gmra.mxu0 %v2888
        %v3305 = vpop.f32.mrf.mxu0
        %v3306 = vadd.f32 %v2768, %v3305
        %v3307 = vpop.f32.mrf.mxu0
        %3308 = vdwg.mxu0
        %3309 = vmatpush.bf16.msra.mxu0 %v3193
        %3310 = vmatpush.bf16.msra.mxu0 %v3189
        %3311 = vmatpush.bf16.msra.mxu0 %v3185
        %3312 = vmatpush.bf16.msra.mxu0 %v3181
        %3313 = vmatpush.bf16.msra.mxu0 %v3177
        %3314 = vmatpush.bf16.msra.mxu0 %v3173
        %3315 = vmatpush.bf16.msra.mxu0 %v3169
        %3316 = vmatpush.bf16.msra.mxu0 %v3165
        %3317 = vmatmul.bf16.gmra.mxu0 %v2889
        %v3318 = vpop.f32.mrf.mxu0
        %v3319 = vadd.f32 %v3306, %v3318
        %v3320 = vpop.f32.mrf.mxu0
        %3321 = vdwg.mxu0
        %3322 = vmatpush.bf16.msra.mxu0 0
        %3323 = vmatpush.bf16.msra.mxu0 0
        %3324 = vmatpush.bf16.msra.mxu0 0
        %3325 = vmatpush.bf16.msra.mxu0 0
        %3326 = vmatpush.bf16.msra.mxu0 %v3209
        %3327 = vmatpush.bf16.msra.mxu0 %v3205
        %3328 = vmatpush.bf16.msra.mxu0 %v3201
        %3329 = vmatpush.bf16.msra.mxu0 %v3197
        %3330 = vmatmul.bf16.gmra.mxu0 %v3294
        %v3331 = vpop.f32.mrf.mxu0
        %v3332 = vadd.f32 %v3319, %v3331
        %v3333 = vpop.f32.mrf.mxu0
        %3334 = vdwg.mxu0
        %3335 = vmatpush.bf16.msra.mxu0 %v3162
        %3336 = vmatpush.bf16.msra.mxu0 %v3158
        %3337 = vmatpush.bf16.msra.mxu0 %v3154
        %3338 = vmatpush.bf16.msra.mxu0 %v3150
        %3339 = vmatpush.bf16.msra.mxu0 %v3146
        %3340 = vmatpush.bf16.msra.mxu0 %v3142
        %3341 = vmatpush.bf16.msra.mxu0 %v3138
        %3342 = vmatpush.bf16.msra.mxu0 %v3134
        %3343 = vmatmul.bf16.gmra.mxu0 %v2888
        %v3344 = vpop.f32.mrf.mxu0
        %v3345 = vadd.f32 %v2807, %v3344
        %v3346 = vpop.f32.mrf.mxu0
        %3347 = vdwg.mxu0
        %3348 = vmatpush.bf16.msra.mxu0 %v3194
        %3349 = vmatpush.bf16.msra.mxu0 %v3190
        %3350 = vmatpush.bf16.msra.mxu0 %v3186
        %3351 = vmatpush.bf16.msra.mxu0 %v3182
        %3352 = vmatpush.bf16.msra.mxu0 %v3178
        %3353 = vmatpush.bf16.msra.mxu0 %v3174
        %3354 = vmatpush.bf16.msra.mxu0 %v3170
        %3355 = vmatpush.bf16.msra.mxu0 %v3166
        %3356 = vmatmul.bf16.gmra.mxu0 %v2889
        %v3357 = vpop.f32.mrf.mxu0
        %v3358 = vadd.f32 %v3345, %v3357
        %v3359 = vpop.f32.mrf.mxu0
        %3360 = vdwg.mxu0
        %3361 = vmatpush.bf16.msra.mxu0 0
        %3362 = vmatpush.bf16.msra.mxu0 0
        %3363 = vmatpush.bf16.msra.mxu0 0
        %3364 = vmatpush.bf16.msra.mxu0 0
        %3365 = vmatpush.bf16.msra.mxu0 %v3210
        %3366 = vmatpush.bf16.msra.mxu0 %v3206
        %3367 = vmatpush.bf16.msra.mxu0 %v3202
        %3368 = vmatpush.bf16.msra.mxu0 %v3198
        %3369 = vmatmul.bf16.gmra.mxu0 %v3294
        %v3370 = vpop.f32.mrf.mxu0
        %v3371 = vadd.f32 %v3358, %v3370
        %v3372 = vpop.f32.mrf.mxu0
        %3373 = vdwg.mxu0
        %3374 = vmatpush.bf16.msra.mxu0 %v3163
        %3375 = vmatpush.bf16.msra.mxu0 %v3159
        %3376 = vmatpush.bf16.msra.mxu0 %v3155
        %3377 = vmatpush.bf16.msra.mxu0 %v3151
        %3378 = vmatpush.bf16.msra.mxu0 %v3147
        %3379 = vmatpush.bf16.msra.mxu0 %v3143
        %3380 = vmatpush.bf16.msra.mxu0 %v3139
        %3381 = vmatpush.bf16.msra.mxu0 %v3135
        %3382 = vmatmul.bf16.gmra.mxu0 %v2888
        %v3383 = vpop.f32.mrf.mxu0
        %v3384 = vadd.f32 %v2846, %v3383
        %v3385 = vpop.f32.mrf.mxu0
        %3386 = vdwg.mxu0
        %3387 = vmatpush.bf16.msra.mxu0 %v3195
        %3388 = vmatpush.bf16.msra.mxu0 %v3191
        %3389 = vmatpush.bf16.msra.mxu0 %v3187
        %3390 = vmatpush.bf16.msra.mxu0 %v3183
        %3391 = vmatpush.bf16.msra.mxu0 %v3179
        %3392 = vmatpush.bf16.msra.mxu0 %v3175
        %3393 = vmatpush.bf16.msra.mxu0 %v3171
        %3394 = vmatpush.bf16.msra.mxu0 %v3167
        %3395 = vmatmul.bf16.gmra.mxu0 %v2889
        %v3396 = vpop.f32.mrf.mxu0
        %v3397 = vadd.f32 %v3384, %v3396
        %v3398 = vpop.f32.mrf.mxu0
        %3399 = vdwg.mxu0
        %3400 = vmatpush.bf16.msra.mxu0 0
        %3401 = vmatpush.bf16.msra.mxu0 0
        %3402 = vmatpush.bf16.msra.mxu0 0
        %3403 = vmatpush.bf16.msra.mxu0 0
        %3404 = vmatpush.bf16.msra.mxu0 %v3211
        %3405 = vmatpush.bf16.msra.mxu0 %v3207
        %3406 = vmatpush.bf16.msra.mxu0 %v3203
        %3407 = vmatpush.bf16.msra.mxu0 %v3199
        %3408 = vmatmul.bf16.gmra.mxu0 %v3294
        %v3409 = vpop.f32.mrf.mxu0
        %v3410 = vadd.f32 %v3397, %v3409
        %v3411 = vpop.f32.mrf.mxu0
        %3412 = vdwg.mxu0
        %3413 = vmatpush.bf16.msra.mxu0 %v3164
        %3414 = vmatpush.bf16.msra.mxu0 %v3160
        %3415 = vmatpush.bf16.msra.mxu0 %v3156
        %3416 = vmatpush.bf16.msra.mxu0 %v3152
        %3417 = vmatpush.bf16.msra.mxu0 %v3148
        %3418 = vmatpush.bf16.msra.mxu0 %v3144
        %3419 = vmatpush.bf16.msra.mxu0 %v3140
        %3420 = vmatpush.bf16.msra.mxu0 %v3136
        %3421 = vmatmul.bf16.gmra.mxu0 %v2888
        %v3422 = vpop.f32.mrf.mxu0
        %v3423 = vadd.f32 %v2885, %v3422
        %v3424 = vpop.f32.mrf.mxu0
        %3425 = vdwg.mxu0
        %3426 = vmatpush.bf16.msra.mxu0 %v3196
        %3427 = vmatpush.bf16.msra.mxu0 %v3192
        %3428 = vmatpush.bf16.msra.mxu0 %v3188
        %3429 = vmatpush.bf16.msra.mxu0 %v3184
        %3430 = vmatpush.bf16.msra.mxu0 %v3180
        %3431 = vmatpush.bf16.msra.mxu0 %v3176
        %3432 = vmatpush.bf16.msra.mxu0 %v3172
        %3433 = vmatpush.bf16.msra.mxu0 %v3168
        %3434 = vmatmul.bf16.gmra.mxu0 %v2889
        %v3435 = vpop.f32.mrf.mxu0
        %v3436 = vadd.f32 %v3423, %v3435
        %v3437 = vpop.f32.mrf.mxu0
        %3438 = vdwg.mxu0
        %3439 = vmatpush.bf16.msra.mxu0 0
        %3440 = vmatpush.bf16.msra.mxu0 0
        %3441 = vmatpush.bf16.msra.mxu0 0
        %3442 = vmatpush.bf16.msra.mxu0 0
        %3443 = vmatpush.bf16.msra.mxu0 %v3212
        %3444 = vmatpush.bf16.msra.mxu0 %v3208
        %3445 = vmatpush.bf16.msra.mxu0 %v3204
        %3446 = vmatpush.bf16.msra.mxu0 %v3200
        %3447 = vmatmul.bf16.gmra.mxu0 %v3294
        %v3448 = vpop.f32.mrf.mxu0
        %v3449 = vadd.f32 %v3436, %v3448
        %v3450 = vpop.f32.mrf.mxu0
        %3451 = vdwg.mxu0
        %v3452 = vld [vmem:[#allocation3] sm:$0xee]
        %v3453 = vld [vmem:[#allocation3 + $0x8] sm:$0xe]
        %s3454 = scalar_lea.vmem [#allocation11], 1280
        %v3455 = vld [vmem:[%s3454] sm:$0xff]
        %v3456 = vld [vmem:[%s3454 + $0x8] sm:$0xff]
        %v3457 = vld [vmem:[%s3454 + $0x10] sm:$0xff]
        %v3458 = vld [vmem:[%s3454 + $0x18] sm:$0xff]
        %v3459 = vld [vmem:[%s3454 + $0x20] sm:$0xff]
        %v3460 = vld [vmem:[%s3454 + $0x28] sm:$0xff]
        %v3461 = vld [vmem:[%s3454 + $0x30] sm:$0xff]
        %v3462 = vld [vmem:[%s3454 + $0x38] sm:$0xff]
        %v3463 = vld [vmem:[%s3454 + $0x40] sm:$0xff]
        %v3464 = vld [vmem:[%s3454 + $0x48] sm:$0xff]
        %v3465 = vld [vmem:[%s3454 + $0x50] sm:$0xff]
        %v3466 = vld [vmem:[%s3454 + $0x58] sm:$0xff]
        %v3467 = vld [vmem:[%s3454 + $0x60] sm:$0xff]
        %v3468 = vld [vmem:[%s3454 + $0x68] sm:$0xff]
        %v3469 = vld [vmem:[%s3454 + $0x70] sm:$0xff]
        %v3470 = vld [vmem:[%s3454 + $0x78] sm:$0xff]
        %v3471 = vld [vmem:[%s3454 + $0x80] sm:$0xff]
        %v3472 = vld [vmem:[%s3454 + $0x88] sm:$0xff]
        %v3473 = vld [vmem:[%s3454 + $0x90] sm:$0xff]
        %v3474 = vld [vmem:[%s3454 + $0x98] sm:$0xff]
        %v3475 = vld [vmem:[%s3454 + $0xa0] sm:$0xff]
        %v3476 = vld [vmem:[%s3454 + $0xa8] sm:$0xff]
        %v3477 = vld [vmem:[%s3454 + $0xb0] sm:$0xff]
        %v3478 = vld [vmem:[%s3454 + $0xb8] sm:$0xff]
        %v3479 = vld [vmem:[%s3454 + $0xc0] sm:$0xff]
        %v3480 = vld [vmem:[%s3454 + $0xc8] sm:$0xff]
        %v3481 = vld [vmem:[%s3454 + $0xd0] sm:$0xff]
        %v3482 = vld [vmem:[%s3454 + $0xd8] sm:$0xff]
        %v3483 = vld [vmem:[%s3454 + $0xe0] sm:$0xff]
        %v3484 = vld [vmem:[%s3454 + $0xe8] sm:$0xff]
        %v3485 = vld [vmem:[%s3454 + $0xf0] sm:$0xff]
        %v3486 = vld [vmem:[%s3454 + $0xf8] sm:$0xff]
        %v3487 = vld [vmem:[%s3454 + $0x100] sm:$0xff]
        %v3488 = vld [vmem:[%s3454 + $0x108] sm:$0xff]
        %v3489 = vld [vmem:[%s3454 + $0x110] sm:$0xff]
        %v3490 = vld [vmem:[%s3454 + $0x118] sm:$0xff]
        %v3491 = vld [vmem:[%s3454 + $0x120] sm:$0xff]
        %v3492 = vld [vmem:[%s3454 + $0x128] sm:$0xff]
        %v3493 = vld [vmem:[%s3454 + $0x130] sm:$0xff]
        %v3494 = vld [vmem:[%s3454 + $0x138] sm:$0xff]
        %v3495 = vld [vmem:[%s3454 + $0x140] sm:$0xff]
        %v3496 = vld [vmem:[%s3454 + $0x148] sm:$0xff]
        %v3497 = vld [vmem:[%s3454 + $0x150] sm:$0xff]
        %v3498 = vld [vmem:[%s3454 + $0x158] sm:$0xff]
        %v3499 = vld [vmem:[%s3454 + $0x160] sm:$0xff]
        %v3500 = vld [vmem:[%s3454 + $0x168] sm:$0xff]
        %v3501 = vld [vmem:[%s3454 + $0x170] sm:$0xff]
        %v3502 = vld [vmem:[%s3454 + $0x178] sm:$0xff]
        %v3503 = vld [vmem:[%s3454 + $0x180] sm:$0xff]
        %v3504 = vld [vmem:[%s3454 + $0x188] sm:$0xff]
        %v3505 = vld [vmem:[%s3454 + $0x190] sm:$0xff]
        %v3506 = vld [vmem:[%s3454 + $0x198] sm:$0xff]
        %v3507 = vld [vmem:[%s3454 + $0x1a0] sm:$0xff]
        %v3508 = vld [vmem:[%s3454 + $0x1a8] sm:$0xff]
        %v3509 = vld [vmem:[%s3454 + $0x1b0] sm:$0xff]
        %v3510 = vld [vmem:[%s3454 + $0x1b8] sm:$0xff]
        %v3511 = vld [vmem:[%s3454 + $0x1c0] sm:$0xff]
        %v3512 = vld [vmem:[%s3454 + $0x1c8] sm:$0xff]
        %v3513 = vld [vmem:[%s3454 + $0x1d0] sm:$0xff]
        %v3514 = vld [vmem:[%s3454 + $0x1d8] sm:$0xff]
        %v3515 = vld [vmem:[%s3454 + $0x1e0] sm:$0xff]
        %v3516 = vld [vmem:[%s3454 + $0x1e8] sm:$0xff]
        %v3517 = vld [vmem:[%s3454 + $0x1f0] sm:$0xff]
        %v3518 = vld [vmem:[%s3454 + $0x1f8] sm:$0xff]
        %v3519 = vld [vmem:[%s3454 + $0x200] sm:$0xff]
        %v3520 = vld [vmem:[%s3454 + $0x208] sm:$0xff]
        %v3521 = vld [vmem:[%s3454 + $0x210] sm:$0xff]
        %v3522 = vld [vmem:[%s3454 + $0x218] sm:$0xff]
        %v3523 = vld [vmem:[%s3454 + $0x220] sm:$0xff]
        %v3524 = vld [vmem:[%s3454 + $0x228] sm:$0xff]
        %v3525 = vld [vmem:[%s3454 + $0x230] sm:$0xff]
        %v3526 = vld [vmem:[%s3454 + $0x238] sm:$0xff]
        %v3527 = vld [vmem:[%s3454 + $0x240] sm:$0xff]
        %v3528 = vld [vmem:[%s3454 + $0x248] sm:$0xff]
        %v3529 = vld [vmem:[%s3454 + $0x250] sm:$0xff]
        %v3530 = vld [vmem:[%s3454 + $0x258] sm:$0xff]
        %v3531 = vld [vmem:[%s3454 + $0x260] sm:$0xff]
        %v3532 = vld [vmem:[%s3454 + $0x268] sm:$0xff]
        %v3533 = vld [vmem:[%s3454 + $0x270] sm:$0xff]
        %v3534 = vld [vmem:[%s3454 + $0x278] sm:$0xff]
        %v3537 = vunpack.c.l.b16 %v3452
        %v3538 = vunpack.c.h.b16 %v3452
        %v3539 = vunpack.c.l.b16 %v3453
        %v3540 = vpack.c.b16 %v2300, %v3537
        %v3541 = vpack.c.b16 %v2301, %v3538
        %v3542 = vpack.c.b16 %v2302, %v3539
        %v3543 = vrot.slane %v3540, 1
        %v3544 = vrot.slane %v3541, 1
        %v3545 = vrot.slane %v3542, 1
        %v3628 = vunpack.c.l.b16 %v3455
        %v3629 = vunpack.c.h.b16 %v3455
        %v3630 = vunpack.c.l.b16 %v3456
        %v3631 = vunpack.c.h.b16 %v3456
        %v3632 = vunpack.c.l.b16 %v3457
        %v3633 = vunpack.c.h.b16 %v3457
        %v3634 = vunpack.c.l.b16 %v3458
        %v3635 = vunpack.c.h.b16 %v3458
        %v3636 = vunpack.c.l.b16 %v3459
        %v3637 = vunpack.c.h.b16 %v3459
        %v3638 = vunpack.c.l.b16 %v3460
        %v3639 = vunpack.c.h.b16 %v3460
        %v3640 = vunpack.c.l.b16 %v3461
        %v3641 = vunpack.c.h.b16 %v3461
        %v3642 = vunpack.c.l.b16 %v3462
        %v3643 = vunpack.c.h.b16 %v3462
        %v3644 = vunpack.c.l.b16 %v3463
        %v3645 = vunpack.c.h.b16 %v3463
        %v3646 = vunpack.c.l.b16 %v3464
        %v3647 = vunpack.c.h.b16 %v3464
        %v3648 = vunpack.c.l.b16 %v3465
        %v3649 = vunpack.c.h.b16 %v3465
        %v3650 = vunpack.c.l.b16 %v3466
        %v3651 = vunpack.c.h.b16 %v3466
        %v3652 = vunpack.c.l.b16 %v3467
        %v3653 = vunpack.c.h.b16 %v3467
        %v3654 = vunpack.c.l.b16 %v3468
        %v3655 = vunpack.c.h.b16 %v3468
        %v3656 = vunpack.c.l.b16 %v3469
        %v3657 = vunpack.c.h.b16 %v3469
        %v3658 = vunpack.c.l.b16 %v3470
        %v3659 = vunpack.c.h.b16 %v3470
        %v3660 = vunpack.c.l.b16 %v3471
        %v3661 = vunpack.c.h.b16 %v3471
        %v3662 = vunpack.c.l.b16 %v3472
        %v3663 = vunpack.c.h.b16 %v3472
        %v3664 = vunpack.c.l.b16 %v3473
        %v3665 = vunpack.c.h.b16 %v3473
        %v3666 = vunpack.c.l.b16 %v3474
        %v3667 = vunpack.c.h.b16 %v3474
        %v3668 = vunpack.c.l.b16 %v3475
        %v3669 = vunpack.c.h.b16 %v3475
        %v3670 = vunpack.c.l.b16 %v3476
        %v3671 = vunpack.c.h.b16 %v3476
        %v3672 = vunpack.c.l.b16 %v3477
        %v3673 = vunpack.c.h.b16 %v3477
        %v3674 = vunpack.c.l.b16 %v3478
        %v3675 = vunpack.c.h.b16 %v3478
        %v3676 = vunpack.c.l.b16 %v3479
        %v3677 = vunpack.c.h.b16 %v3479
        %v3678 = vunpack.c.l.b16 %v3480
        %v3679 = vunpack.c.h.b16 %v3480
        %v3680 = vunpack.c.l.b16 %v3481
        %v3681 = vunpack.c.h.b16 %v3481
        %v3682 = vunpack.c.l.b16 %v3482
        %v3683 = vunpack.c.h.b16 %v3482
        %v3684 = vunpack.c.l.b16 %v3483
        %v3685 = vunpack.c.h.b16 %v3483
        %v3686 = vunpack.c.l.b16 %v3484
        %v3687 = vunpack.c.h.b16 %v3484
        %v3688 = vunpack.c.l.b16 %v3485
        %v3689 = vunpack.c.h.b16 %v3485
        %v3690 = vunpack.c.l.b16 %v3486
        %v3691 = vunpack.c.h.b16 %v3486
        %v3692 = vunpack.c.l.b16 %v3487
        %v3693 = vunpack.c.h.b16 %v3487
        %v3694 = vunpack.c.l.b16 %v3488
        %v3695 = vunpack.c.h.b16 %v3488
        %v3696 = vunpack.c.l.b16 %v3489
        %v3697 = vunpack.c.h.b16 %v3489
        %v3698 = vunpack.c.l.b16 %v3490
        %v3699 = vunpack.c.h.b16 %v3490
        %v3700 = vunpack.c.l.b16 %v3491
        %v3701 = vunpack.c.h.b16 %v3491
        %v3702 = vunpack.c.l.b16 %v3492
        %v3703 = vunpack.c.h.b16 %v3492
        %v3704 = vunpack.c.l.b16 %v3493
        %v3705 = vunpack.c.h.b16 %v3493
        %v3706 = vunpack.c.l.b16 %v3494
        %v3707 = vunpack.c.h.b16 %v3494
        %v3708 = vunpack.c.l.b16 %v3495
        %v3709 = vunpack.c.h.b16 %v3495
        %v3710 = vunpack.c.l.b16 %v3496
        %v3711 = vunpack.c.h.b16 %v3496
        %v3712 = vunpack.c.l.b16 %v3497
        %v3713 = vunpack.c.h.b16 %v3497
        %v3714 = vunpack.c.l.b16 %v3498
        %v3715 = vunpack.c.h.b16 %v3498
        %v3716 = vunpack.c.l.b16 %v3499
        %v3717 = vunpack.c.h.b16 %v3499
        %v3718 = vunpack.c.l.b16 %v3500
        %v3719 = vunpack.c.h.b16 %v3500
        %v3720 = vunpack.c.l.b16 %v3501
        %v3721 = vunpack.c.h.b16 %v3501
        %v3722 = vunpack.c.l.b16 %v3502
        %v3723 = vunpack.c.h.b16 %v3502
        %v3724 = vunpack.c.l.b16 %v3503
        %v3725 = vunpack.c.h.b16 %v3503
        %v3726 = vunpack.c.l.b16 %v3504
        %v3727 = vunpack.c.h.b16 %v3504
        %v3728 = vunpack.c.l.b16 %v3505
        %v3729 = vunpack.c.h.b16 %v3505
        %v3730 = vunpack.c.l.b16 %v3506
        %v3731 = vunpack.c.h.b16 %v3506
        %v3732 = vunpack.c.l.b16 %v3507
        %v3733 = vunpack.c.h.b16 %v3507
        %v3734 = vunpack.c.l.b16 %v3508
        %v3735 = vunpack.c.h.b16 %v3508
        %v3736 = vunpack.c.l.b16 %v3509
        %v3737 = vunpack.c.h.b16 %v3509
        %v3738 = vunpack.c.l.b16 %v3510
        %v3739 = vunpack.c.h.b16 %v3510
        %v3740 = vunpack.c.l.b16 %v3511
        %v3741 = vunpack.c.h.b16 %v3511
        %v3742 = vunpack.c.l.b16 %v3512
        %v3743 = vunpack.c.h.b16 %v3512
        %v3744 = vunpack.c.l.b16 %v3513
        %v3745 = vunpack.c.h.b16 %v3513
        %v3746 = vunpack.c.l.b16 %v3514
        %v3747 = vunpack.c.h.b16 %v3514
        %v3748 = vunpack.c.l.b16 %v3515
        %v3749 = vunpack.c.h.b16 %v3515
        %v3750 = vunpack.c.l.b16 %v3516
        %v3751 = vunpack.c.h.b16 %v3516
        %v3752 = vunpack.c.l.b16 %v3517
        %v3753 = vunpack.c.h.b16 %v3517
        %v3754 = vunpack.c.l.b16 %v3518
        %v3755 = vunpack.c.h.b16 %v3518
        %v3756 = vunpack.c.l.b16 %v3519
        %v3757 = vunpack.c.h.b16 %v3519
        %v3758 = vunpack.c.l.b16 %v3520
        %v3759 = vunpack.c.h.b16 %v3520
        %v3760 = vunpack.c.l.b16 %v3521
        %v3761 = vunpack.c.h.b16 %v3521
        %v3762 = vunpack.c.l.b16 %v3522
        %v3763 = vunpack.c.h.b16 %v3522
        %v3764 = vunpack.c.l.b16 %v3523
        %v3765 = vunpack.c.h.b16 %v3523
        %v3766 = vunpack.c.l.b16 %v3524
        %v3767 = vunpack.c.h.b16 %v3524
        %v3768 = vunpack.c.l.b16 %v3525
        %v3769 = vunpack.c.h.b16 %v3525
        %v3770 = vunpack.c.l.b16 %v3526
        %v3771 = vunpack.c.h.b16 %v3526
        %v3772 = vunpack.c.l.b16 %v3527
        %v3773 = vunpack.c.h.b16 %v3527
        %v3774 = vunpack.c.l.b16 %v3528
        %v3775 = vunpack.c.h.b16 %v3528
        %v3776 = vunpack.c.l.b16 %v3529
        %v3777 = vunpack.c.h.b16 %v3529
        %v3778 = vunpack.c.l.b16 %v3530
        %v3779 = vunpack.c.h.b16 %v3530
        %v3780 = vunpack.c.l.b16 %v3531
        %v3781 = vunpack.c.h.b16 %v3531
        %v3782 = vunpack.c.l.b16 %v3532
        %v3783 = vunpack.c.h.b16 %v3532
        %v3784 = vunpack.c.l.b16 %v3533
        %v3785 = vunpack.c.h.b16 %v3533
        %v3786 = vunpack.c.l.b16 %v3534
        %v3787 = vunpack.c.h.b16 %v3534
        %v3788 = vpack.c.b16 %v3632, %v3628
        %v3789 = vpack.c.b16 %v3633, %v3629
        %v3790 = vpack.c.b16 %v3634, %v3630
        %v3791 = vpack.c.b16 %v3635, %v3631
        %v3792 = vpack.c.b16 %v3640, %v3636
        %v3793 = vpack.c.b16 %v3641, %v3637
        %v3794 = vpack.c.b16 %v3642, %v3638
        %v3795 = vpack.c.b16 %v3643, %v3639
        %v3796 = vpack.c.b16 %v3648, %v3644
        %v3797 = vpack.c.b16 %v3649, %v3645
        %v3798 = vpack.c.b16 %v3650, %v3646
        %v3799 = vpack.c.b16 %v3651, %v3647
        %v3800 = vpack.c.b16 %v3656, %v3652
        %v3801 = vpack.c.b16 %v3657, %v3653
        %v3802 = vpack.c.b16 %v3658, %v3654
        %v3803 = vpack.c.b16 %v3659, %v3655
        %v3804 = vpack.c.b16 %v3664, %v3660
        %v3805 = vpack.c.b16 %v3665, %v3661
        %v3806 = vpack.c.b16 %v3666, %v3662
        %v3807 = vpack.c.b16 %v3667, %v3663
        %v3808 = vpack.c.b16 %v3672, %v3668
        %v3809 = vpack.c.b16 %v3673, %v3669
        %v3810 = vpack.c.b16 %v3674, %v3670
        %v3811 = vpack.c.b16 %v3675, %v3671
        %v3812 = vpack.c.b16 %v3680, %v3676
        %v3813 = vpack.c.b16 %v3681, %v3677
        %v3814 = vpack.c.b16 %v3682, %v3678
        %v3815 = vpack.c.b16 %v3683, %v3679
        %v3816 = vpack.c.b16 %v3688, %v3684
        %v3817 = vpack.c.b16 %v3689, %v3685
        %v3818 = vpack.c.b16 %v3690, %v3686
        %v3819 = vpack.c.b16 %v3691, %v3687
        %v3820 = vpack.c.b16 %v3696, %v3692
        %v3821 = vpack.c.b16 %v3697, %v3693
        %v3822 = vpack.c.b16 %v3698, %v3694
        %v3823 = vpack.c.b16 %v3699, %v3695
        %v3824 = vpack.c.b16 %v3704, %v3700
        %v3825 = vpack.c.b16 %v3705, %v3701
        %v3826 = vpack.c.b16 %v3706, %v3702
        %v3827 = vpack.c.b16 %v3707, %v3703
        %v3828 = vpack.c.b16 %v3712, %v3708
        %v3829 = vpack.c.b16 %v3713, %v3709
        %v3830 = vpack.c.b16 %v3714, %v3710
        %v3831 = vpack.c.b16 %v3715, %v3711
        %v3832 = vpack.c.b16 %v3720, %v3716
        %v3833 = vpack.c.b16 %v3721, %v3717
        %v3834 = vpack.c.b16 %v3722, %v3718
        %v3835 = vpack.c.b16 %v3723, %v3719
        %v3836 = vpack.c.b16 %v3728, %v3724
        %v3837 = vpack.c.b16 %v3729, %v3725
        %v3838 = vpack.c.b16 %v3730, %v3726
        %v3839 = vpack.c.b16 %v3731, %v3727
        %v3840 = vpack.c.b16 %v3736, %v3732
        %v3841 = vpack.c.b16 %v3737, %v3733
        %v3842 = vpack.c.b16 %v3738, %v3734
        %v3843 = vpack.c.b16 %v3739, %v3735
        %v3844 = vpack.c.b16 %v3744, %v3740
        %v3845 = vpack.c.b16 %v3745, %v3741
        %v3846 = vpack.c.b16 %v3746, %v3742
        %v3847 = vpack.c.b16 %v3747, %v3743
        %v3848 = vpack.c.b16 %v3752, %v3748
        %v3849 = vpack.c.b16 %v3753, %v3749
        %v3850 = vpack.c.b16 %v3754, %v3750
        %v3851 = vpack.c.b16 %v3755, %v3751
        %v3852 = vpack.c.b16 %v3760, %v3756
        %v3853 = vpack.c.b16 %v3761, %v3757
        %v3854 = vpack.c.b16 %v3762, %v3758
        %v3855 = vpack.c.b16 %v3763, %v3759
        %v3856 = vpack.c.b16 %v3768, %v3764
        %v3857 = vpack.c.b16 %v3769, %v3765
        %v3858 = vpack.c.b16 %v3770, %v3766
        %v3859 = vpack.c.b16 %v3771, %v3767
        %v3860 = vpack.c.b16 %v3776, %v3772
        %v3861 = vpack.c.b16 %v3777, %v3773
        %v3862 = vpack.c.b16 %v3778, %v3774
        %v3863 = vpack.c.b16 %v3779, %v3775
        %v3864 = vpack.c.b16 %v3784, %v3780
        %v3865 = vpack.c.b16 %v3785, %v3781
        %v3866 = vpack.c.b16 %v3786, %v3782
        %v3867 = vpack.c.b16 %v3787, %v3783
        %v3949 = vsel %vm1886, %v3545, 0
        %3951 = vmatpush.bf16.msra.mxu0 %v3816
        %3952 = vmatpush.bf16.msra.mxu0 %v3812
        %3953 = vmatpush.bf16.msra.mxu0 %v3808
        %3954 = vmatpush.bf16.msra.mxu0 %v3804
        %3955 = vmatpush.bf16.msra.mxu0 %v3800
        %3956 = vmatpush.bf16.msra.mxu0 %v3796
        %3957 = vmatpush.bf16.msra.mxu0 %v3792
        %3958 = vmatpush.bf16.msra.mxu0 %v3788
        %3959 = vmatmul.bf16.gmra.mxu0 %v3543
        %v3960 = vpop.f32.mrf.mxu0
        %v3961 = vadd.f32 0.0, %v3960
        %v3962 = vpop.f32.mrf.mxu0
        %3963 = vdwg.mxu0
        %3964 = vmatpush.bf16.msra.mxu0 %v3848
        %3965 = vmatpush.bf16.msra.mxu0 %v3844
        %3966 = vmatpush.bf16.msra.mxu0 %v3840
        %3967 = vmatpush.bf16.msra.mxu0 %v3836
        %3968 = vmatpush.bf16.msra.mxu0 %v3832
        %3969 = vmatpush.bf16.msra.mxu0 %v3828
        %3970 = vmatpush.bf16.msra.mxu0 %v3824
        %3971 = vmatpush.bf16.msra.mxu0 %v3820
        %3972 = vmatmul.bf16.gmra.mxu0 %v3544
        %v3973 = vpop.f32.mrf.mxu0
        %v3974 = vadd.f32 %v3961, %v3973
        %v3975 = vpop.f32.mrf.mxu0
        %3976 = vdwg.mxu0
        %3977 = vmatpush.bf16.msra.mxu0 0
        %3978 = vmatpush.bf16.msra.mxu0 0
        %3979 = vmatpush.bf16.msra.mxu0 0
        %3980 = vmatpush.bf16.msra.mxu0 0
        %3981 = vmatpush.bf16.msra.mxu0 %v3864
        %3982 = vmatpush.bf16.msra.mxu0 %v3860
        %3983 = vmatpush.bf16.msra.mxu0 %v3856
        %3984 = vmatpush.bf16.msra.mxu0 %v3852
        %3985 = vmatmul.bf16.gmra.mxu0 %v3949
        %v3986 = vpop.f32.mrf.mxu0
        %v3987 = vadd.f32 %v3974, %v3986
        %v3988 = vpop.f32.mrf.mxu0
        %3989 = vdwg.mxu0
        %3990 = vmatpush.bf16.msra.mxu0 %v3817
        %3991 = vmatpush.bf16.msra.mxu0 %v3813
        %3992 = vmatpush.bf16.msra.mxu0 %v3809
        %3993 = vmatpush.bf16.msra.mxu0 %v3805
        %3994 = vmatpush.bf16.msra.mxu0 %v3801
        %3995 = vmatpush.bf16.msra.mxu0 %v3797
        %3996 = vmatpush.bf16.msra.mxu0 %v3793
        %3997 = vmatpush.bf16.msra.mxu0 %v3789
        %3998 = vmatmul.bf16.gmra.mxu0 %v3543
        %v3999 = vpop.f32.mrf.mxu0
        %v4000 = vadd.f32 0.0, %v3999
        %v4001 = vpop.f32.mrf.mxu0
        %4002 = vdwg.mxu0
        %4003 = vmatpush.bf16.msra.mxu0 %v3849
        %4004 = vmatpush.bf16.msra.mxu0 %v3845
        %4005 = vmatpush.bf16.msra.mxu0 %v3841
        %4006 = vmatpush.bf16.msra.mxu0 %v3837
        %4007 = vmatpush.bf16.msra.mxu0 %v3833
        %4008 = vmatpush.bf16.msra.mxu0 %v3829
        %4009 = vmatpush.bf16.msra.mxu0 %v3825
        %4010 = vmatpush.bf16.msra.mxu0 %v3821
        %4011 = vmatmul.bf16.gmra.mxu0 %v3544
        %v4012 = vpop.f32.mrf.mxu0
        %v4013 = vadd.f32 %v4000, %v4012
        %v4014 = vpop.f32.mrf.mxu0
        %4015 = vdwg.mxu0
        %4016 = vmatpush.bf16.msra.mxu0 0
        %4017 = vmatpush.bf16.msra.mxu0 0
        %4018 = vmatpush.bf16.msra.mxu0 0
        %4019 = vmatpush.bf16.msra.mxu0 0
        %4020 = vmatpush.bf16.msra.mxu0 %v3865
        %4021 = vmatpush.bf16.msra.mxu0 %v3861
        %4022 = vmatpush.bf16.msra.mxu0 %v3857
        %4023 = vmatpush.bf16.msra.mxu0 %v3853
        %4024 = vmatmul.bf16.gmra.mxu0 %v3949
        %v4025 = vpop.f32.mrf.mxu0
        %v4026 = vadd.f32 %v4013, %v4025
        %v4027 = vpop.f32.mrf.mxu0
        %4028 = vdwg.mxu0
        %4029 = vmatpush.bf16.msra.mxu0 %v3818
        %4030 = vmatpush.bf16.msra.mxu0 %v3814
        %4031 = vmatpush.bf16.msra.mxu0 %v3810
        %4032 = vmatpush.bf16.msra.mxu0 %v3806
        %4033 = vmatpush.bf16.msra.mxu0 %v3802
        %4034 = vmatpush.bf16.msra.mxu0 %v3798
        %4035 = vmatpush.bf16.msra.mxu0 %v3794
        %4036 = vmatpush.bf16.msra.mxu0 %v3790
        %4037 = vmatmul.bf16.gmra.mxu0 %v3543
        %v4038 = vpop.f32.mrf.mxu0
        %v4039 = vadd.f32 0.0, %v4038
        %v4040 = vpop.f32.mrf.mxu0
        %4041 = vdwg.mxu0
        %4042 = vmatpush.bf16.msra.mxu0 %v3850
        %4043 = vmatpush.bf16.msra.mxu0 %v3846
        %4044 = vmatpush.bf16.msra.mxu0 %v3842
        %4045 = vmatpush.bf16.msra.mxu0 %v3838
        %4046 = vmatpush.bf16.msra.mxu0 %v3834
        %4047 = vmatpush.bf16.msra.mxu0 %v3830
        %4048 = vmatpush.bf16.msra.mxu0 %v3826
        %4049 = vmatpush.bf16.msra.mxu0 %v3822
        %4050 = vmatmul.bf16.gmra.mxu0 %v3544
        %v4051 = vpop.f32.mrf.mxu0
        %v4052 = vadd.f32 %v4039, %v4051
        %v4053 = vpop.f32.mrf.mxu0
        %4054 = vdwg.mxu0
        %4055 = vmatpush.bf16.msra.mxu0 0
        %4056 = vmatpush.bf16.msra.mxu0 0
        %4057 = vmatpush.bf16.msra.mxu0 0
        %4058 = vmatpush.bf16.msra.mxu0 0
        %4059 = vmatpush.bf16.msra.mxu0 %v3866
        %4060 = vmatpush.bf16.msra.mxu0 %v3862
        %4061 = vmatpush.bf16.msra.mxu0 %v3858
        %4062 = vmatpush.bf16.msra.mxu0 %v3854
        %4063 = vmatmul.bf16.gmra.mxu0 %v3949
        %v4064 = vpop.f32.mrf.mxu0
        %v4065 = vadd.f32 %v4052, %v4064
        %v4066 = vpop.f32.mrf.mxu0
        %4067 = vdwg.mxu0
        %4068 = vmatpush.bf16.msra.mxu0 %v3819
        %4069 = vmatpush.bf16.msra.mxu0 %v3815
        %4070 = vmatpush.bf16.msra.mxu0 %v3811
        %4071 = vmatpush.bf16.msra.mxu0 %v3807
        %4072 = vmatpush.bf16.msra.mxu0 %v3803
        %4073 = vmatpush.bf16.msra.mxu0 %v3799
        %4074 = vmatpush.bf16.msra.mxu0 %v3795
        %4075 = vmatpush.bf16.msra.mxu0 %v3791
        %4076 = vmatmul.bf16.gmra.mxu0 %v3543
        %v4077 = vpop.f32.mrf.mxu0
        %v4078 = vadd.f32 0.0, %v4077
        %v4079 = vpop.f32.mrf.mxu0
        %4080 = vdwg.mxu0
        %4081 = vmatpush.bf16.msra.mxu0 %v3851
        %4082 = vmatpush.bf16.msra.mxu0 %v3847
        %4083 = vmatpush.bf16.msra.mxu0 %v3843
        %4084 = vmatpush.bf16.msra.mxu0 %v3839
        %4085 = vmatpush.bf16.msra.mxu0 %v3835
        %4086 = vmatpush.bf16.msra.mxu0 %v3831
        %4087 = vmatpush.bf16.msra.mxu0 %v3827
        %4088 = vmatpush.bf16.msra.mxu0 %v3823
        %4089 = vmatmul.bf16.gmra.mxu0 %v3544
        %v4090 = vpop.f32.mrf.mxu0
        %v4091 = vadd.f32 %v4078, %v4090
        %v4092 = vpop.f32.mrf.mxu0
        %4093 = vdwg.mxu0
        %4094 = vmatpush.bf16.msra.mxu0 0
        %4095 = vmatpush.bf16.msra.mxu0 0
        %4096 = vmatpush.bf16.msra.mxu0 0
        %4097 = vmatpush.bf16.msra.mxu0 0
        %4098 = vmatpush.bf16.msra.mxu0 %v3867
        %4099 = vmatpush.bf16.msra.mxu0 %v3863
        %4100 = vmatpush.bf16.msra.mxu0 %v3859
        %4101 = vmatpush.bf16.msra.mxu0 %v3855
        %4102 = vmatmul.bf16.gmra.mxu0 %v3949
        %v4103 = vpop.f32.mrf.mxu0
        %v4104 = vadd.f32 %v4091, %v4103
        %v4105 = vpop.f32.mrf.mxu0
        %4106 = vdwg.mxu0
        %v4107 = vadd.f32 %v3332, %v3987
        %v4108 = vadd.f32 %v3371, %v4026
        %v4109 = vadd.f32 %v3410, %v4065
        %v4110 = vadd.f32 %v3449, %v4104
        %v4111 = vld [vmem:[#allocation13] sm:$0xf]
        %v4113 = vperm.slane %v4111, 0
        %v4114 = vperm.slane %v4111, 1
        %v4115 = vperm.slane %v4111, 2
        %v4116 = vperm.slane %v4111, 3
        %v4121 = vadd.f32 %v4107, %v4113
        %v4122 = vadd.f32 %v4108, %v4114
        %v4123 = vadd.f32 %v4109, %v4115
        %v4124 = vadd.f32 %v4110, %v4116
        %v4125 = vmax.f32 %v4121, 0.0
        %v4126 = vmax.f32 %v4122, 0.0
        %v4127 = vmax.f32 %v4123, 0.0
        %v4128 = vmax.f32 %v4124, 0.0
        %v4129 = vrot.slane %v4127, 4
        %v4130 = vsel %vm965, %v4129, %v4125
        %v4131 = vrot.slane %v4125, 4
        %v4132 = vsel %vm965, %v4127, %v4131
        %v4134 = vunpack.c.l.s4 1983009808
        %v4135 = vunpack.c.0.s8 %v4134
        %v4136 = vperm.slane %v4130, %v4135
        %v4138 = vunpack.c.l.s4 1983009808
        %v4139 = vunpack.c.0.s8 %v4138
        %v4140 = vperm.slane %v4132, %v4139
        %v4141 = vrot.slane %v4128, 4
        %v4142 = vsel %vm965, %v4141, %v4126
        %v4143 = vrot.slane %v4126, 4
        %v4144 = vsel %vm965, %v4128, %v4143
        %v4146 = vunpack.c.l.s4 1983009808
        %v4147 = vunpack.c.0.s8 %v4146
        %v4148 = vperm.slane %v4142, %v4147
        %v4150 = vunpack.c.l.s4 1983009808
        %v4151 = vunpack.c.0.s8 %v4150
        %v4152 = vperm.slane %v4144, %v4151
        %v4153 = vrot.slane %v4148, 4
        %v4154 = vsel %vm965, %v4153, %v4136
        %v4155 = vrot.slane %v4136, 4
        %v4156 = vsel %vm965, %v4148, %v4155
        %v4158 = vunpack.c.l.s4 1934713408
        %v4159 = vunpack.c.0.s8 %v4158
        %v4160 = vperm.slane %v4154, %v4159
        %v4162 = vunpack.c.l.s4 1934713408
        %v4163 = vunpack.c.0.s8 %v4162
        %v4164 = vperm.slane %v4156, %v4163
        %v4165 = vrot.slane %v4152, 4
        %v4166 = vsel %vm965, %v4165, %v4140
        %v4167 = vrot.slane %v4140, 4
        %v4168 = vsel %vm965, %v4152, %v4167
        %v4170 = vunpack.c.l.s4 1934713408
        %v4171 = vunpack.c.0.s8 %v4170
        %v4172 = vperm.slane %v4166, %v4171
        %v4174 = vunpack.c.l.s4 1934713408
        %v4175 = vunpack.c.0.s8 %v4174
        %v4176 = vperm.slane %v4168, %v4175
        %v4177 = vrot.slane %v4160, 4
        %v4178 = vsel %vm965, 0.0, %v4177
        %v4179 = vrot.slane %v4164, 4
        %v4180 = vsel %vm965, 0.0, %v4179
        %v4181 = vrot.slane %v4172, 4
        %v4182 = vsel %vm965, 0.0, %v4181
        %v4183 = vrot.slane %v4176, 4
        %v4184 = vsel %vm965, 0.0, %v4183
        %4193 = vrot.lane.b32.xlu0 %v4160, 64
        %v4194 = vpop.permute.xlu0 %4193
        %4195 = vrot.lane.b32.xlu0 %v4178, 64
        %v4196 = vpop.permute.xlu0 %4195
        %4197 = vrot.lane.b32.xlu0 %v4164, 64
        %v4198 = vpop.permute.xlu0 %4197
        %4199 = vrot.lane.b32.xlu0 %v4180, 64
        %v4200 = vpop.permute.xlu0 %4199
        %4201 = vrot.lane.b32.xlu0 %v4172, 64
        %v4202 = vpop.permute.xlu0 %4201
        %4203 = vrot.lane.b32.xlu0 %v4182, 64
        %v4204 = vpop.permute.xlu0 %4203
        %4205 = vrot.lane.b32.xlu0 %v4176, 64
        %v4206 = vpop.permute.xlu0 %4205
        %4207 = vrot.lane.b32.xlu0 %v4184, 64
        %v4208 = vpop.permute.xlu0 %4207
        %v4217 = vmax.f32 %v4160, %v4194
        %v4219 = vunpack.c.l.s4 1983009808
        %v4220 = vunpack.c.0.s8 %v4219
        %v4221 = vperm.slane %v4217, %v4220
        %v4222 = vmax.f32 %v4178, %v4196
        %v4224 = vunpack.c.l.s4 1983009808
        %v4225 = vunpack.c.0.s8 %v4224
        %v4226 = vperm.slane %v4222, %v4225
        %v4227 = vrot.slane %v4226, 4
        %v4228 = vsel %vm965, %v4227, %v4221
        %v4229 = vrot.slane %v4221, 4
        %v4230 = vsel %vm965, %v4226, %v4229
        %v4232 = vunpack.c.l.s4 1934713408
        %v4233 = vunpack.c.0.s8 %v4232
        %v4234 = vperm.slane %v4228, %v4233
        %v4236 = vunpack.c.l.s4 1934713408
        %v4237 = vunpack.c.0.s8 %v4236
        %v4238 = vperm.slane %v4230, %v4237
        %v4239 = vrot.slane %v4234, 4
        %v4240 = vsel %vm965, 0.0, %v4239
        %v4241 = vrot.slane %v4238, 4
        %v4242 = vsel %vm965, 0.0, %v4241
        %v4243 = vmax.f32 %v4164, %v4198
        %v4245 = vunpack.c.l.s4 1983009808
        %v4246 = vunpack.c.0.s8 %v4245
        %v4247 = vperm.slane %v4243, %v4246
        %v4248 = vmax.f32 %v4180, %v4200
        %v4250 = vunpack.c.l.s4 1983009808
        %v4251 = vunpack.c.0.s8 %v4250
        %v4252 = vperm.slane %v4248, %v4251
        %v4253 = vrot.slane %v4252, 4
        %v4254 = vsel %vm965, %v4253, %v4247
        %v4255 = vrot.slane %v4247, 4
        %v4256 = vsel %vm965, %v4252, %v4255
        %v4258 = vunpack.c.l.s4 1934713408
        %v4259 = vunpack.c.0.s8 %v4258
        %v4260 = vperm.slane %v4254, %v4259
        %v4262 = vunpack.c.l.s4 1934713408
        %v4263 = vunpack.c.0.s8 %v4262
        %v4264 = vperm.slane %v4256, %v4263
        %v4265 = vrot.slane %v4260, 4
        %v4266 = vsel %vm965, 0.0, %v4265
        %v4267 = vrot.slane %v4264, 4
        %v4268 = vsel %vm965, 0.0, %v4267
        %v4269 = vmax.f32 %v4172, %v4202
        %v4271 = vunpack.c.l.s4 1983009808
        %v4272 = vunpack.c.0.s8 %v4271
        %v4273 = vperm.slane %v4269, %v4272
        %v4274 = vmax.f32 %v4182, %v4204
        %v4276 = vunpack.c.l.s4 1983009808
        %v4277 = vunpack.c.0.s8 %v4276
        %v4278 = vperm.slane %v4274, %v4277
        %v4279 = vrot.slane %v4278, 4
        %v4280 = vsel %vm965, %v4279, %v4273
        %v4281 = vrot.slane %v4273, 4
        %v4282 = vsel %vm965, %v4278, %v4281
        %v4284 = vunpack.c.l.s4 1934713408
        %v4285 = vunpack.c.0.s8 %v4284
        %v4286 = vperm.slane %v4280, %v4285
        %v4288 = vunpack.c.l.s4 1934713408
        %v4289 = vunpack.c.0.s8 %v4288
        %v4290 = vperm.slane %v4282, %v4289
        %v4291 = vrot.slane %v4286, 4
        %v4292 = vsel %vm965, 0.0, %v4291
        %v4293 = vrot.slane %v4290, 4
        %v4294 = vsel %vm965, 0.0, %v4293
        %v4295 = vmax.f32 %v4176, %v4206
        %v4297 = vunpack.c.l.s4 1983009808
        %v4298 = vunpack.c.0.s8 %v4297
        %v4299 = vperm.slane %v4295, %v4298
        %v4300 = vmax.f32 %v4184, %v4208
        %v4302 = vunpack.c.l.s4 1983009808
        %v4303 = vunpack.c.0.s8 %v4302
        %v4304 = vperm.slane %v4300, %v4303
        %v4305 = vrot.slane %v4304, 4
        %v4306 = vsel %vm965, %v4305, %v4299
        %v4307 = vrot.slane %v4299, 4
        %v4308 = vsel %vm965, %v4304, %v4307
        %v4310 = vunpack.c.l.s4 1934713408
        %v4311 = vunpack.c.0.s8 %v4310
        %v4312 = vperm.slane %v4306, %v4311
        %v4314 = vunpack.c.l.s4 1934713408
        %v4315 = vunpack.c.0.s8 %v4314
        %v4316 = vperm.slane %v4308, %v4315
        %v4317 = vrot.slane %v4312, 4
        %v4318 = vsel %vm965, 0.0, %v4317
        %v4319 = vrot.slane %v4316, 4
        %v4320 = vsel %vm965, 0.0, %v4319
        %4325 = vrot.lane.b32.xlu0 %v4240, 64
        %v4326 = vpop.permute.xlu0 %4325
        %4327 = vrot.lane.b32.xlu0 %v4266, 64
        %v4328 = vpop.permute.xlu0 %4327
        %4329 = vrot.lane.b32.xlu0 %v4292, 64
        %v4330 = vpop.permute.xlu0 %4329
        %4331 = vrot.lane.b32.xlu0 %v4318, 64
        %v4332 = vpop.permute.xlu0 %4331
        %4341 = vrot.lane.b32.xlu0 %v4242, 64
        %v4342 = vpop.permute.xlu0 %4341
        %4343 = vrot.lane.b32.xlu0 %v4268, 64
        %v4344 = vpop.permute.xlu0 %4343
        %4345 = vrot.lane.b32.xlu0 %v4294, 64
        %v4346 = vpop.permute.xlu0 %4345
        %4347 = vrot.lane.b32.xlu0 %v4320, 64
        %v4348 = vpop.permute.xlu0 %4347
        %v4353 = vsel %vm1886, %v4234, %v4326
        %v4354 = vsel %vm1886, %v4260, %v4328
        %v4355 = vsel %vm1886, %v4286, %v4330
        %v4356 = vsel %vm1886, %v4312, %v4332
        %v4357 = vsel %vm1886, %v4238, %v4342
        %v4358 = vsel %vm1886, %v4264, %v4344
        %v4359 = vsel %vm1886, %v4290, %v4346
        %v4360 = vsel %vm1886, %v4316, %v4348
        %v4369 = vrot.slane %v4353, 1
        %v4370 = vrot.slane %v4357, 1
        %v4371 = vrot.slane %v4354, 1
        %v4372 = vrot.slane %v4358, 1
        %v4373 = vrot.slane %v4355, 1
        %v4374 = vrot.slane %v4359, 1
        %v4375 = vrot.slane %v4356, 1
        %v4376 = vrot.slane %v4360, 1
        %v4385 = vmax.f32 %v4353, %v4369
        %v4386 = vmax.f32 %v4357, %v4370
        %v4387 = vmax.f32 %v4354, %v4371
        %v4388 = vmax.f32 %v4358, %v4372
        %v4389 = vmax.f32 %v4355, %v4373
        %v4390 = vmax.f32 %v4359, %v4374
        %v4391 = vmax.f32 %v4356, %v4375
        %v4392 = vmax.f32 %v4360, %v4376
        %v4393 = vld [vmem:[#allocation4] sm:$0x11]
        %v4394 = vsel %vm1997, 0, %v4393
        %4395 = vst [vmem:[#allocation4] sm:$0x11] %v4394
        %v4396 = vld [vmem:[#allocation4 + $0x8] sm:$0x1]
        %v4397 = vsel %vm1993, 0, %v4396
        %4398 = vst [vmem:[#allocation4 + $0x8] sm:$0x1] %v4397
        %vm4399 = vcmask 1042434
        %vm4400 = vsmask.f32 7946
        %vm4401 = vmand %vm4399, %vm4400
        %vm4402 = vcmask 1046534
        %vm4403 = vsmask.f32 7962
        %vm4404 = vmand %vm4402, %vm4403
        %vm4405 = vmor %vm4404, %vm4401
        %v4406 = vld [vmem:[#allocation4] sm:$0x44]
        %v4407 = vsel %vm4405, 0, %v4406
        %4408 = vst [vmem:[#allocation4] sm:$0x44] %v4407
        %v4409 = vld [vmem:[#allocation4 + $0x8] sm:$0x4]
        %v4410 = vsel %vm4401, 0, %v4409
        %4411 = vst [vmem:[#allocation4 + $0x8] sm:$0x4] %v4410
        %vm4412 = vcmask 518144
        %4413 = vst.msk [vmem:[#allocation4] sm:$0x7] %vm4412, 0
        %vm4414 = vcmask 1042944
        %4415 = vst.msk [vmem:[#allocation4 + $0x8] sm:$0x7] %vm4414, 0
        %v4416 = vpack.c.bf16 %v4386, %v4385
        %v4417 = vpack.c.bf16 %v4388, %v4387
        %v4418 = vpack.c.bf16 %v4390, %v4389
        %v4419 = vpack.c.bf16 %v4392, %v4391
        %v4424 = vunpack.c.l.b16 %v4416
        %v4425 = vunpack.c.h.b16 %v4416
        %v4426 = vunpack.c.l.b16 %v4417
        %v4427 = vunpack.c.h.b16 %v4417
        %v4428 = vunpack.c.l.b16 %v4418
        %v4429 = vunpack.c.h.b16 %v4418
        %v4430 = vunpack.c.l.b16 %v4419
        %v4431 = vunpack.c.h.b16 %v4419
        %v4432 = vrot.slane %v4424, 7
        %v4433 = vrot.slane %v4426, 6
        %v4434 = vsel %vm2059, %v4433, %v4432
        %v4435 = vrot.slane %v4428, 5
        %v4436 = vsel %vm2062, %v4435, %v4434
        %v4437 = vrot.slane %v4430, 4
        %v4438 = vsel %vm2065, %v4437, %v4436
        %v4439 = vrot.slane %v4425, 7
        %v4440 = vrot.slane %v4427, 6
        %v4441 = vsel %vm2059, %v4440, %v4439
        %v4442 = vrot.slane %v4429, 5
        %v4443 = vsel %vm2062, %v4442, %v4441
        %v4444 = vrot.slane %v4431, 4
        %v4445 = vsel %vm2065, %v4444, %v4443
        %v4446 = vpack.c.b16 %v4445, %v4438
        %4447 = vrot.lane.b32.xlu0 %v4446, 64
        %v4448 = vpop.permute.xlu0 %4447
        %v4449 = vrot.slane %v4448, 4
        %vm4450 = vcmask 523264
        %v4451 = vsel %vm4450, %v4449, %v4448
        %vm4454 = vcmask 1042944
        %vm4455 = vsmask.f32 2306
        %vm4456 = vmand %vm4454, %vm4455
        %vm4457 = vcmask 1046532
        %vm4458 = vsmask.f32 6418
        %vm4459 = vmand %vm4457, %vm4458
        %vm4460 = vmor %vm4459, %vm4456
        %v4461 = vld [vmem:[#allocation4] sm:$0x77]
        %v4462 = vsel %vm4460, %v4451, %v4461
        %4463 = vst [vmem:[#allocation4] sm:$0x77] %v4462
        %vm4464 = vcmask 518144
        %vm4465 = vmand %vm4464, %vm4455
        %v4466 = vld [vmem:[#allocation4 + $0x8] sm:$0x7]
        %v4467 = vsel %vm4465, %v4449, %v4466
        %4468 = vst [vmem:[#allocation4 + $0x8] sm:$0x7] %v4467
        %v4469 = vld [vmem:[#allocation4] sm:$0x33]
        %v4470 = vld [vmem:[#allocation4 + $0x8] sm:$0x3]
        %v4471 = vld [vmem:[#allocation14] sm:$0xff]
        %v4472 = vld [vmem:[#allocation14 + $0x8] sm:$0xff]
        %v4473 = vld [vmem:[#allocation14 + $0x10] sm:$0xff]
        %v4474 = vld [vmem:[#allocation14 + $0x18] sm:$0xff]
        %v4475 = vld [vmem:[#allocation14 + $0x20] sm:$0xff]
        %v4476 = vld [vmem:[#allocation14 + $0x28] sm:$0xff]
        %v4477 = vld [vmem:[#allocation14 + $0x30] sm:$0xff]
        %v4478 = vld [vmem:[#allocation14 + $0x38] sm:$0xff]
        %v4479 = vld [vmem:[#allocation14 + $0x40] sm:$0xff]
        %v4480 = vld [vmem:[#allocation14 + $0x48] sm:$0xff]
        %v4481 = vld [vmem:[#allocation14 + $0x50] sm:$0xff]
        %v4482 = vld [vmem:[#allocation14 + $0x58] sm:$0xff]
        %v4483 = vld [vmem:[#allocation14 + $0x60] sm:$0xff]
        %v4484 = vld [vmem:[#allocation14 + $0x68] sm:$0xff]
        %v4485 = vld [vmem:[#allocation14 + $0x70] sm:$0xff]
        %v4486 = vld [vmem:[#allocation14 + $0x78] sm:$0xff]
        %v4487 = vld [vmem:[#allocation14 + $0x80] sm:$0xff]
        %v4488 = vld [vmem:[#allocation14 + $0x88] sm:$0xff]
        %v4489 = vld [vmem:[#allocation14 + $0x90] sm:$0xff]
        %v4490 = vld [vmem:[#allocation14 + $0x98] sm:$0xff]
        %v4491 = vld [vmem:[#allocation14 + $0xa0] sm:$0xff]
        %v4492 = vld [vmem:[#allocation14 + $0xa8] sm:$0xff]
        %v4493 = vld [vmem:[#allocation14 + $0xb0] sm:$0xff]
        %v4494 = vld [vmem:[#allocation14 + $0xb8] sm:$0xff]
        %v4495 = vld [vmem:[#allocation14 + $0xc0] sm:$0xff]
        %v4496 = vld [vmem:[#allocation14 + $0xc8] sm:$0xff]
        %v4497 = vld [vmem:[#allocation14 + $0xd0] sm:$0xff]
        %v4498 = vld [vmem:[#allocation14 + $0xd8] sm:$0xff]
        %v4499 = vld [vmem:[#allocation14 + $0xe0] sm:$0xff]
        %v4500 = vld [vmem:[#allocation14 + $0xe8] sm:$0xff]
        %v4501 = vld [vmem:[#allocation14 + $0xf0] sm:$0xff]
        %v4502 = vld [vmem:[#allocation14 + $0xf8] sm:$0xff]
        %v4503 = vld [vmem:[#allocation14 + $0x100] sm:$0xff]
        %v4504 = vld [vmem:[#allocation14 + $0x108] sm:$0xff]
        %v4505 = vld [vmem:[#allocation14 + $0x110] sm:$0xff]
        %v4506 = vld [vmem:[#allocation14 + $0x118] sm:$0xff]
        %v4507 = vld [vmem:[#allocation14 + $0x120] sm:$0xff]
        %v4508 = vld [vmem:[#allocation14 + $0x128] sm:$0xff]
        %v4509 = vld [vmem:[#allocation14 + $0x130] sm:$0xff]
        %v4510 = vld [vmem:[#allocation14 + $0x138] sm:$0xff]
        %v4511 = vld [vmem:[#allocation14 + $0x140] sm:$0xff]
        %v4512 = vld [vmem:[#allocation14 + $0x148] sm:$0xff]
        %v4513 = vld [vmem:[#allocation14 + $0x150] sm:$0xff]
        %v4514 = vld [vmem:[#allocation14 + $0x158] sm:$0xff]
        %v4515 = vld [vmem:[#allocation14 + $0x160] sm:$0xff]
        %v4516 = vld [vmem:[#allocation14 + $0x168] sm:$0xff]
        %v4517 = vld [vmem:[#allocation14 + $0x170] sm:$0xff]
        %v4518 = vld [vmem:[#allocation14 + $0x178] sm:$0xff]
        %v4519 = vld [vmem:[#allocation14 + $0x180] sm:$0xff]
        %v4520 = vld [vmem:[#allocation14 + $0x188] sm:$0xff]
        %v4521 = vld [vmem:[#allocation14 + $0x190] sm:$0xff]
        %v4522 = vld [vmem:[#allocation14 + $0x198] sm:$0xff]
        %v4523 = vld [vmem:[#allocation14 + $0x1a0] sm:$0xff]
        %v4524 = vld [vmem:[#allocation14 + $0x1a8] sm:$0xff]
        %v4525 = vld [vmem:[#allocation14 + $0x1b0] sm:$0xff]
        %v4526 = vld [vmem:[#allocation14 + $0x1b8] sm:$0xff]
        %v4527 = vld [vmem:[#allocation14 + $0x1c0] sm:$0xff]
        %v4528 = vld [vmem:[#allocation14 + $0x1c8] sm:$0xff]
        %v4529 = vld [vmem:[#allocation14 + $0x1d0] sm:$0xff]
        %v4530 = vld [vmem:[#allocation14 + $0x1d8] sm:$0xff]
        %v4531 = vld [vmem:[#allocation14 + $0x1e0] sm:$0xff]
        %v4532 = vld [vmem:[#allocation14 + $0x1e8] sm:$0xff]
        %v4533 = vld [vmem:[#allocation14 + $0x1f0] sm:$0xff]
        %v4534 = vld [vmem:[#allocation14 + $0x1f8] sm:$0xff]
        %v4535 = vld [vmem:[#allocation14 + $0x200] sm:$0xff]
        %v4536 = vld [vmem:[#allocation14 + $0x208] sm:$0xff]
        %v4537 = vld [vmem:[#allocation14 + $0x210] sm:$0xff]
        %v4538 = vld [vmem:[#allocation14 + $0x218] sm:$0xff]
        %v4539 = vld [vmem:[#allocation14 + $0x220] sm:$0xff]
        %v4540 = vld [vmem:[#allocation14 + $0x228] sm:$0xff]
        %v4541 = vld [vmem:[#allocation14 + $0x230] sm:$0xff]
        %v4542 = vld [vmem:[#allocation14 + $0x238] sm:$0xff]
        %v4543 = vld [vmem:[#allocation14 + $0x240] sm:$0xff]
        %v4544 = vld [vmem:[#allocation14 + $0x248] sm:$0xff]
        %v4545 = vld [vmem:[#allocation14 + $0x250] sm:$0xff]
        %v4546 = vld [vmem:[#allocation14 + $0x258] sm:$0xff]
        %v4547 = vld [vmem:[#allocation14 + $0x260] sm:$0xff]
        %v4548 = vld [vmem:[#allocation14 + $0x268] sm:$0xff]
        %v4549 = vld [vmem:[#allocation14 + $0x270] sm:$0xff]
        %v4550 = vld [vmem:[#allocation14 + $0x278] sm:$0xff]
        %v4551 = vld [vmem:[#allocation14 + $0x280] sm:$0xff]
        %v4552 = vld [vmem:[#allocation14 + $0x288] sm:$0xff]
        %v4553 = vld [vmem:[#allocation14 + $0x290] sm:$0xff]
        %v4554 = vld [vmem:[#allocation14 + $0x298] sm:$0xff]
        %v4555 = vld [vmem:[#allocation14 + $0x2a0] sm:$0xff]
        %v4556 = vld [vmem:[#allocation14 + $0x2a8] sm:$0xff]
        %v4557 = vld [vmem:[#allocation14 + $0x2b0] sm:$0xff]
        %v4558 = vld [vmem:[#allocation14 + $0x2b8] sm:$0xff]
        %v4559 = vld [vmem:[#allocation14 + $0x2c0] sm:$0xff]
        %v4560 = vld [vmem:[#allocation14 + $0x2c8] sm:$0xff]
        %v4561 = vld [vmem:[#allocation14 + $0x2d0] sm:$0xff]
        %v4562 = vld [vmem:[#allocation14 + $0x2d8] sm:$0xff]
        %v4563 = vld [vmem:[#allocation14 + $0x2e0] sm:$0xff]
        %v4564 = vld [vmem:[#allocation14 + $0x2e8] sm:$0xff]
        %v4565 = vld [vmem:[#allocation14 + $0x2f0] sm:$0xff]
        %v4566 = vld [vmem:[#allocation14 + $0x2f8] sm:$0xff]
        %v4567 = vld [vmem:[#allocation4] sm:$0x77]
        %v4568 = vld [vmem:[#allocation4 + $0x8] sm:$0x7]
        %s4569 = scalar_lea.vmem [#allocation14], 768
        %v4570 = vld [vmem:[%s4569] sm:$0xff]
        %v4571 = vld [vmem:[%s4569 + $0x8] sm:$0xff]
        %v4572 = vld [vmem:[%s4569 + $0x10] sm:$0xff]
        %v4573 = vld [vmem:[%s4569 + $0x18] sm:$0xff]
        %v4574 = vld [vmem:[%s4569 + $0x20] sm:$0xff]
        %v4575 = vld [vmem:[%s4569 + $0x28] sm:$0xff]
        %v4576 = vld [vmem:[%s4569 + $0x30] sm:$0xff]
        %v4577 = vld [vmem:[%s4569 + $0x38] sm:$0xff]
        %v4578 = vld [vmem:[%s4569 + $0x40] sm:$0xff]
        %v4579 = vld [vmem:[%s4569 + $0x48] sm:$0xff]
        %v4580 = vld [vmem:[%s4569 + $0x50] sm:$0xff]
        %v4581 = vld [vmem:[%s4569 + $0x58] sm:$0xff]
        %v4582 = vld [vmem:[%s4569 + $0x60] sm:$0xff]
        %v4583 = vld [vmem:[%s4569 + $0x68] sm:$0xff]
        %v4584 = vld [vmem:[%s4569 + $0x70] sm:$0xff]
        %v4585 = vld [vmem:[%s4569 + $0x78] sm:$0xff]
        %v4586 = vld [vmem:[%s4569 + $0x80] sm:$0xff]
        %v4587 = vld [vmem:[%s4569 + $0x88] sm:$0xff]
        %v4588 = vld [vmem:[%s4569 + $0x90] sm:$0xff]
        %v4589 = vld [vmem:[%s4569 + $0x98] sm:$0xff]
        %v4590 = vld [vmem:[%s4569 + $0xa0] sm:$0xff]
        %v4591 = vld [vmem:[%s4569 + $0xa8] sm:$0xff]
        %v4592 = vld [vmem:[%s4569 + $0xb0] sm:$0xff]
        %v4593 = vld [vmem:[%s4569 + $0xb8] sm:$0xff]
        %v4594 = vld [vmem:[%s4569 + $0xc0] sm:$0xff]
        %v4595 = vld [vmem:[%s4569 + $0xc8] sm:$0xff]
        %v4596 = vld [vmem:[%s4569 + $0xd0] sm:$0xff]
        %v4597 = vld [vmem:[%s4569 + $0xd8] sm:$0xff]
        %v4598 = vld [vmem:[%s4569 + $0xe0] sm:$0xff]
        %v4599 = vld [vmem:[%s4569 + $0xe8] sm:$0xff]
        %v4600 = vld [vmem:[%s4569 + $0xf0] sm:$0xff]
        %v4601 = vld [vmem:[%s4569 + $0xf8] sm:$0xff]
        %v4602 = vld [vmem:[%s4569 + $0x100] sm:$0xff]
        %v4603 = vld [vmem:[%s4569 + $0x108] sm:$0xff]
        %v4604 = vld [vmem:[%s4569 + $0x110] sm:$0xff]
        %v4605 = vld [vmem:[%s4569 + $0x118] sm:$0xff]
        %v4606 = vld [vmem:[%s4569 + $0x120] sm:$0xff]
        %v4607 = vld [vmem:[%s4569 + $0x128] sm:$0xff]
        %v4608 = vld [vmem:[%s4569 + $0x130] sm:$0xff]
        %v4609 = vld [vmem:[%s4569 + $0x138] sm:$0xff]
        %v4610 = vld [vmem:[%s4569 + $0x140] sm:$0xff]
        %v4611 = vld [vmem:[%s4569 + $0x148] sm:$0xff]
        %v4612 = vld [vmem:[%s4569 + $0x150] sm:$0xff]
        %v4613 = vld [vmem:[%s4569 + $0x158] sm:$0xff]
        %v4614 = vld [vmem:[%s4569 + $0x160] sm:$0xff]
        %v4615 = vld [vmem:[%s4569 + $0x168] sm:$0xff]
        %v4616 = vld [vmem:[%s4569 + $0x170] sm:$0xff]
        %v4617 = vld [vmem:[%s4569 + $0x178] sm:$0xff]
        %v4618 = vld [vmem:[%s4569 + $0x180] sm:$0xff]
        %v4619 = vld [vmem:[%s4569 + $0x188] sm:$0xff]
        %v4620 = vld [vmem:[%s4569 + $0x190] sm:$0xff]
        %v4621 = vld [vmem:[%s4569 + $0x198] sm:$0xff]
        %v4622 = vld [vmem:[%s4569 + $0x1a0] sm:$0xff]
        %v4623 = vld [vmem:[%s4569 + $0x1a8] sm:$0xff]
        %v4624 = vld [vmem:[%s4569 + $0x1b0] sm:$0xff]
        %v4625 = vld [vmem:[%s4569 + $0x1b8] sm:$0xff]
        %v4626 = vld [vmem:[%s4569 + $0x1c0] sm:$0xff]
        %v4627 = vld [vmem:[%s4569 + $0x1c8] sm:$0xff]
        %v4628 = vld [vmem:[%s4569 + $0x1d0] sm:$0xff]
        %v4629 = vld [vmem:[%s4569 + $0x1d8] sm:$0xff]
        %v4630 = vld [vmem:[%s4569 + $0x1e0] sm:$0xff]
        %v4631 = vld [vmem:[%s4569 + $0x1e8] sm:$0xff]
        %v4632 = vld [vmem:[%s4569 + $0x1f0] sm:$0xff]
        %v4633 = vld [vmem:[%s4569 + $0x1f8] sm:$0xff]
        %v4634 = vld [vmem:[%s4569 + $0x200] sm:$0xff]
        %v4635 = vld [vmem:[%s4569 + $0x208] sm:$0xff]
        %v4636 = vld [vmem:[%s4569 + $0x210] sm:$0xff]
        %v4637 = vld [vmem:[%s4569 + $0x218] sm:$0xff]
        %v4638 = vld [vmem:[%s4569 + $0x220] sm:$0xff]
        %v4639 = vld [vmem:[%s4569 + $0x228] sm:$0xff]
        %v4640 = vld [vmem:[%s4569 + $0x230] sm:$0xff]
        %v4641 = vld [vmem:[%s4569 + $0x238] sm:$0xff]
        %v4642 = vld [vmem:[%s4569 + $0x240] sm:$0xff]
        %v4643 = vld [vmem:[%s4569 + $0x248] sm:$0xff]
        %v4644 = vld [vmem:[%s4569 + $0x250] sm:$0xff]
        %v4645 = vld [vmem:[%s4569 + $0x258] sm:$0xff]
        %v4646 = vld [vmem:[%s4569 + $0x260] sm:$0xff]
        %v4647 = vld [vmem:[%s4569 + $0x268] sm:$0xff]
        %v4648 = vld [vmem:[%s4569 + $0x270] sm:$0xff]
        %v4649 = vld [vmem:[%s4569 + $0x278] sm:$0xff]
        %v4650 = vld [vmem:[%s4569 + $0x280] sm:$0xff]
        %v4651 = vld [vmem:[%s4569 + $0x288] sm:$0xff]
        %v4652 = vld [vmem:[%s4569 + $0x290] sm:$0xff]
        %v4653 = vld [vmem:[%s4569 + $0x298] sm:$0xff]
        %v4654 = vld [vmem:[%s4569 + $0x2a0] sm:$0xff]
        %v4655 = vld [vmem:[%s4569 + $0x2a8] sm:$0xff]
        %v4656 = vld [vmem:[%s4569 + $0x2b0] sm:$0xff]
        %v4657 = vld [vmem:[%s4569 + $0x2b8] sm:$0xff]
        %v4658 = vld [vmem:[%s4569 + $0x2c0] sm:$0xff]
        %v4659 = vld [vmem:[%s4569 + $0x2c8] sm:$0xff]
        %v4660 = vld [vmem:[%s4569 + $0x2d0] sm:$0xff]
        %v4661 = vld [vmem:[%s4569 + $0x2d8] sm:$0xff]
        %v4662 = vld [vmem:[%s4569 + $0x2e0] sm:$0xff]
        %v4663 = vld [vmem:[%s4569 + $0x2e8] sm:$0xff]
        %v4664 = vld [vmem:[%s4569 + $0x2f0] sm:$0xff]
        %v4665 = vld [vmem:[%s4569 + $0x2f8] sm:$0xff]
        %v4668 = vunpack.c.l.b16 %v4567
        %v4669 = vunpack.c.h.b16 %v4567
        %v4670 = vunpack.c.l.b16 %v4568
        %v4671 = vpack.c.b16 %v4668, %v4668
        %v4672 = vpack.c.b16 %v4669, %v4669
        %v4673 = vpack.c.b16 %v4670, %v4670
        %v4675 = vshrl.u32 %v4671, 16
        %v4677 = vshll.u32 %v4671, 16
        %v4679 = vrot.slane %v4677, 1
        %v4680 = vor.u32 %v4675, %v4679
        %v4682 = vshrl.u32 %v4672, 16
        %v4684 = vshll.u32 %v4672, 16
        %v4686 = vrot.slane %v4684, 1
        %v4687 = vor.u32 %v4682, %v4686
        %v4689 = vshrl.u32 %v4673, 16
        %v4691 = vshll.u32 %v4673, 16
        %v4693 = vrot.slane %v4691, 1
        %v4694 = vor.u32 %v4689, %v4693
        %v4794 = vunpack.c.l.b16 %v4570
        %v4795 = vunpack.c.h.b16 %v4570
        %v4796 = vunpack.c.l.b16 %v4571
        %v4797 = vunpack.c.h.b16 %v4571
        %v4798 = vunpack.c.l.b16 %v4572
        %v4799 = vunpack.c.h.b16 %v4572
        %v4800 = vunpack.c.l.b16 %v4573
        %v4801 = vunpack.c.h.b16 %v4573
        %v4802 = vunpack.c.l.b16 %v4574
        %v4803 = vunpack.c.h.b16 %v4574
        %v4804 = vunpack.c.l.b16 %v4575
        %v4805 = vunpack.c.h.b16 %v4575
        %v4806 = vunpack.c.l.b16 %v4576
        %v4807 = vunpack.c.h.b16 %v4576
        %v4808 = vunpack.c.l.b16 %v4577
        %v4809 = vunpack.c.h.b16 %v4577
        %v4810 = vunpack.c.l.b16 %v4578
        %v4811 = vunpack.c.h.b16 %v4578
        %v4812 = vunpack.c.l.b16 %v4579
        %v4813 = vunpack.c.h.b16 %v4579
        %v4814 = vunpack.c.l.b16 %v4580
        %v4815 = vunpack.c.h.b16 %v4580
        %v4816 = vunpack.c.l.b16 %v4581
        %v4817 = vunpack.c.h.b16 %v4581
        %v4818 = vunpack.c.l.b16 %v4582
        %v4819 = vunpack.c.h.b16 %v4582
        %v4820 = vunpack.c.l.b16 %v4583
        %v4821 = vunpack.c.h.b16 %v4583
        %v4822 = vunpack.c.l.b16 %v4584
        %v4823 = vunpack.c.h.b16 %v4584
        %v4824 = vunpack.c.l.b16 %v4585
        %v4825 = vunpack.c.h.b16 %v4585
        %v4826 = vunpack.c.l.b16 %v4586
        %v4827 = vunpack.c.h.b16 %v4586
        %v4828 = vunpack.c.l.b16 %v4587
        %v4829 = vunpack.c.h.b16 %v4587
        %v4830 = vunpack.c.l.b16 %v4588
        %v4831 = vunpack.c.h.b16 %v4588
        %v4832 = vunpack.c.l.b16 %v4589
        %v4833 = vunpack.c.h.b16 %v4589
        %v4834 = vunpack.c.l.b16 %v4590
        %v4835 = vunpack.c.h.b16 %v4590
        %v4836 = vunpack.c.l.b16 %v4591
        %v4837 = vunpack.c.h.b16 %v4591
        %v4838 = vunpack.c.l.b16 %v4592
        %v4839 = vunpack.c.h.b16 %v4592
        %v4840 = vunpack.c.l.b16 %v4593
        %v4841 = vunpack.c.h.b16 %v4593
        %v4842 = vunpack.c.l.b16 %v4594
        %v4843 = vunpack.c.h.b16 %v4594
        %v4844 = vunpack.c.l.b16 %v4595
        %v4845 = vunpack.c.h.b16 %v4595
        %v4846 = vunpack.c.l.b16 %v4596
        %v4847 = vunpack.c.h.b16 %v4596
        %v4848 = vunpack.c.l.b16 %v4597
        %v4849 = vunpack.c.h.b16 %v4597
        %v4850 = vunpack.c.l.b16 %v4598
        %v4851 = vunpack.c.h.b16 %v4598
        %v4852 = vunpack.c.l.b16 %v4599
        %v4853 = vunpack.c.h.b16 %v4599
        %v4854 = vunpack.c.l.b16 %v4600
        %v4855 = vunpack.c.h.b16 %v4600
        %v4856 = vunpack.c.l.b16 %v4601
        %v4857 = vunpack.c.h.b16 %v4601
        %v4858 = vunpack.c.l.b16 %v4602
        %v4859 = vunpack.c.h.b16 %v4602
        %v4860 = vunpack.c.l.b16 %v4603
        %v4861 = vunpack.c.h.b16 %v4603
        %v4862 = vunpack.c.l.b16 %v4604
        %v4863 = vunpack.c.h.b16 %v4604
        %v4864 = vunpack.c.l.b16 %v4605
        %v4865 = vunpack.c.h.b16 %v4605
        %v4866 = vunpack.c.l.b16 %v4606
        %v4867 = vunpack.c.h.b16 %v4606
        %v4868 = vunpack.c.l.b16 %v4607
        %v4869 = vunpack.c.h.b16 %v4607
        %v4870 = vunpack.c.l.b16 %v4608
        %v4871 = vunpack.c.h.b16 %v4608
        %v4872 = vunpack.c.l.b16 %v4609
        %v4873 = vunpack.c.h.b16 %v4609
        %v4874 = vunpack.c.l.b16 %v4610
        %v4875 = vunpack.c.h.b16 %v4610
        %v4876 = vunpack.c.l.b16 %v4611
        %v4877 = vunpack.c.h.b16 %v4611
        %v4878 = vunpack.c.l.b16 %v4612
        %v4879 = vunpack.c.h.b16 %v4612
        %v4880 = vunpack.c.l.b16 %v4613
        %v4881 = vunpack.c.h.b16 %v4613
        %v4882 = vunpack.c.l.b16 %v4614
        %v4883 = vunpack.c.h.b16 %v4614
        %v4884 = vunpack.c.l.b16 %v4615
        %v4885 = vunpack.c.h.b16 %v4615
        %v4886 = vunpack.c.l.b16 %v4616
        %v4887 = vunpack.c.h.b16 %v4616
        %v4888 = vunpack.c.l.b16 %v4617
        %v4889 = vunpack.c.h.b16 %v4617
        %v4890 = vunpack.c.l.b16 %v4618
        %v4891 = vunpack.c.h.b16 %v4618
        %v4892 = vunpack.c.l.b16 %v4619
        %v4893 = vunpack.c.h.b16 %v4619
        %v4894 = vunpack.c.l.b16 %v4620
        %v4895 = vunpack.c.h.b16 %v4620
        %v4896 = vunpack.c.l.b16 %v4621
        %v4897 = vunpack.c.h.b16 %v4621
        %v4898 = vunpack.c.l.b16 %v4622
        %v4899 = vunpack.c.h.b16 %v4622
        %v4900 = vunpack.c.l.b16 %v4623
        %v4901 = vunpack.c.h.b16 %v4623
        %v4902 = vunpack.c.l.b16 %v4624
        %v4903 = vunpack.c.h.b16 %v4624
        %v4904 = vunpack.c.l.b16 %v4625
        %v4905 = vunpack.c.h.b16 %v4625
        %v4906 = vunpack.c.l.b16 %v4626
        %v4907 = vunpack.c.h.b16 %v4626
        %v4908 = vunpack.c.l.b16 %v4627
        %v4909 = vunpack.c.h.b16 %v4627
        %v4910 = vunpack.c.l.b16 %v4628
        %v4911 = vunpack.c.h.b16 %v4628
        %v4912 = vunpack.c.l.b16 %v4629
        %v4913 = vunpack.c.h.b16 %v4629
        %v4914 = vunpack.c.l.b16 %v4630
        %v4915 = vunpack.c.h.b16 %v4630
        %v4916 = vunpack.c.l.b16 %v4631
        %v4917 = vunpack.c.h.b16 %v4631
        %v4918 = vunpack.c.l.b16 %v4632
        %v4919 = vunpack.c.h.b16 %v4632
        %v4920 = vunpack.c.l.b16 %v4633
        %v4921 = vunpack.c.h.b16 %v4633
        %v4922 = vunpack.c.l.b16 %v4634
        %v4923 = vunpack.c.h.b16 %v4634
        %v4924 = vunpack.c.l.b16 %v4635
        %v4925 = vunpack.c.h.b16 %v4635
        %v4926 = vunpack.c.l.b16 %v4636
        %v4927 = vunpack.c.h.b16 %v4636
        %v4928 = vunpack.c.l.b16 %v4637
        %v4929 = vunpack.c.h.b16 %v4637
        %v4930 = vunpack.c.l.b16 %v4638
        %v4931 = vunpack.c.h.b16 %v4638
        %v4932 = vunpack.c.l.b16 %v4639
        %v4933 = vunpack.c.h.b16 %v4639
        %v4934 = vunpack.c.l.b16 %v4640
        %v4935 = vunpack.c.h.b16 %v4640
        %v4936 = vunpack.c.l.b16 %v4641
        %v4937 = vunpack.c.h.b16 %v4641
        %v4938 = vunpack.c.l.b16 %v4642
        %v4939 = vunpack.c.h.b16 %v4642
        %v4940 = vunpack.c.l.b16 %v4643
        %v4941 = vunpack.c.h.b16 %v4643
        %v4942 = vunpack.c.l.b16 %v4644
        %v4943 = vunpack.c.h.b16 %v4644
        %v4944 = vunpack.c.l.b16 %v4645
        %v4945 = vunpack.c.h.b16 %v4645
        %v4946 = vunpack.c.l.b16 %v4646
        %v4947 = vunpack.c.h.b16 %v4646
        %v4948 = vunpack.c.l.b16 %v4647
        %v4949 = vunpack.c.h.b16 %v4647
        %v4950 = vunpack.c.l.b16 %v4648
        %v4951 = vunpack.c.h.b16 %v4648
        %v4952 = vunpack.c.l.b16 %v4649
        %v4953 = vunpack.c.h.b16 %v4649
        %v4954 = vunpack.c.l.b16 %v4650
        %v4955 = vunpack.c.h.b16 %v4650
        %v4956 = vunpack.c.l.b16 %v4651
        %v4957 = vunpack.c.h.b16 %v4651
        %v4958 = vunpack.c.l.b16 %v4652
        %v4959 = vunpack.c.h.b16 %v4652
        %v4960 = vunpack.c.l.b16 %v4653
        %v4961 = vunpack.c.h.b16 %v4653
        %v4962 = vunpack.c.l.b16 %v4654
        %v4963 = vunpack.c.h.b16 %v4654
        %v4964 = vunpack.c.l.b16 %v4655
        %v4965 = vunpack.c.h.b16 %v4655
        %v4966 = vunpack.c.l.b16 %v4656
        %v4967 = vunpack.c.h.b16 %v4656
        %v4968 = vunpack.c.l.b16 %v4657
        %v4969 = vunpack.c.h.b16 %v4657
        %v4970 = vunpack.c.l.b16 %v4658
        %v4971 = vunpack.c.h.b16 %v4658
        %v4972 = vunpack.c.l.b16 %v4659
        %v4973 = vunpack.c.h.b16 %v4659
        %v4974 = vunpack.c.l.b16 %v4660
        %v4975 = vunpack.c.h.b16 %v4660
        %v4976 = vunpack.c.l.b16 %v4661
        %v4977 = vunpack.c.h.b16 %v4661
        %v4978 = vunpack.c.l.b16 %v4662
        %v4979 = vunpack.c.h.b16 %v4662
        %v4980 = vunpack.c.l.b16 %v4663
        %v4981 = vunpack.c.h.b16 %v4663
        %v4982 = vunpack.c.l.b16 %v4664
        %v4983 = vunpack.c.h.b16 %v4664
        %v4984 = vunpack.c.l.b16 %v4665
        %v4985 = vunpack.c.h.b16 %v4665
        %v4986 = vpack.c.b16 %v4798, %v4794
        %v4987 = vpack.c.b16 %v4799, %v4795
        %v4988 = vpack.c.b16 %v4800, %v4796
        %v4989 = vpack.c.b16 %v4801, %v4797
        %v4990 = vpack.c.b16 %v4806, %v4802
        %v4991 = vpack.c.b16 %v4807, %v4803
        %v4992 = vpack.c.b16 %v4808, %v4804
        %v4993 = vpack.c.b16 %v4809, %v4805
        %v4994 = vpack.c.b16 %v4814, %v4810
        %v4995 = vpack.c.b16 %v4815, %v4811
        %v4996 = vpack.c.b16 %v4816, %v4812
        %v4997 = vpack.c.b16 %v4817, %v4813
        %v4998 = vpack.c.b16 %v4822, %v4818
        %v4999 = vpack.c.b16 %v4823, %v4819
        %v5000 = vpack.c.b16 %v4824, %v4820
        %v5001 = vpack.c.b16 %v4825, %v4821
        %v5002 = vpack.c.b16 %v4830, %v4826
        %v5003 = vpack.c.b16 %v4831, %v4827
        %v5004 = vpack.c.b16 %v4832, %v4828
        %v5005 = vpack.c.b16 %v4833, %v4829
        %v5006 = vpack.c.b16 %v4838, %v4834
        %v5007 = vpack.c.b16 %v4839, %v4835
        %v5008 = vpack.c.b16 %v4840, %v4836
        %v5009 = vpack.c.b16 %v4841, %v4837
        %v5010 = vpack.c.b16 %v4846, %v4842
        %v5011 = vpack.c.b16 %v4847, %v4843
        %v5012 = vpack.c.b16 %v4848, %v4844
        %v5013 = vpack.c.b16 %v4849, %v4845
        %v5014 = vpack.c.b16 %v4854, %v4850
        %v5015 = vpack.c.b16 %v4855, %v4851
        %v5016 = vpack.c.b16 %v4856, %v4852
        %v5017 = vpack.c.b16 %v4857, %v4853
        %v5018 = vpack.c.b16 %v4862, %v4858
        %v5019 = vpack.c.b16 %v4863, %v4859
        %v5020 = vpack.c.b16 %v4864, %v4860
        %v5021 = vpack.c.b16 %v4865, %v4861
        %v5022 = vpack.c.b16 %v4870, %v4866
        %v5023 = vpack.c.b16 %v4871, %v4867
        %v5024 = vpack.c.b16 %v4872, %v4868
        %v5025 = vpack.c.b16 %v4873, %v4869
        %v5026 = vpack.c.b16 %v4878, %v4874
        %v5027 = vpack.c.b16 %v4879, %v4875
        %v5028 = vpack.c.b16 %v4880, %v4876
        %v5029 = vpack.c.b16 %v4881, %v4877
        %v5030 = vpack.c.b16 %v4886, %v4882
        %v5031 = vpack.c.b16 %v4887, %v4883
        %v5032 = vpack.c.b16 %v4888, %v4884
        %v5033 = vpack.c.b16 %v4889, %v4885
        %v5034 = vpack.c.b16 %v4894, %v4890
        %v5035 = vpack.c.b16 %v4895, %v4891
        %v5036 = vpack.c.b16 %v4896, %v4892
        %v5037 = vpack.c.b16 %v4897, %v4893
        %v5038 = vpack.c.b16 %v4902, %v4898
        %v5039 = vpack.c.b16 %v4903, %v4899
        %v5040 = vpack.c.b16 %v4904, %v4900
        %v5041 = vpack.c.b16 %v4905, %v4901
        %v5042 = vpack.c.b16 %v4910, %v4906
        %v5043 = vpack.c.b16 %v4911, %v4907
        %v5044 = vpack.c.b16 %v4912, %v4908
        %v5045 = vpack.c.b16 %v4913, %v4909
        %v5046 = vpack.c.b16 %v4918, %v4914
        %v5047 = vpack.c.b16 %v4919, %v4915
        %v5048 = vpack.c.b16 %v4920, %v4916
        %v5049 = vpack.c.b16 %v4921, %v4917
        %v5050 = vpack.c.b16 %v4926, %v4922
        %v5051 = vpack.c.b16 %v4927, %v4923
        %v5052 = vpack.c.b16 %v4928, %v4924
        %v5053 = vpack.c.b16 %v4929, %v4925
        %v5054 = vpack.c.b16 %v4934, %v4930
        %v5055 = vpack.c.b16 %v4935, %v4931
        %v5056 = vpack.c.b16 %v4936, %v4932
        %v5057 = vpack.c.b16 %v4937, %v4933
        %v5058 = vpack.c.b16 %v4942, %v4938
        %v5059 = vpack.c.b16 %v4943, %v4939
        %v5060 = vpack.c.b16 %v4944, %v4940
        %v5061 = vpack.c.b16 %v4945, %v4941
        %v5062 = vpack.c.b16 %v4950, %v4946
        %v5063 = vpack.c.b16 %v4951, %v4947
        %v5064 = vpack.c.b16 %v4952, %v4948
        %v5065 = vpack.c.b16 %v4953, %v4949
        %v5066 = vpack.c.b16 %v4958, %v4954
        %v5067 = vpack.c.b16 %v4959, %v4955
        %v5068 = vpack.c.b16 %v4960, %v4956
        %v5069 = vpack.c.b16 %v4961, %v4957
        %v5070 = vpack.c.b16 %v4966, %v4962
        %v5071 = vpack.c.b16 %v4967, %v4963
        %v5072 = vpack.c.b16 %v4968, %v4964
        %v5073 = vpack.c.b16 %v4969, %v4965
        %v5074 = vpack.c.b16 %v4974, %v4970
        %v5075 = vpack.c.b16 %v4975, %v4971
        %v5076 = vpack.c.b16 %v4976, %v4972
        %v5077 = vpack.c.b16 %v4977, %v4973
        %v5078 = vpack.c.b16 %v4982, %v4978
        %v5079 = vpack.c.b16 %v4983, %v4979
        %v5080 = vpack.c.b16 %v4984, %v4980
        %v5081 = vpack.c.b16 %v4985, %v4981
        %5178 = vmatpush.bf16.msra.mxu0 %v5014
        %5179 = vmatpush.bf16.msra.mxu0 %v5010
        %5180 = vmatpush.bf16.msra.mxu0 %v5006
        %5181 = vmatpush.bf16.msra.mxu0 %v5002
        %5182 = vmatpush.bf16.msra.mxu0 %v4998
        %5183 = vmatpush.bf16.msra.mxu0 %v4994
        %5184 = vmatpush.bf16.msra.mxu0 %v4990
        %5185 = vmatpush.bf16.msra.mxu0 %v4986
        %5186 = vmatmul.bf16.gmra.mxu0 %v4680
        %v5187 = vpop.f32.mrf.mxu0
        %v5188 = vadd.f32 0.0, %v5187
        %v5189 = vpop.f32.mrf.mxu0
        %5190 = vdwg.mxu0
        %5191 = vmatpush.bf16.msra.mxu0 %v5046
        %5192 = vmatpush.bf16.msra.mxu0 %v5042
        %5193 = vmatpush.bf16.msra.mxu0 %v5038
        %5194 = vmatpush.bf16.msra.mxu0 %v5034
        %5195 = vmatpush.bf16.msra.mxu0 %v5030
        %5196 = vmatpush.bf16.msra.mxu0 %v5026
        %5197 = vmatpush.bf16.msra.mxu0 %v5022
        %5198 = vmatpush.bf16.msra.mxu0 %v5018
        %5199 = vmatmul.bf16.gmra.mxu0 %v4687
        %v5200 = vpop.f32.mrf.mxu0
        %v5201 = vadd.f32 %v5188, %v5200
        %v5202 = vpop.f32.mrf.mxu0
        %5203 = vdwg.mxu0
        %5204 = vmatpush.bf16.msra.mxu0 %v5078
        %5205 = vmatpush.bf16.msra.mxu0 %v5074
        %5206 = vmatpush.bf16.msra.mxu0 %v5070
        %5207 = vmatpush.bf16.msra.mxu0 %v5066
        %5208 = vmatpush.bf16.msra.mxu0 %v5062
        %5209 = vmatpush.bf16.msra.mxu0 %v5058
        %5210 = vmatpush.bf16.msra.mxu0 %v5054
        %5211 = vmatpush.bf16.msra.mxu0 %v5050
        %5212 = vmatmul.bf16.gmra.mxu0 %v4694
        %v5213 = vpop.f32.mrf.mxu0
        %v5214 = vadd.f32 %v5201, %v5213
        %v5215 = vpop.f32.mrf.mxu0
        %5216 = vdwg.mxu0
        %5217 = vmatpush.bf16.msra.mxu0 %v5015
        %5218 = vmatpush.bf16.msra.mxu0 %v5011
        %5219 = vmatpush.bf16.msra.mxu0 %v5007
        %5220 = vmatpush.bf16.msra.mxu0 %v5003
        %5221 = vmatpush.bf16.msra.mxu0 %v4999
        %5222 = vmatpush.bf16.msra.mxu0 %v4995
        %5223 = vmatpush.bf16.msra.mxu0 %v4991
        %5224 = vmatpush.bf16.msra.mxu0 %v4987
        %5225 = vmatmul.bf16.gmra.mxu0 %v4680
        %v5226 = vpop.f32.mrf.mxu0
        %v5227 = vadd.f32 0.0, %v5226
        %v5228 = vpop.f32.mrf.mxu0
        %5229 = vdwg.mxu0
        %5230 = vmatpush.bf16.msra.mxu0 %v5047
        %5231 = vmatpush.bf16.msra.mxu0 %v5043
        %5232 = vmatpush.bf16.msra.mxu0 %v5039
        %5233 = vmatpush.bf16.msra.mxu0 %v5035
        %5234 = vmatpush.bf16.msra.mxu0 %v5031
        %5235 = vmatpush.bf16.msra.mxu0 %v5027
        %5236 = vmatpush.bf16.msra.mxu0 %v5023
        %5237 = vmatpush.bf16.msra.mxu0 %v5019
        %5238 = vmatmul.bf16.gmra.mxu0 %v4687
        %v5239 = vpop.f32.mrf.mxu0
        %v5240 = vadd.f32 %v5227, %v5239
        %v5241 = vpop.f32.mrf.mxu0
        %5242 = vdwg.mxu0
        %5243 = vmatpush.bf16.msra.mxu0 %v5079
        %5244 = vmatpush.bf16.msra.mxu0 %v5075
        %5245 = vmatpush.bf16.msra.mxu0 %v5071
        %5246 = vmatpush.bf16.msra.mxu0 %v5067
        %5247 = vmatpush.bf16.msra.mxu0 %v5063
        %5248 = vmatpush.bf16.msra.mxu0 %v5059
        %5249 = vmatpush.bf16.msra.mxu0 %v5055
        %5250 = vmatpush.bf16.msra.mxu0 %v5051
        %5251 = vmatmul.bf16.gmra.mxu0 %v4694
        %v5252 = vpop.f32.mrf.mxu0
        %v5253 = vadd.f32 %v5240, %v5252
        %v5254 = vpop.f32.mrf.mxu0
        %5255 = vdwg.mxu0
        %5256 = vmatpush.bf16.msra.mxu0 %v5016
        %5257 = vmatpush.bf16.msra.mxu0 %v5012
        %5258 = vmatpush.bf16.msra.mxu0 %v5008
        %5259 = vmatpush.bf16.msra.mxu0 %v5004
        %5260 = vmatpush.bf16.msra.mxu0 %v5000
        %5261 = vmatpush.bf16.msra.mxu0 %v4996
        %5262 = vmatpush.bf16.msra.mxu0 %v4992
        %5263 = vmatpush.bf16.msra.mxu0 %v4988
        %5264 = vmatmul.bf16.gmra.mxu0 %v4680
        %v5265 = vpop.f32.mrf.mxu0
        %v5266 = vadd.f32 0.0, %v5265
        %v5267 = vpop.f32.mrf.mxu0
        %5268 = vdwg.mxu0
        %5269 = vmatpush.bf16.msra.mxu0 %v5048
        %5270 = vmatpush.bf16.msra.mxu0 %v5044
        %5271 = vmatpush.bf16.msra.mxu0 %v5040
        %5272 = vmatpush.bf16.msra.mxu0 %v5036
        %5273 = vmatpush.bf16.msra.mxu0 %v5032
        %5274 = vmatpush.bf16.msra.mxu0 %v5028
        %5275 = vmatpush.bf16.msra.mxu0 %v5024
        %5276 = vmatpush.bf16.msra.mxu0 %v5020
        %5277 = vmatmul.bf16.gmra.mxu0 %v4687
        %v5278 = vpop.f32.mrf.mxu0
        %v5279 = vadd.f32 %v5266, %v5278
        %v5280 = vpop.f32.mrf.mxu0
        %5281 = vdwg.mxu0
        %5282 = vmatpush.bf16.msra.mxu0 %v5080
        %5283 = vmatpush.bf16.msra.mxu0 %v5076
        %5284 = vmatpush.bf16.msra.mxu0 %v5072
        %5285 = vmatpush.bf16.msra.mxu0 %v5068
        %5286 = vmatpush.bf16.msra.mxu0 %v5064
        %5287 = vmatpush.bf16.msra.mxu0 %v5060
        %5288 = vmatpush.bf16.msra.mxu0 %v5056
        %5289 = vmatpush.bf16.msra.mxu0 %v5052
        %5290 = vmatmul.bf16.gmra.mxu0 %v4694
        %v5291 = vpop.f32.mrf.mxu0
        %v5292 = vadd.f32 %v5279, %v5291
        %v5293 = vpop.f32.mrf.mxu0
        %5294 = vdwg.mxu0
        %5295 = vmatpush.bf16.msra.mxu0 %v5017
        %5296 = vmatpush.bf16.msra.mxu0 %v5013
        %5297 = vmatpush.bf16.msra.mxu0 %v5009
        %5298 = vmatpush.bf16.msra.mxu0 %v5005
        %5299 = vmatpush.bf16.msra.mxu0 %v5001
        %5300 = vmatpush.bf16.msra.mxu0 %v4997
        %5301 = vmatpush.bf16.msra.mxu0 %v4993
        %5302 = vmatpush.bf16.msra.mxu0 %v4989
        %5303 = vmatmul.bf16.gmra.mxu0 %v4680
        %v5304 = vpop.f32.mrf.mxu0
        %v5305 = vadd.f32 0.0, %v5304
        %v5306 = vpop.f32.mrf.mxu0
        %5307 = vdwg.mxu0
        %5308 = vmatpush.bf16.msra.mxu0 %v5049
        %5309 = vmatpush.bf16.msra.mxu0 %v5045
        %5310 = vmatpush.bf16.msra.mxu0 %v5041
        %5311 = vmatpush.bf16.msra.mxu0 %v5037
        %5312 = vmatpush.bf16.msra.mxu0 %v5033
        %5313 = vmatpush.bf16.msra.mxu0 %v5029
        %5314 = vmatpush.bf16.msra.mxu0 %v5025
        %5315 = vmatpush.bf16.msra.mxu0 %v5021
        %5316 = vmatmul.bf16.gmra.mxu0 %v4687
        %v5317 = vpop.f32.mrf.mxu0
        %v5318 = vadd.f32 %v5305, %v5317
        %v5319 = vpop.f32.mrf.mxu0
        %5320 = vdwg.mxu0
        %5321 = vmatpush.bf16.msra.mxu0 %v5081
        %5322 = vmatpush.bf16.msra.mxu0 %v5077
        %5323 = vmatpush.bf16.msra.mxu0 %v5073
        %5324 = vmatpush.bf16.msra.mxu0 %v5069
        %5325 = vmatpush.bf16.msra.mxu0 %v5065
        %5326 = vmatpush.bf16.msra.mxu0 %v5061
        %5327 = vmatpush.bf16.msra.mxu0 %v5057
        %5328 = vmatpush.bf16.msra.mxu0 %v5053
        %5329 = vmatmul.bf16.gmra.mxu0 %v4694
        %v5330 = vpop.f32.mrf.mxu0
        %v5331 = vadd.f32 %v5318, %v5330
        %v5332 = vpop.f32.mrf.mxu0
        %5333 = vdwg.mxu0
        %v5336 = vunpack.c.l.b16 %v4469
        %v5337 = vunpack.c.h.b16 %v4469
        %v5338 = vunpack.c.l.b16 %v4470
        %v5339 = vpack.c.b16 %v5336, %v5336
        %v5340 = vpack.c.b16 %v5337, %v5337
        %v5341 = vpack.c.b16 %v5338, %v5338
        %v5441 = vunpack.c.l.b16 %v4471
        %v5442 = vunpack.c.h.b16 %v4471
        %v5443 = vunpack.c.l.b16 %v4472
        %v5444 = vunpack.c.h.b16 %v4472
        %v5445 = vunpack.c.l.b16 %v4473
        %v5446 = vunpack.c.h.b16 %v4473
        %v5447 = vunpack.c.l.b16 %v4474
        %v5448 = vunpack.c.h.b16 %v4474
        %v5449 = vunpack.c.l.b16 %v4475
        %v5450 = vunpack.c.h.b16 %v4475
        %v5451 = vunpack.c.l.b16 %v4476
        %v5452 = vunpack.c.h.b16 %v4476
        %v5453 = vunpack.c.l.b16 %v4477
        %v5454 = vunpack.c.h.b16 %v4477
        %v5455 = vunpack.c.l.b16 %v4478
        %v5456 = vunpack.c.h.b16 %v4478
        %v5457 = vunpack.c.l.b16 %v4479
        %v5458 = vunpack.c.h.b16 %v4479
        %v5459 = vunpack.c.l.b16 %v4480
        %v5460 = vunpack.c.h.b16 %v4480
        %v5461 = vunpack.c.l.b16 %v4481
        %v5462 = vunpack.c.h.b16 %v4481
        %v5463 = vunpack.c.l.b16 %v4482
        %v5464 = vunpack.c.h.b16 %v4482
        %v5465 = vunpack.c.l.b16 %v4483
        %v5466 = vunpack.c.h.b16 %v4483
        %v5467 = vunpack.c.l.b16 %v4484
        %v5468 = vunpack.c.h.b16 %v4484
        %v5469 = vunpack.c.l.b16 %v4485
        %v5470 = vunpack.c.h.b16 %v4485
        %v5471 = vunpack.c.l.b16 %v4486
        %v5472 = vunpack.c.h.b16 %v4486
        %v5473 = vunpack.c.l.b16 %v4487
        %v5474 = vunpack.c.h.b16 %v4487
        %v5475 = vunpack.c.l.b16 %v4488
        %v5476 = vunpack.c.h.b16 %v4488
        %v5477 = vunpack.c.l.b16 %v4489
        %v5478 = vunpack.c.h.b16 %v4489
        %v5479 = vunpack.c.l.b16 %v4490
        %v5480 = vunpack.c.h.b16 %v4490
        %v5481 = vunpack.c.l.b16 %v4491
        %v5482 = vunpack.c.h.b16 %v4491
        %v5483 = vunpack.c.l.b16 %v4492
        %v5484 = vunpack.c.h.b16 %v4492
        %v5485 = vunpack.c.l.b16 %v4493
        %v5486 = vunpack.c.h.b16 %v4493
        %v5487 = vunpack.c.l.b16 %v4494
        %v5488 = vunpack.c.h.b16 %v4494
        %v5489 = vunpack.c.l.b16 %v4495
        %v5490 = vunpack.c.h.b16 %v4495
        %v5491 = vunpack.c.l.b16 %v4496
        %v5492 = vunpack.c.h.b16 %v4496
        %v5493 = vunpack.c.l.b16 %v4497
        %v5494 = vunpack.c.h.b16 %v4497
        %v5495 = vunpack.c.l.b16 %v4498
        %v5496 = vunpack.c.h.b16 %v4498
        %v5497 = vunpack.c.l.b16 %v4499
        %v5498 = vunpack.c.h.b16 %v4499
        %v5499 = vunpack.c.l.b16 %v4500
        %v5500 = vunpack.c.h.b16 %v4500
        %v5501 = vunpack.c.l.b16 %v4501
        %v5502 = vunpack.c.h.b16 %v4501
        %v5503 = vunpack.c.l.b16 %v4502
        %v5504 = vunpack.c.h.b16 %v4502
        %v5505 = vunpack.c.l.b16 %v4503
        %v5506 = vunpack.c.h.b16 %v4503
        %v5507 = vunpack.c.l.b16 %v4504
        %v5508 = vunpack.c.h.b16 %v4504
        %v5509 = vunpack.c.l.b16 %v4505
        %v5510 = vunpack.c.h.b16 %v4505
        %v5511 = vunpack.c.l.b16 %v4506
        %v5512 = vunpack.c.h.b16 %v4506
        %v5513 = vunpack.c.l.b16 %v4507
        %v5514 = vunpack.c.h.b16 %v4507
        %v5515 = vunpack.c.l.b16 %v4508
        %v5516 = vunpack.c.h.b16 %v4508
        %v5517 = vunpack.c.l.b16 %v4509
        %v5518 = vunpack.c.h.b16 %v4509
        %v5519 = vunpack.c.l.b16 %v4510
        %v5520 = vunpack.c.h.b16 %v4510
        %v5521 = vunpack.c.l.b16 %v4511
        %v5522 = vunpack.c.h.b16 %v4511
        %v5523 = vunpack.c.l.b16 %v4512
        %v5524 = vunpack.c.h.b16 %v4512
        %v5525 = vunpack.c.l.b16 %v4513
        %v5526 = vunpack.c.h.b16 %v4513
        %v5527 = vunpack.c.l.b16 %v4514
        %v5528 = vunpack.c.h.b16 %v4514
        %v5529 = vunpack.c.l.b16 %v4515
        %v5530 = vunpack.c.h.b16 %v4515
        %v5531 = vunpack.c.l.b16 %v4516
        %v5532 = vunpack.c.h.b16 %v4516
        %v5533 = vunpack.c.l.b16 %v4517
        %v5534 = vunpack.c.h.b16 %v4517
        %v5535 = vunpack.c.l.b16 %v4518
        %v5536 = vunpack.c.h.b16 %v4518
        %v5537 = vunpack.c.l.b16 %v4519
        %v5538 = vunpack.c.h.b16 %v4519
        %v5539 = vunpack.c.l.b16 %v4520
        %v5540 = vunpack.c.h.b16 %v4520
        %v5541 = vunpack.c.l.b16 %v4521
        %v5542 = vunpack.c.h.b16 %v4521
        %v5543 = vunpack.c.l.b16 %v4522
        %v5544 = vunpack.c.h.b16 %v4522
        %v5545 = vunpack.c.l.b16 %v4523
        %v5546 = vunpack.c.h.b16 %v4523
        %v5547 = vunpack.c.l.b16 %v4524
        %v5548 = vunpack.c.h.b16 %v4524
        %v5549 = vunpack.c.l.b16 %v4525
        %v5550 = vunpack.c.h.b16 %v4525
        %v5551 = vunpack.c.l.b16 %v4526
        %v5552 = vunpack.c.h.b16 %v4526
        %v5553 = vunpack.c.l.b16 %v4527
        %v5554 = vunpack.c.h.b16 %v4527
        %v5555 = vunpack.c.l.b16 %v4528
        %v5556 = vunpack.c.h.b16 %v4528
        %v5557 = vunpack.c.l.b16 %v4529
        %v5558 = vunpack.c.h.b16 %v4529
        %v5559 = vunpack.c.l.b16 %v4530
        %v5560 = vunpack.c.h.b16 %v4530
        %v5561 = vunpack.c.l.b16 %v4531
        %v5562 = vunpack.c.h.b16 %v4531
        %v5563 = vunpack.c.l.b16 %v4532
        %v5564 = vunpack.c.h.b16 %v4532
        %v5565 = vunpack.c.l.b16 %v4533
        %v5566 = vunpack.c.h.b16 %v4533
        %v5567 = vunpack.c.l.b16 %v4534
        %v5568 = vunpack.c.h.b16 %v4534
        %v5569 = vunpack.c.l.b16 %v4535
        %v5570 = vunpack.c.h.b16 %v4535
        %v5571 = vunpack.c.l.b16 %v4536
        %v5572 = vunpack.c.h.b16 %v4536
        %v5573 = vunpack.c.l.b16 %v4537
        %v5574 = vunpack.c.h.b16 %v4537
        %v5575 = vunpack.c.l.b16 %v4538
        %v5576 = vunpack.c.h.b16 %v4538
        %v5577 = vunpack.c.l.b16 %v4539
        %v5578 = vunpack.c.h.b16 %v4539
        %v5579 = vunpack.c.l.b16 %v4540
        %v5580 = vunpack.c.h.b16 %v4540
        %v5581 = vunpack.c.l.b16 %v4541
        %v5582 = vunpack.c.h.b16 %v4541
        %v5583 = vunpack.c.l.b16 %v4542
        %v5584 = vunpack.c.h.b16 %v4542
        %v5585 = vunpack.c.l.b16 %v4543
        %v5586 = vunpack.c.h.b16 %v4543
        %v5587 = vunpack.c.l.b16 %v4544
        %v5588 = vunpack.c.h.b16 %v4544
        %v5589 = vunpack.c.l.b16 %v4545
        %v5590 = vunpack.c.h.b16 %v4545
        %v5591 = vunpack.c.l.b16 %v4546
        %v5592 = vunpack.c.h.b16 %v4546
        %v5593 = vunpack.c.l.b16 %v4547
        %v5594 = vunpack.c.h.b16 %v4547
        %v5595 = vunpack.c.l.b16 %v4548
        %v5596 = vunpack.c.h.b16 %v4548
        %v5597 = vunpack.c.l.b16 %v4549
        %v5598 = vunpack.c.h.b16 %v4549
        %v5599 = vunpack.c.l.b16 %v4550
        %v5600 = vunpack.c.h.b16 %v4550
        %v5601 = vunpack.c.l.b16 %v4551
        %v5602 = vunpack.c.h.b16 %v4551
        %v5603 = vunpack.c.l.b16 %v4552
        %v5604 = vunpack.c.h.b16 %v4552
        %v5605 = vunpack.c.l.b16 %v4553
        %v5606 = vunpack.c.h.b16 %v4553
        %v5607 = vunpack.c.l.b16 %v4554
        %v5608 = vunpack.c.h.b16 %v4554
        %v5609 = vunpack.c.l.b16 %v4555
        %v5610 = vunpack.c.h.b16 %v4555
        %v5611 = vunpack.c.l.b16 %v4556
        %v5612 = vunpack.c.h.b16 %v4556
        %v5613 = vunpack.c.l.b16 %v4557
        %v5614 = vunpack.c.h.b16 %v4557
        %v5615 = vunpack.c.l.b16 %v4558
        %v5616 = vunpack.c.h.b16 %v4558
        %v5617 = vunpack.c.l.b16 %v4559
        %v5618 = vunpack.c.h.b16 %v4559
        %v5619 = vunpack.c.l.b16 %v4560
        %v5620 = vunpack.c.h.b16 %v4560
        %v5621 = vunpack.c.l.b16 %v4561
        %v5622 = vunpack.c.h.b16 %v4561
        %v5623 = vunpack.c.l.b16 %v4562
        %v5624 = vunpack.c.h.b16 %v4562
        %v5625 = vunpack.c.l.b16 %v4563
        %v5626 = vunpack.c.h.b16 %v4563
        %v5627 = vunpack.c.l.b16 %v4564
        %v5628 = vunpack.c.h.b16 %v4564
        %v5629 = vunpack.c.l.b16 %v4565
        %v5630 = vunpack.c.h.b16 %v4565
        %v5631 = vunpack.c.l.b16 %v4566
        %v5632 = vunpack.c.h.b16 %v4566
        %v5633 = vpack.c.b16 %v5445, %v5441
        %v5634 = vpack.c.b16 %v5446, %v5442
        %v5635 = vpack.c.b16 %v5447, %v5443
        %v5636 = vpack.c.b16 %v5448, %v5444
        %v5637 = vpack.c.b16 %v5453, %v5449
        %v5638 = vpack.c.b16 %v5454, %v5450
        %v5639 = vpack.c.b16 %v5455, %v5451
        %v5640 = vpack.c.b16 %v5456, %v5452
        %v5641 = vpack.c.b16 %v5461, %v5457
        %v5642 = vpack.c.b16 %v5462, %v5458
        %v5643 = vpack.c.b16 %v5463, %v5459
        %v5644 = vpack.c.b16 %v5464, %v5460
        %v5645 = vpack.c.b16 %v5469, %v5465
        %v5646 = vpack.c.b16 %v5470, %v5466
        %v5647 = vpack.c.b16 %v5471, %v5467
        %v5648 = vpack.c.b16 %v5472, %v5468
        %v5649 = vpack.c.b16 %v5477, %v5473
        %v5650 = vpack.c.b16 %v5478, %v5474
        %v5651 = vpack.c.b16 %v5479, %v5475
        %v5652 = vpack.c.b16 %v5480, %v5476
        %v5653 = vpack.c.b16 %v5485, %v5481
        %v5654 = vpack.c.b16 %v5486, %v5482
        %v5655 = vpack.c.b16 %v5487, %v5483
        %v5656 = vpack.c.b16 %v5488, %v5484
        %v5657 = vpack.c.b16 %v5493, %v5489
        %v5658 = vpack.c.b16 %v5494, %v5490
        %v5659 = vpack.c.b16 %v5495, %v5491
        %v5660 = vpack.c.b16 %v5496, %v5492
        %v5661 = vpack.c.b16 %v5501, %v5497
        %v5662 = vpack.c.b16 %v5502, %v5498
        %v5663 = vpack.c.b16 %v5503, %v5499
        %v5664 = vpack.c.b16 %v5504, %v5500
        %v5665 = vpack.c.b16 %v5509, %v5505
        %v5666 = vpack.c.b16 %v5510, %v5506
        %v5667 = vpack.c.b16 %v5511, %v5507
        %v5668 = vpack.c.b16 %v5512, %v5508
        %v5669 = vpack.c.b16 %v5517, %v5513
        %v5670 = vpack.c.b16 %v5518, %v5514
        %v5671 = vpack.c.b16 %v5519, %v5515
        %v5672 = vpack.c.b16 %v5520, %v5516
        %v5673 = vpack.c.b16 %v5525, %v5521
        %v5674 = vpack.c.b16 %v5526, %v5522
        %v5675 = vpack.c.b16 %v5527, %v5523
        %v5676 = vpack.c.b16 %v5528, %v5524
        %v5677 = vpack.c.b16 %v5533, %v5529
        %v5678 = vpack.c.b16 %v5534, %v5530
        %v5679 = vpack.c.b16 %v5535, %v5531
        %v5680 = vpack.c.b16 %v5536, %v5532
        %v5681 = vpack.c.b16 %v5541, %v5537
        %v5682 = vpack.c.b16 %v5542, %v5538
        %v5683 = vpack.c.b16 %v5543, %v5539
        %v5684 = vpack.c.b16 %v5544, %v5540
        %v5685 = vpack.c.b16 %v5549, %v5545
        %v5686 = vpack.c.b16 %v5550, %v5546
        %v5687 = vpack.c.b16 %v5551, %v5547
        %v5688 = vpack.c.b16 %v5552, %v5548
        %v5689 = vpack.c.b16 %v5557, %v5553
        %v5690 = vpack.c.b16 %v5558, %v5554
        %v5691 = vpack.c.b16 %v5559, %v5555
        %v5692 = vpack.c.b16 %v5560, %v5556
        %v5693 = vpack.c.b16 %v5565, %v5561
        %v5694 = vpack.c.b16 %v5566, %v5562
        %v5695 = vpack.c.b16 %v5567, %v5563
        %v5696 = vpack.c.b16 %v5568, %v5564
        %v5697 = vpack.c.b16 %v5573, %v5569
        %v5698 = vpack.c.b16 %v5574, %v5570
        %v5699 = vpack.c.b16 %v5575, %v5571
        %v5700 = vpack.c.b16 %v5576, %v5572
        %v5701 = vpack.c.b16 %v5581, %v5577
        %v5702 = vpack.c.b16 %v5582, %v5578
        %v5703 = vpack.c.b16 %v5583, %v5579
        %v5704 = vpack.c.b16 %v5584, %v5580
        %v5705 = vpack.c.b16 %v5589, %v5585
        %v5706 = vpack.c.b16 %v5590, %v5586
        %v5707 = vpack.c.b16 %v5591, %v5587
        %v5708 = vpack.c.b16 %v5592, %v5588
        %v5709 = vpack.c.b16 %v5597, %v5593
        %v5710 = vpack.c.b16 %v5598, %v5594
        %v5711 = vpack.c.b16 %v5599, %v5595
        %v5712 = vpack.c.b16 %v5600, %v5596
        %v5713 = vpack.c.b16 %v5605, %v5601
        %v5714 = vpack.c.b16 %v5606, %v5602
        %v5715 = vpack.c.b16 %v5607, %v5603
        %v5716 = vpack.c.b16 %v5608, %v5604
        %v5717 = vpack.c.b16 %v5613, %v5609
        %v5718 = vpack.c.b16 %v5614, %v5610
        %v5719 = vpack.c.b16 %v5615, %v5611
        %v5720 = vpack.c.b16 %v5616, %v5612
        %v5721 = vpack.c.b16 %v5621, %v5617
        %v5722 = vpack.c.b16 %v5622, %v5618
        %v5723 = vpack.c.b16 %v5623, %v5619
        %v5724 = vpack.c.b16 %v5624, %v5620
        %v5725 = vpack.c.b16 %v5629, %v5625
        %v5726 = vpack.c.b16 %v5630, %v5626
        %v5727 = vpack.c.b16 %v5631, %v5627
        %v5728 = vpack.c.b16 %v5632, %v5628
        %5825 = vmatpush.bf16.msra.mxu0 %v5661
        %5826 = vmatpush.bf16.msra.mxu0 %v5657
        %5827 = vmatpush.bf16.msra.mxu0 %v5653
        %5828 = vmatpush.bf16.msra.mxu0 %v5649
        %5829 = vmatpush.bf16.msra.mxu0 %v5645
        %5830 = vmatpush.bf16.msra.mxu0 %v5641
        %5831 = vmatpush.bf16.msra.mxu0 %v5637
        %5832 = vmatpush.bf16.msra.mxu0 %v5633
        %5833 = vmatmul.bf16.gmra.mxu0 %v5339
        %v5834 = vpop.f32.mrf.mxu0
        %v5835 = vadd.f32 %v5214, %v5834
        %v5836 = vpop.f32.mrf.mxu0
        %5837 = vdwg.mxu0
        %5838 = vmatpush.bf16.msra.mxu0 %v5693
        %5839 = vmatpush.bf16.msra.mxu0 %v5689
        %5840 = vmatpush.bf16.msra.mxu0 %v5685
        %5841 = vmatpush.bf16.msra.mxu0 %v5681
        %5842 = vmatpush.bf16.msra.mxu0 %v5677
        %5843 = vmatpush.bf16.msra.mxu0 %v5673
        %5844 = vmatpush.bf16.msra.mxu0 %v5669
        %5845 = vmatpush.bf16.msra.mxu0 %v5665
        %5846 = vmatmul.bf16.gmra.mxu0 %v5340
        %v5847 = vpop.f32.mrf.mxu0
        %v5848 = vadd.f32 %v5835, %v5847
        %v5849 = vpop.f32.mrf.mxu0
        %5850 = vdwg.mxu0
        %5851 = vmatpush.bf16.msra.mxu0 %v5725
        %5852 = vmatpush.bf16.msra.mxu0 %v5721
        %5853 = vmatpush.bf16.msra.mxu0 %v5717
        %5854 = vmatpush.bf16.msra.mxu0 %v5713
        %5855 = vmatpush.bf16.msra.mxu0 %v5709
        %5856 = vmatpush.bf16.msra.mxu0 %v5705
        %5857 = vmatpush.bf16.msra.mxu0 %v5701
        %5858 = vmatpush.bf16.msra.mxu0 %v5697
        %5859 = vmatmul.bf16.gmra.mxu0 %v5341
        %v5860 = vpop.f32.mrf.mxu0
        %v5861 = vadd.f32 %v5848, %v5860
        %v5862 = vpop.f32.mrf.mxu0
        %5863 = vdwg.mxu0
        %5864 = vmatpush.bf16.msra.mxu0 %v5662
        %5865 = vmatpush.bf16.msra.mxu0 %v5658
        %5866 = vmatpush.bf16.msra.mxu0 %v5654
        %5867 = vmatpush.bf16.msra.mxu0 %v5650
        %5868 = vmatpush.bf16.msra.mxu0 %v5646
        %5869 = vmatpush.bf16.msra.mxu0 %v5642
        %5870 = vmatpush.bf16.msra.mxu0 %v5638
        %5871 = vmatpush.bf16.msra.mxu0 %v5634
        %5872 = vmatmul.bf16.gmra.mxu0 %v5339
        %v5873 = vpop.f32.mrf.mxu0
        %v5874 = vadd.f32 %v5253, %v5873
        %v5875 = vpop.f32.mrf.mxu0
        %5876 = vdwg.mxu0
        %5877 = vmatpush.bf16.msra.mxu0 %v5694
        %5878 = vmatpush.bf16.msra.mxu0 %v5690
        %5879 = vmatpush.bf16.msra.mxu0 %v5686
        %5880 = vmatpush.bf16.msra.mxu0 %v5682
        %5881 = vmatpush.bf16.msra.mxu0 %v5678
        %5882 = vmatpush.bf16.msra.mxu0 %v5674
        %5883 = vmatpush.bf16.msra.mxu0 %v5670
        %5884 = vmatpush.bf16.msra.mxu0 %v5666
        %5885 = vmatmul.bf16.gmra.mxu0 %v5340
        %v5886 = vpop.f32.mrf.mxu0
        %v5887 = vadd.f32 %v5874, %v5886
        %v5888 = vpop.f32.mrf.mxu0
        %5889 = vdwg.mxu0
        %5890 = vmatpush.bf16.msra.mxu0 %v5726
        %5891 = vmatpush.bf16.msra.mxu0 %v5722
        %5892 = vmatpush.bf16.msra.mxu0 %v5718
        %5893 = vmatpush.bf16.msra.mxu0 %v5714
        %5894 = vmatpush.bf16.msra.mxu0 %v5710
        %5895 = vmatpush.bf16.msra.mxu0 %v5706
        %5896 = vmatpush.bf16.msra.mxu0 %v5702
        %5897 = vmatpush.bf16.msra.mxu0 %v5698
        %5898 = vmatmul.bf16.gmra.mxu0 %v5341
        %v5899 = vpop.f32.mrf.mxu0
        %v5900 = vadd.f32 %v5887, %v5899
        %v5901 = vpop.f32.mrf.mxu0
        %5902 = vdwg.mxu0
        %5903 = vmatpush.bf16.msra.mxu0 %v5663
        %5904 = vmatpush.bf16.msra.mxu0 %v5659
        %5905 = vmatpush.bf16.msra.mxu0 %v5655
        %5906 = vmatpush.bf16.msra.mxu0 %v5651
        %5907 = vmatpush.bf16.msra.mxu0 %v5647
        %5908 = vmatpush.bf16.msra.mxu0 %v5643
        %5909 = vmatpush.bf16.msra.mxu0 %v5639
        %5910 = vmatpush.bf16.msra.mxu0 %v5635
        %5911 = vmatmul.bf16.gmra.mxu0 %v5339
        %v5912 = vpop.f32.mrf.mxu0
        %v5913 = vadd.f32 %v5292, %v5912
        %v5914 = vpop.f32.mrf.mxu0
        %5915 = vdwg.mxu0
        %5916 = vmatpush.bf16.msra.mxu0 %v5695
        %5917 = vmatpush.bf16.msra.mxu0 %v5691
        %5918 = vmatpush.bf16.msra.mxu0 %v5687
        %5919 = vmatpush.bf16.msra.mxu0 %v5683
        %5920 = vmatpush.bf16.msra.mxu0 %v5679
        %5921 = vmatpush.bf16.msra.mxu0 %v5675
        %5922 = vmatpush.bf16.msra.mxu0 %v5671
        %5923 = vmatpush.bf16.msra.mxu0 %v5667
        %5924 = vmatmul.bf16.gmra.mxu0 %v5340
        %v5925 = vpop.f32.mrf.mxu0
        %v5926 = vadd.f32 %v5913, %v5925
        %v5927 = vpop.f32.mrf.mxu0
        %5928 = vdwg.mxu0
        %5929 = vmatpush.bf16.msra.mxu0 %v5727
        %5930 = vmatpush.bf16.msra.mxu0 %v5723
        %5931 = vmatpush.bf16.msra.mxu0 %v5719
        %5932 = vmatpush.bf16.msra.mxu0 %v5715
        %5933 = vmatpush.bf16.msra.mxu0 %v5711
        %5934 = vmatpush.bf16.msra.mxu0 %v5707
        %5935 = vmatpush.bf16.msra.mxu0 %v5703
        %5936 = vmatpush.bf16.msra.mxu0 %v5699
        %5937 = vmatmul.bf16.gmra.mxu0 %v5341
        %v5938 = vpop.f32.mrf.mxu0
        %v5939 = vadd.f32 %v5926, %v5938
        %v5940 = vpop.f32.mrf.mxu0
        %5941 = vdwg.mxu0
        %5942 = vmatpush.bf16.msra.mxu0 %v5664
        %5943 = vmatpush.bf16.msra.mxu0 %v5660
        %5944 = vmatpush.bf16.msra.mxu0 %v5656
        %5945 = vmatpush.bf16.msra.mxu0 %v5652
        %5946 = vmatpush.bf16.msra.mxu0 %v5648
        %5947 = vmatpush.bf16.msra.mxu0 %v5644
        %5948 = vmatpush.bf16.msra.mxu0 %v5640
        %5949 = vmatpush.bf16.msra.mxu0 %v5636
        %5950 = vmatmul.bf16.gmra.mxu0 %v5339
        %v5951 = vpop.f32.mrf.mxu0
        %v5952 = vadd.f32 %v5331, %v5951
        %v5953 = vpop.f32.mrf.mxu0
        %5954 = vdwg.mxu0
        %5955 = vmatpush.bf16.msra.mxu0 %v5696
        %5956 = vmatpush.bf16.msra.mxu0 %v5692
        %5957 = vmatpush.bf16.msra.mxu0 %v5688
        %5958 = vmatpush.bf16.msra.mxu0 %v5684
        %5959 = vmatpush.bf16.msra.mxu0 %v5680
        %5960 = vmatpush.bf16.msra.mxu0 %v5676
        %5961 = vmatpush.bf16.msra.mxu0 %v5672
        %5962 = vmatpush.bf16.msra.mxu0 %v5668
        %5963 = vmatmul.bf16.gmra.mxu0 %v5340
        %v5964 = vpop.f32.mrf.mxu0
        %v5965 = vadd.f32 %v5952, %v5964
        %v5966 = vpop.f32.mrf.mxu0
        %5967 = vdwg.mxu0
        %5968 = vmatpush.bf16.msra.mxu0 %v5728
        %5969 = vmatpush.bf16.msra.mxu0 %v5724
        %5970 = vmatpush.bf16.msra.mxu0 %v5720
        %5971 = vmatpush.bf16.msra.mxu0 %v5716
        %5972 = vmatpush.bf16.msra.mxu0 %v5712
        %5973 = vmatpush.bf16.msra.mxu0 %v5708
        %5974 = vmatpush.bf16.msra.mxu0 %v5704
        %5975 = vmatpush.bf16.msra.mxu0 %v5700
        %5976 = vmatmul.bf16.gmra.mxu0 %v5341
        %v5977 = vpop.f32.mrf.mxu0
        %v5978 = vadd.f32 %v5965, %v5977
        %v5979 = vpop.f32.mrf.mxu0
        %5980 = vdwg.mxu0
        %v5981 = vld [vmem:[#allocation4] sm:$0x66]
        %v5982 = vld [vmem:[#allocation4 + $0x8] sm:$0x6]
        %s5983 = scalar_lea.vmem [#allocation14], 1536
        %v5984 = vld [vmem:[%s5983] sm:$0xff]
        %v5985 = vld [vmem:[%s5983 + $0x8] sm:$0xff]
        %v5986 = vld [vmem:[%s5983 + $0x10] sm:$0xff]
        %v5987 = vld [vmem:[%s5983 + $0x18] sm:$0xff]
        %v5988 = vld [vmem:[%s5983 + $0x20] sm:$0xff]
        %v5989 = vld [vmem:[%s5983 + $0x28] sm:$0xff]
        %v5990 = vld [vmem:[%s5983 + $0x30] sm:$0xff]
        %v5991 = vld [vmem:[%s5983 + $0x38] sm:$0xff]
        %v5992 = vld [vmem:[%s5983 + $0x40] sm:$0xff]
        %v5993 = vld [vmem:[%s5983 + $0x48] sm:$0xff]
        %v5994 = vld [vmem:[%s5983 + $0x50] sm:$0xff]
        %v5995 = vld [vmem:[%s5983 + $0x58] sm:$0xff]
        %v5996 = vld [vmem:[%s5983 + $0x60] sm:$0xff]
        %v5997 = vld [vmem:[%s5983 + $0x68] sm:$0xff]
        %v5998 = vld [vmem:[%s5983 + $0x70] sm:$0xff]
        %v5999 = vld [vmem:[%s5983 + $0x78] sm:$0xff]
        %v6000 = vld [vmem:[%s5983 + $0x80] sm:$0xff]
        %v6001 = vld [vmem:[%s5983 + $0x88] sm:$0xff]
        %v6002 = vld [vmem:[%s5983 + $0x90] sm:$0xff]
        %v6003 = vld [vmem:[%s5983 + $0x98] sm:$0xff]
        %v6004 = vld [vmem:[%s5983 + $0xa0] sm:$0xff]
        %v6005 = vld [vmem:[%s5983 + $0xa8] sm:$0xff]
        %v6006 = vld [vmem:[%s5983 + $0xb0] sm:$0xff]
        %v6007 = vld [vmem:[%s5983 + $0xb8] sm:$0xff]
        %v6008 = vld [vmem:[%s5983 + $0xc0] sm:$0xff]
        %v6009 = vld [vmem:[%s5983 + $0xc8] sm:$0xff]
        %v6010 = vld [vmem:[%s5983 + $0xd0] sm:$0xff]
        %v6011 = vld [vmem:[%s5983 + $0xd8] sm:$0xff]
        %v6012 = vld [vmem:[%s5983 + $0xe0] sm:$0xff]
        %v6013 = vld [vmem:[%s5983 + $0xe8] sm:$0xff]
        %v6014 = vld [vmem:[%s5983 + $0xf0] sm:$0xff]
        %v6015 = vld [vmem:[%s5983 + $0xf8] sm:$0xff]
        %v6016 = vld [vmem:[%s5983 + $0x100] sm:$0xff]
        %v6017 = vld [vmem:[%s5983 + $0x108] sm:$0xff]
        %v6018 = vld [vmem:[%s5983 + $0x110] sm:$0xff]
        %v6019 = vld [vmem:[%s5983 + $0x118] sm:$0xff]
        %v6020 = vld [vmem:[%s5983 + $0x120] sm:$0xff]
        %v6021 = vld [vmem:[%s5983 + $0x128] sm:$0xff]
        %v6022 = vld [vmem:[%s5983 + $0x130] sm:$0xff]
        %v6023 = vld [vmem:[%s5983 + $0x138] sm:$0xff]
        %v6024 = vld [vmem:[%s5983 + $0x140] sm:$0xff]
        %v6025 = vld [vmem:[%s5983 + $0x148] sm:$0xff]
        %v6026 = vld [vmem:[%s5983 + $0x150] sm:$0xff]
        %v6027 = vld [vmem:[%s5983 + $0x158] sm:$0xff]
        %v6028 = vld [vmem:[%s5983 + $0x160] sm:$0xff]
        %v6029 = vld [vmem:[%s5983 + $0x168] sm:$0xff]
        %v6030 = vld [vmem:[%s5983 + $0x170] sm:$0xff]
        %v6031 = vld [vmem:[%s5983 + $0x178] sm:$0xff]
        %v6032 = vld [vmem:[%s5983 + $0x180] sm:$0xff]
        %v6033 = vld [vmem:[%s5983 + $0x188] sm:$0xff]
        %v6034 = vld [vmem:[%s5983 + $0x190] sm:$0xff]
        %v6035 = vld [vmem:[%s5983 + $0x198] sm:$0xff]
        %v6036 = vld [vmem:[%s5983 + $0x1a0] sm:$0xff]
        %v6037 = vld [vmem:[%s5983 + $0x1a8] sm:$0xff]
        %v6038 = vld [vmem:[%s5983 + $0x1b0] sm:$0xff]
        %v6039 = vld [vmem:[%s5983 + $0x1b8] sm:$0xff]
        %v6040 = vld [vmem:[%s5983 + $0x1c0] sm:$0xff]
        %v6041 = vld [vmem:[%s5983 + $0x1c8] sm:$0xff]
        %v6042 = vld [vmem:[%s5983 + $0x1d0] sm:$0xff]
        %v6043 = vld [vmem:[%s5983 + $0x1d8] sm:$0xff]
        %v6044 = vld [vmem:[%s5983 + $0x1e0] sm:$0xff]
        %v6045 = vld [vmem:[%s5983 + $0x1e8] sm:$0xff]
        %v6046 = vld [vmem:[%s5983 + $0x1f0] sm:$0xff]
        %v6047 = vld [vmem:[%s5983 + $0x1f8] sm:$0xff]
        %v6048 = vld [vmem:[%s5983 + $0x200] sm:$0xff]
        %v6049 = vld [vmem:[%s5983 + $0x208] sm:$0xff]
        %v6050 = vld [vmem:[%s5983 + $0x210] sm:$0xff]
        %v6051 = vld [vmem:[%s5983 + $0x218] sm:$0xff]
        %v6052 = vld [vmem:[%s5983 + $0x220] sm:$0xff]
        %v6053 = vld [vmem:[%s5983 + $0x228] sm:$0xff]
        %v6054 = vld [vmem:[%s5983 + $0x230] sm:$0xff]
        %v6055 = vld [vmem:[%s5983 + $0x238] sm:$0xff]
        %v6056 = vld [vmem:[%s5983 + $0x240] sm:$0xff]
        %v6057 = vld [vmem:[%s5983 + $0x248] sm:$0xff]
        %v6058 = vld [vmem:[%s5983 + $0x250] sm:$0xff]
        %v6059 = vld [vmem:[%s5983 + $0x258] sm:$0xff]
        %v6060 = vld [vmem:[%s5983 + $0x260] sm:$0xff]
        %v6061 = vld [vmem:[%s5983 + $0x268] sm:$0xff]
        %v6062 = vld [vmem:[%s5983 + $0x270] sm:$0xff]
        %v6063 = vld [vmem:[%s5983 + $0x278] sm:$0xff]
        %v6064 = vld [vmem:[%s5983 + $0x280] sm:$0xff]
        %v6065 = vld [vmem:[%s5983 + $0x288] sm:$0xff]
        %v6066 = vld [vmem:[%s5983 + $0x290] sm:$0xff]
        %v6067 = vld [vmem:[%s5983 + $0x298] sm:$0xff]
        %v6068 = vld [vmem:[%s5983 + $0x2a0] sm:$0xff]
        %v6069 = vld [vmem:[%s5983 + $0x2a8] sm:$0xff]
        %v6070 = vld [vmem:[%s5983 + $0x2b0] sm:$0xff]
        %v6071 = vld [vmem:[%s5983 + $0x2b8] sm:$0xff]
        %v6072 = vld [vmem:[%s5983 + $0x2c0] sm:$0xff]
        %v6073 = vld [vmem:[%s5983 + $0x2c8] sm:$0xff]
        %v6074 = vld [vmem:[%s5983 + $0x2d0] sm:$0xff]
        %v6075 = vld [vmem:[%s5983 + $0x2d8] sm:$0xff]
        %v6076 = vld [vmem:[%s5983 + $0x2e0] sm:$0xff]
        %v6077 = vld [vmem:[%s5983 + $0x2e8] sm:$0xff]
        %v6078 = vld [vmem:[%s5983 + $0x2f0] sm:$0xff]
        %v6079 = vld [vmem:[%s5983 + $0x2f8] sm:$0xff]
        %v6082 = vunpack.c.l.b16 %v5981
        %v6083 = vunpack.c.h.b16 %v5981
        %v6084 = vunpack.c.l.b16 %v5982
        %v6085 = vpack.c.b16 %v6082, %v6082
        %v6086 = vpack.c.b16 %v6083, %v6083
        %v6087 = vpack.c.b16 %v6084, %v6084
        %v6088 = vrot.slane %v6085, 1
        %v6089 = vrot.slane %v6086, 1
        %v6090 = vrot.slane %v6087, 1
        %v6190 = vunpack.c.l.b16 %v5984
        %v6191 = vunpack.c.h.b16 %v5984
        %v6192 = vunpack.c.l.b16 %v5985
        %v6193 = vunpack.c.h.b16 %v5985
        %v6194 = vunpack.c.l.b16 %v5986
        %v6195 = vunpack.c.h.b16 %v5986
        %v6196 = vunpack.c.l.b16 %v5987
        %v6197 = vunpack.c.h.b16 %v5987
        %v6198 = vunpack.c.l.b16 %v5988
        %v6199 = vunpack.c.h.b16 %v5988
        %v6200 = vunpack.c.l.b16 %v5989
        %v6201 = vunpack.c.h.b16 %v5989
        %v6202 = vunpack.c.l.b16 %v5990
        %v6203 = vunpack.c.h.b16 %v5990
        %v6204 = vunpack.c.l.b16 %v5991
        %v6205 = vunpack.c.h.b16 %v5991
        %v6206 = vunpack.c.l.b16 %v5992
        %v6207 = vunpack.c.h.b16 %v5992
        %v6208 = vunpack.c.l.b16 %v5993
        %v6209 = vunpack.c.h.b16 %v5993
        %v6210 = vunpack.c.l.b16 %v5994
        %v6211 = vunpack.c.h.b16 %v5994
        %v6212 = vunpack.c.l.b16 %v5995
        %v6213 = vunpack.c.h.b16 %v5995
        %v6214 = vunpack.c.l.b16 %v5996
        %v6215 = vunpack.c.h.b16 %v5996
        %v6216 = vunpack.c.l.b16 %v5997
        %v6217 = vunpack.c.h.b16 %v5997
        %v6218 = vunpack.c.l.b16 %v5998
        %v6219 = vunpack.c.h.b16 %v5998
        %v6220 = vunpack.c.l.b16 %v5999
        %v6221 = vunpack.c.h.b16 %v5999
        %v6222 = vunpack.c.l.b16 %v6000
        %v6223 = vunpack.c.h.b16 %v6000
        %v6224 = vunpack.c.l.b16 %v6001
        %v6225 = vunpack.c.h.b16 %v6001
        %v6226 = vunpack.c.l.b16 %v6002
        %v6227 = vunpack.c.h.b16 %v6002
        %v6228 = vunpack.c.l.b16 %v6003
        %v6229 = vunpack.c.h.b16 %v6003
        %v6230 = vunpack.c.l.b16 %v6004
        %v6231 = vunpack.c.h.b16 %v6004
        %v6232 = vunpack.c.l.b16 %v6005
        %v6233 = vunpack.c.h.b16 %v6005
        %v6234 = vunpack.c.l.b16 %v6006
        %v6235 = vunpack.c.h.b16 %v6006
        %v6236 = vunpack.c.l.b16 %v6007
        %v6237 = vunpack.c.h.b16 %v6007
        %v6238 = vunpack.c.l.b16 %v6008
        %v6239 = vunpack.c.h.b16 %v6008
        %v6240 = vunpack.c.l.b16 %v6009
        %v6241 = vunpack.c.h.b16 %v6009
        %v6242 = vunpack.c.l.b16 %v6010
        %v6243 = vunpack.c.h.b16 %v6010
        %v6244 = vunpack.c.l.b16 %v6011
        %v6245 = vunpack.c.h.b16 %v6011
        %v6246 = vunpack.c.l.b16 %v6012
        %v6247 = vunpack.c.h.b16 %v6012
        %v6248 = vunpack.c.l.b16 %v6013
        %v6249 = vunpack.c.h.b16 %v6013
        %v6250 = vunpack.c.l.b16 %v6014
        %v6251 = vunpack.c.h.b16 %v6014
        %v6252 = vunpack.c.l.b16 %v6015
        %v6253 = vunpack.c.h.b16 %v6015
        %v6254 = vunpack.c.l.b16 %v6016
        %v6255 = vunpack.c.h.b16 %v6016
        %v6256 = vunpack.c.l.b16 %v6017
        %v6257 = vunpack.c.h.b16 %v6017
        %v6258 = vunpack.c.l.b16 %v6018
        %v6259 = vunpack.c.h.b16 %v6018
        %v6260 = vunpack.c.l.b16 %v6019
        %v6261 = vunpack.c.h.b16 %v6019
        %v6262 = vunpack.c.l.b16 %v6020
        %v6263 = vunpack.c.h.b16 %v6020
        %v6264 = vunpack.c.l.b16 %v6021
        %v6265 = vunpack.c.h.b16 %v6021
        %v6266 = vunpack.c.l.b16 %v6022
        %v6267 = vunpack.c.h.b16 %v6022
        %v6268 = vunpack.c.l.b16 %v6023
        %v6269 = vunpack.c.h.b16 %v6023
        %v6270 = vunpack.c.l.b16 %v6024
        %v6271 = vunpack.c.h.b16 %v6024
        %v6272 = vunpack.c.l.b16 %v6025
        %v6273 = vunpack.c.h.b16 %v6025
        %v6274 = vunpack.c.l.b16 %v6026
        %v6275 = vunpack.c.h.b16 %v6026
        %v6276 = vunpack.c.l.b16 %v6027
        %v6277 = vunpack.c.h.b16 %v6027
        %v6278 = vunpack.c.l.b16 %v6028
        %v6279 = vunpack.c.h.b16 %v6028
        %v6280 = vunpack.c.l.b16 %v6029
        %v6281 = vunpack.c.h.b16 %v6029
        %v6282 = vunpack.c.l.b16 %v6030
        %v6283 = vunpack.c.h.b16 %v6030
        %v6284 = vunpack.c.l.b16 %v6031
        %v6285 = vunpack.c.h.b16 %v6031
        %v6286 = vunpack.c.l.b16 %v6032
        %v6287 = vunpack.c.h.b16 %v6032
        %v6288 = vunpack.c.l.b16 %v6033
        %v6289 = vunpack.c.h.b16 %v6033
        %v6290 = vunpack.c.l.b16 %v6034
        %v6291 = vunpack.c.h.b16 %v6034
        %v6292 = vunpack.c.l.b16 %v6035
        %v6293 = vunpack.c.h.b16 %v6035
        %v6294 = vunpack.c.l.b16 %v6036
        %v6295 = vunpack.c.h.b16 %v6036
        %v6296 = vunpack.c.l.b16 %v6037
        %v6297 = vunpack.c.h.b16 %v6037
        %v6298 = vunpack.c.l.b16 %v6038
        %v6299 = vunpack.c.h.b16 %v6038
        %v6300 = vunpack.c.l.b16 %v6039
        %v6301 = vunpack.c.h.b16 %v6039
        %v6302 = vunpack.c.l.b16 %v6040
        %v6303 = vunpack.c.h.b16 %v6040
        %v6304 = vunpack.c.l.b16 %v6041
        %v6305 = vunpack.c.h.b16 %v6041
        %v6306 = vunpack.c.l.b16 %v6042
        %v6307 = vunpack.c.h.b16 %v6042
        %v6308 = vunpack.c.l.b16 %v6043
        %v6309 = vunpack.c.h.b16 %v6043
        %v6310 = vunpack.c.l.b16 %v6044
        %v6311 = vunpack.c.h.b16 %v6044
        %v6312 = vunpack.c.l.b16 %v6045
        %v6313 = vunpack.c.h.b16 %v6045
        %v6314 = vunpack.c.l.b16 %v6046
        %v6315 = vunpack.c.h.b16 %v6046
        %v6316 = vunpack.c.l.b16 %v6047
        %v6317 = vunpack.c.h.b16 %v6047
        %v6318 = vunpack.c.l.b16 %v6048
        %v6319 = vunpack.c.h.b16 %v6048
        %v6320 = vunpack.c.l.b16 %v6049
        %v6321 = vunpack.c.h.b16 %v6049
        %v6322 = vunpack.c.l.b16 %v6050
        %v6323 = vunpack.c.h.b16 %v6050
        %v6324 = vunpack.c.l.b16 %v6051
        %v6325 = vunpack.c.h.b16 %v6051
        %v6326 = vunpack.c.l.b16 %v6052
        %v6327 = vunpack.c.h.b16 %v6052
        %v6328 = vunpack.c.l.b16 %v6053
        %v6329 = vunpack.c.h.b16 %v6053
        %v6330 = vunpack.c.l.b16 %v6054
        %v6331 = vunpack.c.h.b16 %v6054
        %v6332 = vunpack.c.l.b16 %v6055
        %v6333 = vunpack.c.h.b16 %v6055
        %v6334 = vunpack.c.l.b16 %v6056
        %v6335 = vunpack.c.h.b16 %v6056
        %v6336 = vunpack.c.l.b16 %v6057
        %v6337 = vunpack.c.h.b16 %v6057
        %v6338 = vunpack.c.l.b16 %v6058
        %v6339 = vunpack.c.h.b16 %v6058
        %v6340 = vunpack.c.l.b16 %v6059
        %v6341 = vunpack.c.h.b16 %v6059
        %v6342 = vunpack.c.l.b16 %v6060
        %v6343 = vunpack.c.h.b16 %v6060
        %v6344 = vunpack.c.l.b16 %v6061
        %v6345 = vunpack.c.h.b16 %v6061
        %v6346 = vunpack.c.l.b16 %v6062
        %v6347 = vunpack.c.h.b16 %v6062
        %v6348 = vunpack.c.l.b16 %v6063
        %v6349 = vunpack.c.h.b16 %v6063
        %v6350 = vunpack.c.l.b16 %v6064
        %v6351 = vunpack.c.h.b16 %v6064
        %v6352 = vunpack.c.l.b16 %v6065
        %v6353 = vunpack.c.h.b16 %v6065
        %v6354 = vunpack.c.l.b16 %v6066
        %v6355 = vunpack.c.h.b16 %v6066
        %v6356 = vunpack.c.l.b16 %v6067
        %v6357 = vunpack.c.h.b16 %v6067
        %v6358 = vunpack.c.l.b16 %v6068
        %v6359 = vunpack.c.h.b16 %v6068
        %v6360 = vunpack.c.l.b16 %v6069
        %v6361 = vunpack.c.h.b16 %v6069
        %v6362 = vunpack.c.l.b16 %v6070
        %v6363 = vunpack.c.h.b16 %v6070
        %v6364 = vunpack.c.l.b16 %v6071
        %v6365 = vunpack.c.h.b16 %v6071
        %v6366 = vunpack.c.l.b16 %v6072
        %v6367 = vunpack.c.h.b16 %v6072
        %v6368 = vunpack.c.l.b16 %v6073
        %v6369 = vunpack.c.h.b16 %v6073
        %v6370 = vunpack.c.l.b16 %v6074
        %v6371 = vunpack.c.h.b16 %v6074
        %v6372 = vunpack.c.l.b16 %v6075
        %v6373 = vunpack.c.h.b16 %v6075
        %v6374 = vunpack.c.l.b16 %v6076
        %v6375 = vunpack.c.h.b16 %v6076
        %v6376 = vunpack.c.l.b16 %v6077
        %v6377 = vunpack.c.h.b16 %v6077
        %v6378 = vunpack.c.l.b16 %v6078
        %v6379 = vunpack.c.h.b16 %v6078
        %v6380 = vunpack.c.l.b16 %v6079
        %v6381 = vunpack.c.h.b16 %v6079
        %v6382 = vpack.c.b16 %v6194, %v6190
        %v6383 = vpack.c.b16 %v6195, %v6191
        %v6384 = vpack.c.b16 %v6196, %v6192
        %v6385 = vpack.c.b16 %v6197, %v6193
        %v6386 = vpack.c.b16 %v6202, %v6198
        %v6387 = vpack.c.b16 %v6203, %v6199
        %v6388 = vpack.c.b16 %v6204, %v6200
        %v6389 = vpack.c.b16 %v6205, %v6201
        %v6390 = vpack.c.b16 %v6210, %v6206
        %v6391 = vpack.c.b16 %v6211, %v6207
        %v6392 = vpack.c.b16 %v6212, %v6208
        %v6393 = vpack.c.b16 %v6213, %v6209
        %v6394 = vpack.c.b16 %v6218, %v6214
        %v6395 = vpack.c.b16 %v6219, %v6215
        %v6396 = vpack.c.b16 %v6220, %v6216
        %v6397 = vpack.c.b16 %v6221, %v6217
        %v6398 = vpack.c.b16 %v6226, %v6222
        %v6399 = vpack.c.b16 %v6227, %v6223
        %v6400 = vpack.c.b16 %v6228, %v6224
        %v6401 = vpack.c.b16 %v6229, %v6225
        %v6402 = vpack.c.b16 %v6234, %v6230
        %v6403 = vpack.c.b16 %v6235, %v6231
        %v6404 = vpack.c.b16 %v6236, %v6232
        %v6405 = vpack.c.b16 %v6237, %v6233
        %v6406 = vpack.c.b16 %v6242, %v6238
        %v6407 = vpack.c.b16 %v6243, %v6239
        %v6408 = vpack.c.b16 %v6244, %v6240
        %v6409 = vpack.c.b16 %v6245, %v6241
        %v6410 = vpack.c.b16 %v6250, %v6246
        %v6411 = vpack.c.b16 %v6251, %v6247
        %v6412 = vpack.c.b16 %v6252, %v6248
        %v6413 = vpack.c.b16 %v6253, %v6249
        %v6414 = vpack.c.b16 %v6258, %v6254
        %v6415 = vpack.c.b16 %v6259, %v6255
        %v6416 = vpack.c.b16 %v6260, %v6256
        %v6417 = vpack.c.b16 %v6261, %v6257
        %v6418 = vpack.c.b16 %v6266, %v6262
        %v6419 = vpack.c.b16 %v6267, %v6263
        %v6420 = vpack.c.b16 %v6268, %v6264
        %v6421 = vpack.c.b16 %v6269, %v6265
        %v6422 = vpack.c.b16 %v6274, %v6270
        %v6423 = vpack.c.b16 %v6275, %v6271
        %v6424 = vpack.c.b16 %v6276, %v6272
        %v6425 = vpack.c.b16 %v6277, %v6273
        %v6426 = vpack.c.b16 %v6282, %v6278
        %v6427 = vpack.c.b16 %v6283, %v6279
        %v6428 = vpack.c.b16 %v6284, %v6280
        %v6429 = vpack.c.b16 %v6285, %v6281
        %v6430 = vpack.c.b16 %v6290, %v6286
        %v6431 = vpack.c.b16 %v6291, %v6287
        %v6432 = vpack.c.b16 %v6292, %v6288
        %v6433 = vpack.c.b16 %v6293, %v6289
        %v6434 = vpack.c.b16 %v6298, %v6294
        %v6435 = vpack.c.b16 %v6299, %v6295
        %v6436 = vpack.c.b16 %v6300, %v6296
        %v6437 = vpack.c.b16 %v6301, %v6297
        %v6438 = vpack.c.b16 %v6306, %v6302
        %v6439 = vpack.c.b16 %v6307, %v6303
        %v6440 = vpack.c.b16 %v6308, %v6304
        %v6441 = vpack.c.b16 %v6309, %v6305
        %v6442 = vpack.c.b16 %v6314, %v6310
        %v6443 = vpack.c.b16 %v6315, %v6311
        %v6444 = vpack.c.b16 %v6316, %v6312
        %v6445 = vpack.c.b16 %v6317, %v6313
        %v6446 = vpack.c.b16 %v6322, %v6318
        %v6447 = vpack.c.b16 %v6323, %v6319
        %v6448 = vpack.c.b16 %v6324, %v6320
        %v6449 = vpack.c.b16 %v6325, %v6321
        %v6450 = vpack.c.b16 %v6330, %v6326
        %v6451 = vpack.c.b16 %v6331, %v6327
        %v6452 = vpack.c.b16 %v6332, %v6328
        %v6453 = vpack.c.b16 %v6333, %v6329
        %v6454 = vpack.c.b16 %v6338, %v6334
        %v6455 = vpack.c.b16 %v6339, %v6335
        %v6456 = vpack.c.b16 %v6340, %v6336
        %v6457 = vpack.c.b16 %v6341, %v6337
        %v6458 = vpack.c.b16 %v6346, %v6342
        %v6459 = vpack.c.b16 %v6347, %v6343
        %v6460 = vpack.c.b16 %v6348, %v6344
        %v6461 = vpack.c.b16 %v6349, %v6345
        %v6462 = vpack.c.b16 %v6354, %v6350
        %v6463 = vpack.c.b16 %v6355, %v6351
        %v6464 = vpack.c.b16 %v6356, %v6352
        %v6465 = vpack.c.b16 %v6357, %v6353
        %v6466 = vpack.c.b16 %v6362, %v6358
        %v6467 = vpack.c.b16 %v6363, %v6359
        %v6468 = vpack.c.b16 %v6364, %v6360
        %v6469 = vpack.c.b16 %v6365, %v6361
        %v6470 = vpack.c.b16 %v6370, %v6366
        %v6471 = vpack.c.b16 %v6371, %v6367
        %v6472 = vpack.c.b16 %v6372, %v6368
        %v6473 = vpack.c.b16 %v6373, %v6369
        %v6474 = vpack.c.b16 %v6378, %v6374
        %v6475 = vpack.c.b16 %v6379, %v6375
        %v6476 = vpack.c.b16 %v6380, %v6376
        %v6477 = vpack.c.b16 %v6381, %v6377
        %6574 = vmatpush.bf16.msra.mxu0 %v6410
        %6575 = vmatpush.bf16.msra.mxu0 %v6406
        %6576 = vmatpush.bf16.msra.mxu0 %v6402
        %6577 = vmatpush.bf16.msra.mxu0 %v6398
        %6578 = vmatpush.bf16.msra.mxu0 %v6394
        %6579 = vmatpush.bf16.msra.mxu0 %v6390
        %6580 = vmatpush.bf16.msra.mxu0 %v6386
        %6581 = vmatpush.bf16.msra.mxu0 %v6382
        %6582 = vmatmul.bf16.gmra.mxu0 %v6088
        %v6583 = vpop.f32.mrf.mxu0
        %v6584 = vadd.f32 0.0, %v6583
        %v6585 = vpop.f32.mrf.mxu0
        %6586 = vdwg.mxu0
        %6587 = vmatpush.bf16.msra.mxu0 %v6442
        %6588 = vmatpush.bf16.msra.mxu0 %v6438
        %6589 = vmatpush.bf16.msra.mxu0 %v6434
        %6590 = vmatpush.bf16.msra.mxu0 %v6430
        %6591 = vmatpush.bf16.msra.mxu0 %v6426
        %6592 = vmatpush.bf16.msra.mxu0 %v6422
        %6593 = vmatpush.bf16.msra.mxu0 %v6418
        %6594 = vmatpush.bf16.msra.mxu0 %v6414
        %6595 = vmatmul.bf16.gmra.mxu0 %v6089
        %v6596 = vpop.f32.mrf.mxu0
        %v6597 = vadd.f32 %v6584, %v6596
        %v6598 = vpop.f32.mrf.mxu0
        %6599 = vdwg.mxu0
        %6600 = vmatpush.bf16.msra.mxu0 %v6474
        %6601 = vmatpush.bf16.msra.mxu0 %v6470
        %6602 = vmatpush.bf16.msra.mxu0 %v6466
        %6603 = vmatpush.bf16.msra.mxu0 %v6462
        %6604 = vmatpush.bf16.msra.mxu0 %v6458
        %6605 = vmatpush.bf16.msra.mxu0 %v6454
        %6606 = vmatpush.bf16.msra.mxu0 %v6450
        %6607 = vmatpush.bf16.msra.mxu0 %v6446
        %6608 = vmatmul.bf16.gmra.mxu0 %v6090
        %v6609 = vpop.f32.mrf.mxu0
        %v6610 = vadd.f32 %v6597, %v6609
        %v6611 = vpop.f32.mrf.mxu0
        %6612 = vdwg.mxu0
        %6613 = vmatpush.bf16.msra.mxu0 %v6411
        %6614 = vmatpush.bf16.msra.mxu0 %v6407
        %6615 = vmatpush.bf16.msra.mxu0 %v6403
        %6616 = vmatpush.bf16.msra.mxu0 %v6399
        %6617 = vmatpush.bf16.msra.mxu0 %v6395
        %6618 = vmatpush.bf16.msra.mxu0 %v6391
        %6619 = vmatpush.bf16.msra.mxu0 %v6387
        %6620 = vmatpush.bf16.msra.mxu0 %v6383
        %6621 = vmatmul.bf16.gmra.mxu0 %v6088
        %v6622 = vpop.f32.mrf.mxu0
        %v6623 = vadd.f32 0.0, %v6622
        %v6624 = vpop.f32.mrf.mxu0
        %6625 = vdwg.mxu0
        %6626 = vmatpush.bf16.msra.mxu0 %v6443
        %6627 = vmatpush.bf16.msra.mxu0 %v6439
        %6628 = vmatpush.bf16.msra.mxu0 %v6435
        %6629 = vmatpush.bf16.msra.mxu0 %v6431
        %6630 = vmatpush.bf16.msra.mxu0 %v6427
        %6631 = vmatpush.bf16.msra.mxu0 %v6423
        %6632 = vmatpush.bf16.msra.mxu0 %v6419
        %6633 = vmatpush.bf16.msra.mxu0 %v6415
        %6634 = vmatmul.bf16.gmra.mxu0 %v6089
        %v6635 = vpop.f32.mrf.mxu0
        %v6636 = vadd.f32 %v6623, %v6635
        %v6637 = vpop.f32.mrf.mxu0
        %6638 = vdwg.mxu0
        %6639 = vmatpush.bf16.msra.mxu0 %v6475
        %6640 = vmatpush.bf16.msra.mxu0 %v6471
        %6641 = vmatpush.bf16.msra.mxu0 %v6467
        %6642 = vmatpush.bf16.msra.mxu0 %v6463
        %6643 = vmatpush.bf16.msra.mxu0 %v6459
        %6644 = vmatpush.bf16.msra.mxu0 %v6455
        %6645 = vmatpush.bf16.msra.mxu0 %v6451
        %6646 = vmatpush.bf16.msra.mxu0 %v6447
        %6647 = vmatmul.bf16.gmra.mxu0 %v6090
        %v6648 = vpop.f32.mrf.mxu0
        %v6649 = vadd.f32 %v6636, %v6648
        %v6650 = vpop.f32.mrf.mxu0
        %6651 = vdwg.mxu0
        %6652 = vmatpush.bf16.msra.mxu0 %v6412
        %6653 = vmatpush.bf16.msra.mxu0 %v6408
        %6654 = vmatpush.bf16.msra.mxu0 %v6404
        %6655 = vmatpush.bf16.msra.mxu0 %v6400
        %6656 = vmatpush.bf16.msra.mxu0 %v6396
        %6657 = vmatpush.bf16.msra.mxu0 %v6392
        %6658 = vmatpush.bf16.msra.mxu0 %v6388
        %6659 = vmatpush.bf16.msra.mxu0 %v6384
        %6660 = vmatmul.bf16.gmra.mxu0 %v6088
        %v6661 = vpop.f32.mrf.mxu0
        %v6662 = vadd.f32 0.0, %v6661
        %v6663 = vpop.f32.mrf.mxu0
        %6664 = vdwg.mxu0
        %6665 = vmatpush.bf16.msra.mxu0 %v6444
        %6666 = vmatpush.bf16.msra.mxu0 %v6440
        %6667 = vmatpush.bf16.msra.mxu0 %v6436
        %6668 = vmatpush.bf16.msra.mxu0 %v6432
        %6669 = vmatpush.bf16.msra.mxu0 %v6428
        %6670 = vmatpush.bf16.msra.mxu0 %v6424
        %6671 = vmatpush.bf16.msra.mxu0 %v6420
        %6672 = vmatpush.bf16.msra.mxu0 %v6416
        %6673 = vmatmul.bf16.gmra.mxu0 %v6089
        %v6674 = vpop.f32.mrf.mxu0
        %v6675 = vadd.f32 %v6662, %v6674
        %v6676 = vpop.f32.mrf.mxu0
        %6677 = vdwg.mxu0
        %6678 = vmatpush.bf16.msra.mxu0 %v6476
        %6679 = vmatpush.bf16.msra.mxu0 %v6472
        %6680 = vmatpush.bf16.msra.mxu0 %v6468
        %6681 = vmatpush.bf16.msra.mxu0 %v6464
        %6682 = vmatpush.bf16.msra.mxu0 %v6460
        %6683 = vmatpush.bf16.msra.mxu0 %v6456
        %6684 = vmatpush.bf16.msra.mxu0 %v6452
        %6685 = vmatpush.bf16.msra.mxu0 %v6448
        %6686 = vmatmul.bf16.gmra.mxu0 %v6090
        %v6687 = vpop.f32.mrf.mxu0
        %v6688 = vadd.f32 %v6675, %v6687
        %v6689 = vpop.f32.mrf.mxu0
        %6690 = vdwg.mxu0
        %6691 = vmatpush.bf16.msra.mxu0 %v6413
        %6692 = vmatpush.bf16.msra.mxu0 %v6409
        %6693 = vmatpush.bf16.msra.mxu0 %v6405
        %6694 = vmatpush.bf16.msra.mxu0 %v6401
        %6695 = vmatpush.bf16.msra.mxu0 %v6397
        %6696 = vmatpush.bf16.msra.mxu0 %v6393
        %6697 = vmatpush.bf16.msra.mxu0 %v6389
        %6698 = vmatpush.bf16.msra.mxu0 %v6385
        %6699 = vmatmul.bf16.gmra.mxu0 %v6088
        %v6700 = vpop.f32.mrf.mxu0
        %v6701 = vadd.f32 0.0, %v6700
        %v6702 = vpop.f32.mrf.mxu0
        %6703 = vdwg.mxu0
        %6704 = vmatpush.bf16.msra.mxu0 %v6445
        %6705 = vmatpush.bf16.msra.mxu0 %v6441
        %6706 = vmatpush.bf16.msra.mxu0 %v6437
        %6707 = vmatpush.bf16.msra.mxu0 %v6433
        %6708 = vmatpush.bf16.msra.mxu0 %v6429
        %6709 = vmatpush.bf16.msra.mxu0 %v6425
        %6710 = vmatpush.bf16.msra.mxu0 %v6421
        %6711 = vmatpush.bf16.msra.mxu0 %v6417
        %6712 = vmatmul.bf16.gmra.mxu0 %v6089
        %v6713 = vpop.f32.mrf.mxu0
        %v6714 = vadd.f32 %v6701, %v6713
        %v6715 = vpop.f32.mrf.mxu0
        %6716 = vdwg.mxu0
        %6717 = vmatpush.bf16.msra.mxu0 %v6477
        %6718 = vmatpush.bf16.msra.mxu0 %v6473
        %6719 = vmatpush.bf16.msra.mxu0 %v6469
        %6720 = vmatpush.bf16.msra.mxu0 %v6465
        %6721 = vmatpush.bf16.msra.mxu0 %v6461
        %6722 = vmatpush.bf16.msra.mxu0 %v6457
        %6723 = vmatpush.bf16.msra.mxu0 %v6453
        %6724 = vmatpush.bf16.msra.mxu0 %v6449
        %6725 = vmatmul.bf16.gmra.mxu0 %v6090
        %v6726 = vpop.f32.mrf.mxu0
        %v6727 = vadd.f32 %v6714, %v6726
        %v6728 = vpop.f32.mrf.mxu0
        %6729 = vdwg.mxu0
        %v6730 = vadd.f32 %v5861, %v6610
        %v6731 = vadd.f32 %v5900, %v6649
        %v6732 = vadd.f32 %v5939, %v6688
        %v6733 = vadd.f32 %v5978, %v6727
        %v6734 = vld [vmem:[#allocation16] sm:$0xf]
        %v6736 = vperm.slane %v6734, 0
        %v6737 = vperm.slane %v6734, 1
        %v6738 = vperm.slane %v6734, 2
        %v6739 = vperm.slane %v6734, 3
        %v6744 = vadd.f32 %v6730, %v6736
        %v6745 = vadd.f32 %v6731, %v6737
        %v6746 = vadd.f32 %v6732, %v6738
        %v6747 = vadd.f32 %v6733, %v6739
        %v6748 = vmax.f32 %v6744, 0.0
        %v6749 = vmax.f32 %v6745, 0.0
        %v6750 = vmax.f32 %v6746, 0.0
        %v6751 = vmax.f32 %v6747, 0.0
        %vm6752 = vcmask 1043456
        %v6753 = vsel %vm6752, %v6748, 0.0
        %v6754 = vrot.slane %v6753, 4
        %v6755 = vadd.f32 %v6753, %v6754
        %v6756 = vrot.slane %v6755, 2
        %v6757 = vadd.f32 %v6755, %v6756
        %v6758 = vrot.slane %v6757, 1
        %v6759 = vadd.f32 %v6757, %v6758
        %v6760 = vsel %vm6752, %v6749, 0.0
        %v6761 = vrot.slane %v6760, 4
        %v6762 = vadd.f32 %v6760, %v6761
        %v6763 = vrot.slane %v6762, 2
        %v6764 = vadd.f32 %v6762, %v6763
        %v6765 = vrot.slane %v6764, 1
        %v6766 = vadd.f32 %v6764, %v6765
        %v6767 = vsel %vm6752, %v6750, 0.0
        %v6768 = vrot.slane %v6767, 4
        %v6769 = vadd.f32 %v6767, %v6768
        %v6770 = vrot.slane %v6769, 2
        %v6771 = vadd.f32 %v6769, %v6770
        %v6772 = vrot.slane %v6771, 1
        %v6773 = vadd.f32 %v6771, %v6772
        %v6774 = vsel %vm6752, %v6751, 0.0
        %v6775 = vrot.slane %v6774, 4
        %v6776 = vadd.f32 %v6774, %v6775
        %v6777 = vrot.slane %v6776, 2
        %v6778 = vadd.f32 %v6776, %v6777
        %v6779 = vrot.slane %v6778, 1
        %v6780 = vadd.f32 %v6778, %v6779
        %v6781 = vrot.slane %v6773, 4
        %v6782 = vsel %vm965, %v6781, %v6759
        %v6784 = vunpack.c.l.s4 1983009808
        %v6785 = vunpack.c.0.s8 %v6784
        %v6786 = vperm.slane %v6782, %v6785
        %v6787 = vrot.slane %v6780, 4
        %v6788 = vsel %vm965, %v6787, %v6766
        %v6790 = vunpack.c.l.s4 1983009808
        %v6791 = vunpack.c.0.s8 %v6790
        %v6792 = vperm.slane %v6788, %v6791
        %v6793 = vrot.slane %v6792, 4
        %v6794 = vsel %vm965, %v6793, %v6786
        %v6796 = vunpack.c.l.s4 1934713408
        %v6797 = vunpack.c.0.s8 %v6796
        %v6798 = vperm.slane %v6794, %v6797
        %v6799 = vsel %vm6752, %v6798, 0.0
        %v6800 = vrot.slane %v6799, 4
        %v6801 = vadd.f32 %v6799, %v6800
        %v6802 = vrot.slane %v6801, 2
        %v6803 = vadd.f32 %v6801, %v6802
        %v6804 = vrot.slane %v6803, 1
        %v6805 = vadd.f32 %v6803, %v6804
        %v6806 = vmul.f32 %v6805, 0.0625
        %v6807 = vld [vmem:[#allocation17] sm:$0xff]
        %v6808 = vld [vmem:[#allocation17 + $0x8] sm:$0xff]
        %v6809 = vld [vmem:[#allocation17 + $0x10] sm:$0xff]
        %v6810 = vld [vmem:[#allocation17 + $0x18] sm:$0xff]
        %v6811 = vld [vmem:[#allocation17 + $0x20] sm:$0xff]
        %v6812 = vld [vmem:[#allocation17 + $0x28] sm:$0xff]
        %v6813 = vld [vmem:[#allocation17 + $0x30] sm:$0xff]
        %v6814 = vld [vmem:[#allocation17 + $0x38] sm:$0xff]
        %v6815 = vld [vmem:[#allocation17 + $0x40] sm:$0xff]
        %v6816 = vld [vmem:[#allocation17 + $0x48] sm:$0xff]
        %v6817 = vld [vmem:[#allocation17 + $0x50] sm:$0xff]
        %v6818 = vld [vmem:[#allocation17 + $0x58] sm:$0xff]
        %v6819 = vld [vmem:[#allocation17 + $0x60] sm:$0xff]
        %v6820 = vld [vmem:[#allocation17 + $0x68] sm:$0xff]
        %v6821 = vld [vmem:[#allocation17 + $0x70] sm:$0xff]
        %v6822 = vld [vmem:[#allocation17 + $0x78] sm:$0xff]
        %v6823 = vld [vmem:[#allocation19] sm:$0x1]
        %6824 = vmatpush.msra.mxu0 %v6822
        %6825 = vmatpush.msra.mxu0 %v6821
        %6826 = vmatpush.msra.mxu0 %v6820
        %6827 = vmatpush.msra.mxu0 %v6819
        %6828 = vmatpush.msra.mxu0 %v6818
        %6829 = vmatpush.msra.mxu0 %v6817
        %6830 = vmatpush.msra.mxu0 %v6816
        %6831 = vmatpush.msra.mxu0 %v6815
        %6832 = vmatpush.msra.mxu0 %v6814
        %6833 = vmatpush.msra.mxu0 %v6813
        %6834 = vmatpush.msra.mxu0 %v6812
        %6835 = vmatpush.msra.mxu0 %v6811
        %6836 = vmatpush.msra.mxu0 %v6810
        %6837 = vmatpush.msra.mxu0 %v6809
        %6838 = vmatpush.msra.mxu0 %v6808
        %6839 = vmatpush.msra.mxu0 %v6807
        %6840 = vmatmul.f32.gmra.mxu0 %v6806
        %v6841 = vpop.f32.mrf.mxu0
        %v6842 = vadd.f32 %v6823, %v6841
        %6843 = vdwg.mxu0
        %6844 = vst [vmem:[%s475] sm:$0x1] %v6842
        %s6845 = sand.u32 %s232, 1
        %s6846 = scalar_lea.sflag [#allocation7], %s6845
        %s6847 = sand.u32 %s232, 1
        %s6848 = scalar_lea.vmem [#allocation20], %s6847
        // Predicated region
        $region93: #{tpu_custom_call.1} parent=55 // pred_check
          %p6849 = pneg %p242
        $region94: #{tpu_custom_call.1} parent=55 // pred_check_branch
          %6851 = sbr.rel (%p6849) target = $region96
        $region95: #{tpu_custom_call.1} parent=55 // pred_region
          %6853 = vsyncadd %s6846, 0
          %s6854 = scalar_lea.hbm %s9, %s30
          %s6856 = sshll.u32 %s6848, 4
          %s6857 = int_to_ptr.vmem [resolvable:$true] %s6856
          %s6858 = sshll.u32 %s6854, 4
          %s6859 = int_to_ptr.hbm [resolvable:$true] %s6858
          %6861 = dma.vmem_to_hbm [thread:$0]  %s6857, 16, %s6859, %s6846
        $region96: #{tpu_custom_call.1} parent=55 // pred_fallthru
          _
      $region56: #{tpu_custom_call.1} parent=5 // pred_fallthru
        _
      %p6862 = scmp.le.s32.totalorder 2, %s25
      // Predicated region
      $region97: #{tpu_custom_call.1} parent=5 // pred_check
        %p6863 = pneg %p6862
      $region98: #{tpu_custom_call.1} parent=5 // pred_check_branch
        %6865 = sbr.rel (%p6863) target = $region100
      $region99: #{tpu_custom_call.1} parent=5 // pred_region
        %s6866 = ssub.s32 %s25, 2
        // Predicated region
        $region101: #{tpu_custom_call.1} parent=99 // pred_check
          %p6867 = pneg %p248
        $region102: #{tpu_custom_call.1} parent=99 // pred_check_branch
          %6869 = sbr.rel (%p6867) target = $region104
        $region103: #{tpu_custom_call.1} parent=99 // pred_region
          %s6870 = sand.u32 %s233, 1
          %s6871 = scalar_lea.sflag [#allocation7], %s6870
          %s6872 = sand.u32 %s233, 1
          %s6873 = scalar_lea.vmem [#allocation20], %s6872
          %6875 = dma.done %s6871, 16
        $region104: #{tpu_custom_call.1} parent=99 // pred_fallthru
          _
      $region100: #{tpu_custom_call.1} parent=5 // pred_fallthru
        _
    $region6: #{tpu_custom_call.1} parent=1 // loop_footer
      %s29 = sadd.s32 1, %s25
    $region7: #{tpu_custom_call.1} parent=1 // loop_footer_branch
      %24 = sbr.rel target = $region3
    $region8: #{tpu_custom_call.1} parent=1 // loop_exit
      _
    %6876 = vsyncpa [#allocation6], 1
    %s6877 = scalar_lea.sflag [#allocation6], 1
    %6878 = vsyncpa %s6877, 1
    %6879 = vsyncpa [#allocation9], 1
    %6880 = vsyncpa [#allocation12], 1
    %6881 = vsyncpa [#allocation15], 1
    %6882 = vsyncpa [#allocation18], 1
    %6883 = vsyncpa [#allocation7], 1
    %s6884 = scalar_lea.sflag [#allocation7], 1
    %6885 = vsyncpa %s6884, 1

</llo_original>
